<compile_context>
chip_gen: v5e
topology: v5e:2x2
jax: 0.10.0
libtpu: 0.0.40
codegen_flags: <defaults>
</compile_context>

<pallas_src>
import jax
import jax.numpy as jnp
from jax.experimental import pallas as pl
from jax.experimental.pallas import tpu as pltpu

EPS = 1e-5                      # PyTorch InstanceNorm2d default
MATMUL_DTYPE = jnp.bfloat16     # MXU input dtype (f32 accumulation)


def _make_resblock_kernel(H, W, C):
    HW = H * W

    def reflect_pad_into(xp_ref, img):
        """Write ReflectionPad2d(1) of img (H, W, C) into xp_ref (H+2, W+2, C)."""
        xp_ref[1:H + 1, 1:W + 1, :] = img
        xp_ref[0:1, 1:W + 1, :] = img[1:2]                 # top row    = row 1
        xp_ref[H + 1:H + 2, 1:W + 1, :] = img[H - 2:H - 1]  # bottom row = row H-2
        xp_ref[:, 0:1, :] = xp_ref[:, 2:3, :]              # left col  (corners ok)
        xp_ref[:, W + 1:W + 2, :] = xp_ref[:, W - 1:W, :]  # right col

    def conv3x3_in(xp_ref, w_ref, g, be, apply_relu):
        """3x3 conv (no bias) + InstanceNorm(affine) [+ ReLU] on padded scratch."""
        acc = None
        for dh in range(3):
            # Concat the 3 width-shifted windows along channels -> K = 3C,
            # one MXU matmul per kernel row (3 total instead of 9).
            patch = jnp.concatenate(
                [xp_ref[dh:dh + H, 0:W, :],
                 xp_ref[dh:dh + H, 1:W + 1, :],
                 xp_ref[dh:dh + H, 2:W + 2, :]],
                axis=-1,
            ).reshape(HW, 3 * C).astype(MATMUL_DTYPE)
            term = jnp.dot(patch, w_ref[dh], preferred_element_type=jnp.float32)
            acc = term if acc is None else acc + term      # (HW, C) f32

        # InstanceNorm: per-channel stats over spatial axis (biased variance),
        # single pass.  Conv bias omitted: it cancels against the mean.
        inv_hw = 1.0 / float(HW)
        mean = jnp.sum(acc, axis=0, keepdims=True) * inv_hw          # (1, C)
        ex2 = jnp.sum(acc * acc, axis=0, keepdims=True) * inv_hw     # (1, C)
        var = jnp.maximum(ex2 - mean * mean, 0.0)
        scale = g * jax.lax.rsqrt(var + EPS)                         # (1, C)
        shift = be - mean * scale                                    # (1, C)
        y = acc * scale + shift
        if apply_relu:
            y = jnp.maximum(y, 0.0)
        return y                                                     # (HW, C) f32

    def kernel(x_ref, w1_ref, g1_ref, be1_ref, w2_ref, g2_ref, be2_ref,
               out_ref, xp_ref):
        x = x_ref[0]                                                 # (H, W, C) f32

        # conv1 + IN + ReLU
        reflect_pad_into(xp_ref, x)
        y1 = conv3x3_in(xp_ref, w1_ref, g1_ref[0], be1_ref[0], apply_relu=True)

        # conv2 + IN (intermediate y1 never leaves VMEM)
        reflect_pad_into(xp_ref, y1.reshape(H, W, C))
        y2 = conv3x3_in(xp_ref, w2_ref, g2_ref[0], be2_ref[0], apply_relu=False)

        # residual
        out_ref[0] = (x + y2.reshape(H, W, C)).astype(out_ref.dtype)

    return kernel


def resblock_pallas(x_nhwc, w1, g1, be1, w2, g2, be2):
    """x_nhwc: (N, H, W, C) f32. w*: (3, 3C, C) bf16. g*/be*: (1, C) f32."""
    N, H, W, C = x_nhwc.shape
    kernel = _make_resblock_kernel(H, W, C)

    spec_img = pl.BlockSpec((1, H, W, C), lambda n: (n, 0, 0, 0))
    spec_w = pl.BlockSpec((3, 3 * C, C), lambda n: (0, 0, 0))
    spec_vec = pl.BlockSpec((1, C), lambda n: (0, 0))

    return pl.pallas_call(
        kernel,
        out_shape=jax.ShapeDtypeStruct((N, H, W, C), x_nhwc.dtype),
        grid=(N,),
        in_specs=[spec_img, spec_w, spec_vec, spec_vec,
                  spec_w, spec_vec, spec_vec],
        out_specs=spec_img,
        scratch_shapes=[pltpu.VMEM((H + 2, W + 2, C), jnp.float32)],
        compiler_params=pltpu.CompilerParams(
            dimension_semantics=("parallel",),
            vmem_limit_bytes=64 * 1024 * 1024,
        ),
    )(x_nhwc, w1, g1, be1, w2, g2, be2)


@jax.jit
def resblock_forward(x_nchw, params):
    """ResBlock forward. Input/output NCHW (PyTorch convention)."""
    N, C, H, W = x_nchw.shape
    # TODO(synk): keep activations NHWC end-to-end in the surrounding model and
    # pre-pack the bf16 weights at parameter-load time to drop these transposes.
    x = jnp.transpose(x_nchw, (0, 2, 3, 1))                    # NCHW -> NHWC

    def prep_w(w):  # (O, I, 3, 3) -> (kh, 3*C_in, C_out), bf16 for the MXU
        return (jnp.transpose(w, (2, 3, 1, 0))
                .reshape(3, 3 * C, C).astype(MATMUL_DTYPE))

    out = resblock_pallas(
        x,
        prep_w(params["w1"]), params["g1"].reshape(1, C), params["be1"].reshape(1, C),
        prep_w(params["w2"]), params["g2"].reshape(1, C), params["be2"].reshape(1, C),
    )
    return jnp.transpose(out, (0, 3, 1, 2))                    # NHWC -> NCHW


def _ref_resblock(x, params, matmul_dtype=jnp.float32):
    """Pure-JAX reference mirroring the PyTorch module (NCHW, incl. conv bias)."""

    def block(h, w, b, g, be, relu):
        hp = jnp.pad(h, ((0, 0), (0, 0), (1, 1), (1, 1)), mode="reflect")
        y = jax.lax.conv_general_dilated(
            hp.astype(matmul_dtype), w.astype(matmul_dtype), (1, 1), "VALID",
            dimension_numbers=("NCHW", "OIHW", "NCHW"),
            preferred_element_type=jnp.float32,
        ) + b[None, :, None, None]
        mean = y.mean(axis=(2, 3), keepdims=True)
        var = y.var(axis=(2, 3), keepdims=True)
        y = (y - mean) * jax.lax.rsqrt(var + EPS)
        y = y * g[None, :, None, None] + be[None, :, None, None]
        return jnp.maximum(y, 0.0) if relu else y

    y1 = block(x, params["w1"], params["b1"], params["g1"], params["be1"], True)
    y2 = block(y1, params["w2"], params["b2"], params["g2"], params["be2"], False)
    return x + y2


if __name__ == "__main__":
    key = jax.random.PRNGKey(0)
    N, C, H, W = 2, 8, 16, 16   # small test shapes (production channels=128)
    ks = jax.random.split(key, 9)

    x = jax.random.normal(ks[0], (N, C, H, W), jnp.float32)
    params = {
        # PyTorch Conv2d weight layout (O, I, kh, kw)
        "w1": 0.1 * jax.random.normal(ks[1], (C, C, 3, 3), jnp.float32),
        "b1": 0.1 * jax.random.normal(ks[2], (C,), jnp.float32),
        "g1": 1.0 + 0.1 * jax.random.normal(ks[3], (C,), jnp.float32),
        "be1": 0.1 * jax.random.normal(ks[4], (C,), jnp.float32),
        "w2": 0.1 * jax.random.normal(ks[5], (C, C, 3, 3), jnp.float32),
        "b2": 0.1 * jax.random.normal(ks[6], (C,), jnp.float32),
        "g2": 1.0 + 0.1 * jax.random.normal(ks[7], (C,), jnp.float32),
        "be2": 0.1 * jax.random.normal(ks[8], (C,), jnp.float32),
    }

    out = jax.block_until_ready(resblock_forward(x, params))
    assert out.shape == (N, C, H, W) and out.dtype == jnp.float32

    # Tight check vs. matched-precision reference (bf16 matmul inputs, f32
    # accumulation / InstanceNorm) — validates pad/conv/IN/ReLU/residual logic.
    ref_m = jax.block_until_ready(_ref_resblock(x, params, MATMUL_DTYPE))
    err_m = float(jnp.max(jnp.abs(out - ref_m)))
    assert jnp.allclose(out, ref_m, atol=5e-3, rtol=5e-3), err_m

    # Loose sanity check vs. full-f32 PyTorch-equivalent math (difference is
    # only the bf16 cast of MXU operands).
    ref_f = jax.block_until_ready(_ref_resblock(x, params, jnp.float32))
    err_f = float(jnp.max(jnp.abs(out - ref_f)))
    assert jnp.allclose(out, ref_f, atol=5e-2, rtol=5e-2), err_f

    print("KERNEL_OK")
</pallas_src>

<mosaic_0001>
module attributes {stable_mosaic.version = 11 : i64} {
  func.func @kernel(%arg0: i32, %arg1: memref<1x16x16x8xf32, #tpu.memory_space<vmem>>, %arg2: memref<3x24x8xbf16, #tpu.memory_space<vmem>>, %arg3: memref<1x8xf32, #tpu.memory_space<vmem>>, %arg4: memref<1x8xf32, #tpu.memory_space<vmem>>, %arg5: memref<3x24x8xbf16, #tpu.memory_space<vmem>>, %arg6: memref<1x8xf32, #tpu.memory_space<vmem>>, %arg7: memref<1x8xf32, #tpu.memory_space<vmem>>, %arg8: memref<1x16x16x8xf32, #tpu.memory_space<vmem>>, %arg9: memref<18x18x8xf32, #tpu.memory_space<vmem>>) attributes {dimension_semantics = [#tpu.dimension_semantics<parallel>], iteration_bounds = array<i64: 2>, scalar_prefetch = 0 : i64, scratch_operands = 1 : i64, tpu.core_type = #tpu.core_type<tc>, window_params = [{transform_indices = @transform_0, window_bounds = array<i64: 1, 16, 16, 8>}, {pipeline_mode = #tpu.pipeline_mode<synchronous>, transform_indices = @transform_1, window_bounds = array<i64: 3, 24, 8>}, {pipeline_mode = #tpu.pipeline_mode<synchronous>, transform_indices = @transform_2, window_bounds = array<i64: 1, 8>}, {pipeline_mode = #tpu.pipeline_mode<synchronous>, transform_indices = @transform_3, window_bounds = array<i64: 1, 8>}, {pipeline_mode = #tpu.pipeline_mode<synchronous>, transform_indices = @transform_4, window_bounds = array<i64: 3, 24, 8>}, {pipeline_mode = #tpu.pipeline_mode<synchronous>, transform_indices = @transform_5, window_bounds = array<i64: 1, 8>}, {pipeline_mode = #tpu.pipeline_mode<synchronous>, transform_indices = @transform_6, window_bounds = array<i64: 1, 8>}, {transform_indices = @transform_7, window_bounds = array<i64: 1, 16, 16, 8>}]} {
    %c0 = arith.constant 0 : index
    %c0_0 = arith.constant 0 : index
    %c0_1 = arith.constant 0 : index
    %c0_2 = arith.constant 0 : index
    %0 = vector.load %arg1[%c0, %c0_0, %c0_1, %c0_2] : memref<1x16x16x8xf32, #tpu.memory_space<vmem>>, vector<1x16x16x8xf32>
    %1 = vector.shape_cast %0 : vector<1x16x16x8xf32> to vector<16x16x8xf32>
    %c1 = arith.constant 1 : index
    %c1_3 = arith.constant 1 : index
    %c0_4 = arith.constant 0 : index
    %2 = vector.load %arg9[%c1, %c1_3, %c0_4] : memref<18x18x8xf32, #tpu.memory_space<vmem>>, vector<16x16x8xf32>
    tpu.vector_store %arg9[%c1, %c1_3, %c0_4], %1 {strides = array<i32>} : memref<18x18x8xf32, #tpu.memory_space<vmem>>, vector<16x16x8xf32>,
    %3 = vector.extract_strided_slice %1 {offsets = [1, 0, 0], sizes = [1, 16, 8], strides = [1, 1, 1]} : vector<16x16x8xf32> to vector<1x16x8xf32>
    %c0_5 = arith.constant 0 : index
    %c1_6 = arith.constant 1 : index
    %c0_7 = arith.constant 0 : index
    %4 = vector.load %arg9[%c0_5, %c1_6, %c0_7] : memref<18x18x8xf32, #tpu.memory_space<vmem>>, vector<1x16x8xf32>
    tpu.vector_store %arg9[%c0_5, %c1_6, %c0_7], %3 {strides = array<i32>} : memref<18x18x8xf32, #tpu.memory_space<vmem>>, vector<1x16x8xf32>,
    %5 = vector.extract_strided_slice %1 {offsets = [14, 0, 0], sizes = [1, 16, 8], strides = [1, 1, 1]} : vector<16x16x8xf32> to vector<1x16x8xf32>
    %c17 = arith.constant 17 : index
    %c1_8 = arith.constant 1 : index
    %c0_9 = arith.constant 0 : index
    %6 = vector.load %arg9[%c17, %c1_8, %c0_9] : memref<18x18x8xf32, #tpu.memory_space<vmem>>, vector<1x16x8xf32>
    tpu.vector_store %arg9[%c17, %c1_8, %c0_9], %5 {strides = array<i32>} : memref<18x18x8xf32, #tpu.memory_space<vmem>>, vector<1x16x8xf32>,
    %c0_10 = arith.constant 0 : index
    %c2 = arith.constant 2 : index
    %c0_11 = arith.constant 0 : index
    %7 = vector.load %arg9[%c0_10, %c2, %c0_11] : memref<18x18x8xf32, #tpu.memory_space<vmem>>, vector<18x1x8xf32>
    %c0_12 = arith.constant 0 : index
    %c0_13 = arith.constant 0 : index
    %c0_14 = arith.constant 0 : index
    %8 = vector.load %arg9[%c0_12, %c0_13, %c0_14] : memref<18x18x8xf32, #tpu.memory_space<vmem>>, vector<18x1x8xf32>
    tpu.vector_store %arg9[%c0_12, %c0_13, %c0_14], %7 {strides = array<i32>} : memref<18x18x8xf32, #tpu.memory_space<vmem>>, vector<18x1x8xf32>,
    %c0_15 = arith.constant 0 : index
    %c15 = arith.constant 15 : index
    %c0_16 = arith.constant 0 : index
    %9 = vector.load %arg9[%c0_15, %c15, %c0_16] : memref<18x18x8xf32, #tpu.memory_space<vmem>>, vector<18x1x8xf32>
    %c0_17 = arith.constant 0 : index
    %c17_18 = arith.constant 17 : index
    %c0_19 = arith.constant 0 : index
    %10 = vector.load %arg9[%c0_17, %c17_18, %c0_19] : memref<18x18x8xf32, #tpu.memory_space<vmem>>, vector<18x1x8xf32>
    tpu.vector_store %arg9[%c0_17, %c17_18, %c0_19], %9 {strides = array<i32>} : memref<18x18x8xf32, #tpu.memory_space<vmem>>, vector<18x1x8xf32>,
    %c0_20 = arith.constant 0 : index
    %c0_21 = arith.constant 0 : index
    %11 = vector.load %arg3[%c0_20, %c0_21] : memref<1x8xf32, #tpu.memory_space<vmem>>, vector<1x8xf32>
    %12 = vector.shape_cast %11 : vector<1x8xf32> to vector<8xf32>
    %c0_22 = arith.constant 0 : index
    %c0_23 = arith.constant 0 : index
    %13 = vector.load %arg4[%c0_22, %c0_23] : memref<1x8xf32, #tpu.memory_space<vmem>>, vector<1x8xf32>
    %14 = vector.shape_cast %13 : vector<1x8xf32> to vector<8xf32>
    %c0_24 = arith.constant 0 : index
    %c0_25 = arith.constant 0 : index
    %c0_26 = arith.constant 0 : index
    %15 = vector.load %arg9[%c0_24, %c0_25, %c0_26] : memref<18x18x8xf32, #tpu.memory_space<vmem>>, vector<16x16x8xf32>
    %c0_27 = arith.constant 0 : index
    %c1_28 = arith.constant 1 : index
    %c0_29 = arith.constant 0 : index
    %16 = vector.load %arg9[%c0_27, %c1_28, %c0_29] : memref<18x18x8xf32, #tpu.memory_space<vmem>>, vector<16x16x8xf32>
    %c0_30 = arith.constant 0 : index
    %c2_31 = arith.constant 2 : index
    %c0_32 = arith.constant 0 : index
    %17 = vector.load %arg9[%c0_30, %c2_31, %c0_32] : memref<18x18x8xf32, #tpu.memory_space<vmem>>, vector<16x16x8xf32>
    %18 = tpu.concatenate %15, %16, %17 in 2 : vector<16x16x8xf32>, vector<16x16x8xf32>, vector<16x16x8xf32> -> vector<16x16x24xf32>
    %19 = vector.shape_cast %18 : vector<16x16x24xf32> to vector<256x24xf32>
    %20 = arith.truncf %19 : vector<256x24xf32> to vector<256x24xbf16>
    %c0_33 = arith.constant 0 : index
    %c0_34 = arith.constant 0 : index
    %c0_35 = arith.constant 0 : index
    %21 = vector.load %arg2[%c0_33, %c0_34, %c0_35] : memref<3x24x8xbf16, #tpu.memory_space<vmem>>, vector<1x24x8xbf16>
    %22 = vector.shape_cast %21 : vector<1x24x8xbf16> to vector<24x8xbf16>
    %cst = arith.constant dense<0.000000e+00> : vector<256x8xf32>
    %23 = tpu.matmul %20, %22, %cst {dimension_numbers = #tpu.dot_dimension_numbers<[1], [0], [0], [1], [0, 0, 1, 1], [], []>} : vector<256x24xbf16>, vector<24x8xbf16>, vector<256x8xf32> -> vector<256x8xf32>
    %c1_36 = arith.constant 1 : index
    %c0_37 = arith.constant 0 : index
    %c0_38 = arith.constant 0 : index
    %24 = vector.load %arg9[%c1_36, %c0_37, %c0_38] : memref<18x18x8xf32, #tpu.memory_space<vmem>>, vector<16x16x8xf32>
    %c1_39 = arith.constant 1 : index
    %c1_40 = arith.constant 1 : index
    %c0_41 = arith.constant 0 : index
    %25 = vector.load %arg9[%c1_39, %c1_40, %c0_41] : memref<18x18x8xf32, #tpu.memory_space<vmem>>, vector<16x16x8xf32>
    %c1_42 = arith.constant 1 : index
    %c2_43 = arith.constant 2 : index
    %c0_44 = arith.constant 0 : index
    %26 = vector.load %arg9[%c1_42, %c2_43, %c0_44] : memref<18x18x8xf32, #tpu.memory_space<vmem>>, vector<16x16x8xf32>
    %27 = tpu.concatenate %24, %25, %26 in 2 : vector<16x16x8xf32>, vector<16x16x8xf32>, vector<16x16x8xf32> -> vector<16x16x24xf32>
    %28 = vector.shape_cast %27 : vector<16x16x24xf32> to vector<256x24xf32>
    %29 = arith.truncf %28 : vector<256x24xf32> to vector<256x24xbf16>
    %c1_45 = arith.constant 1 : index
    %c0_46 = arith.constant 0 : index
    %c0_47 = arith.constant 0 : index
    %30 = vector.load %arg2[%c1_45, %c0_46, %c0_47] : memref<3x24x8xbf16, #tpu.memory_space<vmem>>, vector<1x24x8xbf16>
    %31 = vector.shape_cast %30 : vector<1x24x8xbf16> to vector<24x8xbf16>
    %cst_48 = arith.constant dense<0.000000e+00> : vector<256x8xf32>
    %32 = tpu.matmul %29, %31, %cst_48 {dimension_numbers = #tpu.dot_dimension_numbers<[1], [0], [0], [1], [0, 0, 1, 1], [], []>} : vector<256x24xbf16>, vector<24x8xbf16>, vector<256x8xf32> -> vector<256x8xf32>
    %33 = arith.addf %23, %32 : vector<256x8xf32>
    %c2_49 = arith.constant 2 : index
    %c0_50 = arith.constant 0 : index
    %c0_51 = arith.constant 0 : index
    %34 = vector.load %arg9[%c2_49, %c0_50, %c0_51] : memref<18x18x8xf32, #tpu.memory_space<vmem>>, vector<16x16x8xf32>
    %c2_52 = arith.constant 2 : index
    %c1_53 = arith.constant 1 : index
    %c0_54 = arith.constant 0 : index
    %35 = vector.load %arg9[%c2_52, %c1_53, %c0_54] : memref<18x18x8xf32, #tpu.memory_space<vmem>>, vector<16x16x8xf32>
    %c2_55 = arith.constant 2 : index
    %c2_56 = arith.constant 2 : index
    %c0_57 = arith.constant 0 : index
    %36 = vector.load %arg9[%c2_55, %c2_56, %c0_57] : memref<18x18x8xf32, #tpu.memory_space<vmem>>, vector<16x16x8xf32>
    %37 = tpu.concatenate %34, %35, %36 in 2 : vector<16x16x8xf32>, vector<16x16x8xf32>, vector<16x16x8xf32> -> vector<16x16x24xf32>
    %38 = vector.shape_cast %37 : vector<16x16x24xf32> to vector<256x24xf32>
    %39 = arith.truncf %38 : vector<256x24xf32> to vector<256x24xbf16>
    %c2_58 = arith.constant 2 : index
    %c0_59 = arith.constant 0 : index
    %c0_60 = arith.constant 0 : index
    %40 = vector.load %arg2[%c2_58, %c0_59, %c0_60] : memref<3x24x8xbf16, #tpu.memory_space<vmem>>, vector<1x24x8xbf16>
    %41 = vector.shape_cast %40 : vector<1x24x8xbf16> to vector<24x8xbf16>
    %cst_61 = arith.constant dense<0.000000e+00> : vector<256x8xf32>
    %42 = tpu.matmul %39, %41, %cst_61 {dimension_numbers = #tpu.dot_dimension_numbers<[1], [0], [0], [1], [0, 0, 1, 1], [], []>} : vector<256x24xbf16>, vector<24x8xbf16>, vector<256x8xf32> -> vector<256x8xf32>
    %43 = arith.addf %33, %42 : vector<256x8xf32>
    %cst_62 = arith.constant dense<0.000000e+00> : vector<8xf32>
    %44 = vector.multi_reduction <add>, %43, %cst_62 [0] : vector<256x8xf32> to vector<8xf32>
    %45 = vector.shape_cast %44 : vector<8xf32> to vector<1x8xf32>
    %cst_63 = arith.constant 3.906250e-03 : f32
    %46 = vector.broadcast %cst_63 : f32 to vector<1x8xf32>
    %47 = arith.mulf %45, %46 : vector<1x8xf32>
    %48 = arith.mulf %43, %43 : vector<256x8xf32>
    %cst_64 = arith.constant dense<0.000000e+00> : vector<8xf32>
    %49 = vector.multi_reduction <add>, %48, %cst_64 [0] : vector<256x8xf32> to vector<8xf32>
    %50 = vector.shape_cast %49 : vector<8xf32> to vector<1x8xf32>
    %cst_65 = arith.constant 3.906250e-03 : f32
    %51 = vector.broadcast %cst_65 : f32 to vector<1x8xf32>
    %52 = arith.mulf %50, %51 : vector<1x8xf32>
    %53 = arith.mulf %47, %47 : vector<1x8xf32>
    %54 = arith.subf %52, %53 : vector<1x8xf32>
    %cst_66 = arith.constant 0.000000e+00 : f32
    %55 = vector.broadcast %cst_66 : f32 to vector<1x8xf32>
    %56 = arith.maximumf %54, %55 : vector<1x8xf32>
    %cst_67 = arith.constant 9.99999974E-6 : f32
    %57 = vector.broadcast %cst_67 : f32 to vector<1x8xf32>
    %58 = arith.addf %56, %57 : vector<1x8xf32>
    %59 = math.rsqrt %58 : vector<1x8xf32>
    %60 = vector.shape_cast %12 : vector<8xf32> to vector<1x8xf32>
    %61 = arith.mulf %60, %59 : vector<1x8xf32>
    %62 = arith.mulf %47, %61 : vector<1x8xf32>
    %63 = vector.shape_cast %14 : vector<8xf32> to vector<1x8xf32>
    %64 = arith.subf %63, %62 : vector<1x8xf32>
    %65 = vector.broadcast %61 : vector<1x8xf32> to vector<256x8xf32>
    %66 = arith.mulf %43, %65 : vector<256x8xf32>
    %67 = vector.broadcast %64 : vector<1x8xf32> to vector<256x8xf32>
    %68 = arith.addf %66, %67 : vector<256x8xf32>
    %cst_68 = arith.constant 0.000000e+00 : f32
    %69 = vector.broadcast %cst_68 : f32 to vector<256x8xf32>
    %70 = arith.maximumf %68, %69 : vector<256x8xf32>
    %71 = vector.shape_cast %70 : vector<256x8xf32> to vector<16x16x8xf32>
    %c1_69 = arith.constant 1 : index
    %c1_70 = arith.constant 1 : index
    %c0_71 = arith.constant 0 : index
    %72 = vector.load %arg9[%c1_69, %c1_70, %c0_71] : memref<18x18x8xf32, #tpu.memory_space<vmem>>, vector<16x16x8xf32>
    tpu.vector_store %arg9[%c1_69, %c1_70, %c0_71], %71 {strides = array<i32>} : memref<18x18x8xf32, #tpu.memory_space<vmem>>, vector<16x16x8xf32>,
    %73 = vector.extract_strided_slice %71 {offsets = [1, 0, 0], sizes = [1, 16, 8], strides = [1, 1, 1]} : vector<16x16x8xf32> to vector<1x16x8xf32>
    %c0_72 = arith.constant 0 : index
    %c1_73 = arith.constant 1 : index
    %c0_74 = arith.constant 0 : index
    %74 = vector.load %arg9[%c0_72, %c1_73, %c0_74] : memref<18x18x8xf32, #tpu.memory_space<vmem>>, vector<1x16x8xf32>
    tpu.vector_store %arg9[%c0_72, %c1_73, %c0_74], %73 {strides = array<i32>} : memref<18x18x8xf32, #tpu.memory_space<vmem>>, vector<1x16x8xf32>,
    %75 = vector.extract_strided_slice %71 {offsets = [14, 0, 0], sizes = [1, 16, 8], strides = [1, 1, 1]} : vector<16x16x8xf32> to vector<1x16x8xf32>
    %c17_75 = arith.constant 17 : index
    %c1_76 = arith.constant 1 : index
    %c0_77 = arith.constant 0 : index
    %76 = vector.load %arg9[%c17_75, %c1_76, %c0_77] : memref<18x18x8xf32, #tpu.memory_space<vmem>>, vector<1x16x8xf32>
    tpu.vector_store %arg9[%c17_75, %c1_76, %c0_77], %75 {strides = array<i32>} : memref<18x18x8xf32, #tpu.memory_space<vmem>>, vector<1x16x8xf32>,
    %c0_78 = arith.constant 0 : index
    %c2_79 = arith.constant 2 : index
    %c0_80 = arith.constant 0 : index
    %77 = vector.load %arg9[%c0_78, %c2_79, %c0_80] : memref<18x18x8xf32, #tpu.memory_space<vmem>>, vector<18x1x8xf32>
    %c0_81 = arith.constant 0 : index
    %c0_82 = arith.constant 0 : index
    %c0_83 = arith.constant 0 : index
    %78 = vector.load %arg9[%c0_81, %c0_82, %c0_83] : memref<18x18x8xf32, #tpu.memory_space<vmem>>, vector<18x1x8xf32>
    tpu.vector_store %arg9[%c0_81, %c0_82, %c0_83], %77 {strides = array<i32>} : memref<18x18x8xf32, #tpu.memory_space<vmem>>, vector<18x1x8xf32>,
    %c0_84 = arith.constant 0 : index
    %c15_85 = arith.constant 15 : index
    %c0_86 = arith.constant 0 : index
    %79 = vector.load %arg9[%c0_84, %c15_85, %c0_86] : memref<18x18x8xf32, #tpu.memory_space<vmem>>, vector<18x1x8xf32>
    %c0_87 = arith.constant 0 : index
    %c17_88 = arith.constant 17 : index
    %c0_89 = arith.constant 0 : index
    %80 = vector.load %arg9[%c0_87, %c17_88, %c0_89] : memref<18x18x8xf32, #tpu.memory_space<vmem>>, vector<18x1x8xf32>
    tpu.vector_store %arg9[%c0_87, %c17_88, %c0_89], %79 {strides = array<i32>} : memref<18x18x8xf32, #tpu.memory_space<vmem>>, vector<18x1x8xf32>,
    %c0_90 = arith.constant 0 : index
    %c0_91 = arith.constant 0 : index
    %81 = vector.load %arg6[%c0_90, %c0_91] : memref<1x8xf32, #tpu.memory_space<vmem>>, vector<1x8xf32>
    %82 = vector.shape_cast %81 : vector<1x8xf32> to vector<8xf32>
    %c0_92 = arith.constant 0 : index
    %c0_93 = arith.constant 0 : index
    %83 = vector.load %arg7[%c0_92, %c0_93] : memref<1x8xf32, #tpu.memory_space<vmem>>, vector<1x8xf32>
    %84 = vector.shape_cast %83 : vector<1x8xf32> to vector<8xf32>
    %c0_94 = arith.constant 0 : index
    %c0_95 = arith.constant 0 : index
    %c0_96 = arith.constant 0 : index
    %85 = vector.load %arg9[%c0_94, %c0_95, %c0_96] : memref<18x18x8xf32, #tpu.memory_space<vmem>>, vector<16x16x8xf32>
    %c0_97 = arith.constant 0 : index
    %c1_98 = arith.constant 1 : index
    %c0_99 = arith.constant 0 : index
    %86 = vector.load %arg9[%c0_97, %c1_98, %c0_99] : memref<18x18x8xf32, #tpu.memory_space<vmem>>, vector<16x16x8xf32>
    %c0_100 = arith.constant 0 : index
    %c2_101 = arith.constant 2 : index
    %c0_102 = arith.constant 0 : index
    %87 = vector.load %arg9[%c0_100, %c2_101, %c0_102] : memref<18x18x8xf32, #tpu.memory_space<vmem>>, vector<16x16x8xf32>
    %88 = tpu.concatenate %85, %86, %87 in 2 : vector<16x16x8xf32>, vector<16x16x8xf32>, vector<16x16x8xf32> -> vector<16x16x24xf32>
    %89 = vector.shape_cast %88 : vector<16x16x24xf32> to vector<256x24xf32>
    %90 = arith.truncf %89 : vector<256x24xf32> to vector<256x24xbf16>
    %c0_103 = arith.constant 0 : index
    %c0_104 = arith.constant 0 : index
    %c0_105 = arith.constant 0 : index
    %91 = vector.load %arg5[%c0_103, %c0_104, %c0_105] : memref<3x24x8xbf16, #tpu.memory_space<vmem>>, vector<1x24x8xbf16>
    %92 = vector.shape_cast %91 : vector<1x24x8xbf16> to vector<24x8xbf16>
    %cst_106 = arith.constant dense<0.000000e+00> : vector<256x8xf32>
    %93 = tpu.matmul %90, %92, %cst_106 {dimension_numbers = #tpu.dot_dimension_numbers<[1], [0], [0], [1], [0, 0, 1, 1], [], []>} : vector<256x24xbf16>, vector<24x8xbf16>, vector<256x8xf32> -> vector<256x8xf32>
    %c1_107 = arith.constant 1 : index
    %c0_108 = arith.constant 0 : index
    %c0_109 = arith.constant 0 : index
    %94 = vector.load %arg9[%c1_107, %c0_108, %c0_109] : memref<18x18x8xf32, #tpu.memory_space<vmem>>, vector<16x16x8xf32>
    %c1_110 = arith.constant 1 : index
    %c1_111 = arith.constant 1 : index
    %c0_112 = arith.constant 0 : index
    %95 = vector.load %arg9[%c1_110, %c1_111, %c0_112] : memref<18x18x8xf32, #tpu.memory_space<vmem>>, vector<16x16x8xf32>
    %c1_113 = arith.constant 1 : index
    %c2_114 = arith.constant 2 : index
    %c0_115 = arith.constant 0 : index
    %96 = vector.load %arg9[%c1_113, %c2_114, %c0_115] : memref<18x18x8xf32, #tpu.memory_space<vmem>>, vector<16x16x8xf32>
    %97 = tpu.concatenate %94, %95, %96 in 2 : vector<16x16x8xf32>, vector<16x16x8xf32>, vector<16x16x8xf32> -> vector<16x16x24xf32>
    %98 = vector.shape_cast %97 : vector<16x16x24xf32> to vector<256x24xf32>
    %99 = arith.truncf %98 : vector<256x24xf32> to vector<256x24xbf16>
    %c1_116 = arith.constant 1 : index
    %c0_117 = arith.constant 0 : index
    %c0_118 = arith.constant 0 : index
    %100 = vector.load %arg5[%c1_116, %c0_117, %c0_118] : memref<3x24x8xbf16, #tpu.memory_space<vmem>>, vector<1x24x8xbf16>
    %101 = vector.shape_cast %100 : vector<1x24x8xbf16> to vector<24x8xbf16>
    %cst_119 = arith.constant dense<0.000000e+00> : vector<256x8xf32>
    %102 = tpu.matmul %99, %101, %cst_119 {dimension_numbers = #tpu.dot_dimension_numbers<[1], [0], [0], [1], [0, 0, 1, 1], [], []>} : vector<256x24xbf16>, vector<24x8xbf16>, vector<256x8xf32> -> vector<256x8xf32>
    %103 = arith.addf %93, %102 : vector<256x8xf32>
    %c2_120 = arith.constant 2 : index
    %c0_121 = arith.constant 0 : index
    %c0_122 = arith.constant 0 : index
    %104 = vector.load %arg9[%c2_120, %c0_121, %c0_122] : memref<18x18x8xf32, #tpu.memory_space<vmem>>, vector<16x16x8xf32>
    %c2_123 = arith.constant 2 : index
    %c1_124 = arith.constant 1 : index
    %c0_125 = arith.constant 0 : index
    %105 = vector.load %arg9[%c2_123, %c1_124, %c0_125] : memref<18x18x8xf32, #tpu.memory_space<vmem>>, vector<16x16x8xf32>
    %c2_126 = arith.constant 2 : index
    %c2_127 = arith.constant 2 : index
    %c0_128 = arith.constant 0 : index
    %106 = vector.load %arg9[%c2_126, %c2_127, %c0_128] : memref<18x18x8xf32, #tpu.memory_space<vmem>>, vector<16x16x8xf32>
    %107 = tpu.concatenate %104, %105, %106 in 2 : vector<16x16x8xf32>, vector<16x16x8xf32>, vector<16x16x8xf32> -> vector<16x16x24xf32>
    %108 = vector.shape_cast %107 : vector<16x16x24xf32> to vector<256x24xf32>
    %109 = arith.truncf %108 : vector<256x24xf32> to vector<256x24xbf16>
    %c2_129 = arith.constant 2 : index
    %c0_130 = arith.constant 0 : index
    %c0_131 = arith.constant 0 : index
    %110 = vector.load %arg5[%c2_129, %c0_130, %c0_131] : memref<3x24x8xbf16, #tpu.memory_space<vmem>>, vector<1x24x8xbf16>
    %111 = vector.shape_cast %110 : vector<1x24x8xbf16> to vector<24x8xbf16>
    %cst_132 = arith.constant dense<0.000000e+00> : vector<256x8xf32>
    %112 = tpu.matmul %109, %111, %cst_132 {dimension_numbers = #tpu.dot_dimension_numbers<[1], [0], [0], [1], [0, 0, 1, 1], [], []>} : vector<256x24xbf16>, vector<24x8xbf16>, vector<256x8xf32> -> vector<256x8xf32>
    %113 = arith.addf %103, %112 : vector<256x8xf32>
    %cst_133 = arith.constant dense<0.000000e+00> : vector<8xf32>
    %114 = vector.multi_reduction <add>, %113, %cst_133 [0] : vector<256x8xf32> to vector<8xf32>
    %115 = vector.shape_cast %114 : vector<8xf32> to vector<1x8xf32>
    %cst_134 = arith.constant 3.906250e-03 : f32
    %116 = vector.broadcast %cst_134 : f32 to vector<1x8xf32>
    %117 = arith.mulf %115, %116 : vector<1x8xf32>
    %118 = arith.mulf %113, %113 : vector<256x8xf32>
    %cst_135 = arith.constant dense<0.000000e+00> : vector<8xf32>
    %119 = vector.multi_reduction <add>, %118, %cst_135 [0] : vector<256x8xf32> to vector<8xf32>
    %120 = vector.shape_cast %119 : vector<8xf32> to vector<1x8xf32>
    %cst_136 = arith.constant 3.906250e-03 : f32
    %121 = vector.broadcast %cst_136 : f32 to vector<1x8xf32>
    %122 = arith.mulf %120, %121 : vector<1x8xf32>
    %123 = arith.mulf %117, %117 : vector<1x8xf32>
    %124 = arith.subf %122, %123 : vector<1x8xf32>
    %cst_137 = arith.constant 0.000000e+00 : f32
    %125 = vector.broadcast %cst_137 : f32 to vector<1x8xf32>
    %126 = arith.maximumf %124, %125 : vector<1x8xf32>
    %cst_138 = arith.constant 9.99999974E-6 : f32
    %127 = vector.broadcast %cst_138 : f32 to vector<1x8xf32>
    %128 = arith.addf %126, %127 : vector<1x8xf32>
    %129 = math.rsqrt %128 : vector<1x8xf32>
    %130 = vector.shape_cast %82 : vector<8xf32> to vector<1x8xf32>
    %131 = arith.mulf %130, %129 : vector<1x8xf32>
    %132 = arith.mulf %117, %131 : vector<1x8xf32>
    %133 = vector.shape_cast %84 : vector<8xf32> to vector<1x8xf32>
    %134 = arith.subf %133, %132 : vector<1x8xf32>
    %135 = vector.broadcast %131 : vector<1x8xf32> to vector<256x8xf32>
    %136 = arith.mulf %113, %135 : vector<256x8xf32>
    %137 = vector.broadcast %134 : vector<1x8xf32> to vector<256x8xf32>
    %138 = arith.addf %136, %137 : vector<256x8xf32>
    %139 = vector.shape_cast %138 : vector<256x8xf32> to vector<16x16x8xf32>
    %140 = arith.addf %1, %139 : vector<16x16x8xf32>
    %c0_139 = arith.constant 0 : index
    %c0_140 = arith.constant 0 : index
    %c0_141 = arith.constant 0 : index
    %c0_142 = arith.constant 0 : index
    %141 = vector.load %arg8[%c0_139, %c0_140, %c0_141, %c0_142] : memref<1x16x16x8xf32, #tpu.memory_space<vmem>>, vector<1x16x16x8xf32>
    %142 = vector.shape_cast %141 : vector<1x16x16x8xf32> to vector<16x16x8xf32>
    %143 = vector.shape_cast %140 : vector<16x16x8xf32> to vector<1x16x16x8xf32>
    tpu.vector_store %arg8[%c0_139, %c0_140, %c0_141, %c0_142], %143 {strides = array<i32>} : memref<1x16x16x8xf32, #tpu.memory_space<vmem>>, vector<1x16x16x8xf32>,
    return
  }
  func.func @transform_0(%arg0: i32) -> (i32, i32, i32, i32) {
    %c0_i32 = arith.constant 0 : i32
    %c0_i32_0 = arith.constant 0 : i32
    %c0_i32_1 = arith.constant 0 : i32
    %c0_i32_2 = arith.constant 0 : i32
    return %arg0, %c0_i32, %c0_i32_0, %c0_i32_1 : i32, i32, i32, i32
  }
  func.func @transform_1(%arg0: i32) -> (i32, i32, i32) {
    %c0_i32 = arith.constant 0 : i32
    %c0_i32_0 = arith.constant 0 : i32
    %c0_i32_1 = arith.constant 0 : i32
    %c0_i32_2 = arith.constant 0 : i32
    return %c0_i32, %c0_i32_0, %c0_i32_1 : i32, i32, i32
  }
  func.func @transform_2(%arg0: i32) -> (i32, i32) {
    %c0_i32 = arith.constant 0 : i32
    %c0_i32_0 = arith.constant 0 : i32
    %c0_i32_1 = arith.constant 0 : i32
    return %c0_i32, %c0_i32_0 : i32, i32
  }
  func.func @transform_3(%arg0: i32) -> (i32, i32) {
    %c0_i32 = arith.constant 0 : i32
    %c0_i32_0 = arith.constant 0 : i32
    %c0_i32_1 = arith.constant 0 : i32
    return %c0_i32, %c0_i32_0 : i32, i32
  }
  func.func @transform_4(%arg0: i32) -> (i32, i32, i32) {
    %c0_i32 = arith.constant 0 : i32
    %c0_i32_0 = arith.constant 0 : i32
    %c0_i32_1 = arith.constant 0 : i32
    %c0_i32_2 = arith.constant 0 : i32
    return %c0_i32, %c0_i32_0, %c0_i32_1 : i32, i32, i32
  }
  func.func @transform_5(%arg0: i32) -> (i32, i32) {
    %c0_i32 = arith.constant 0 : i32
    %c0_i32_0 = arith.constant 0 : i32
    %c0_i32_1 = arith.constant 0 : i32
    return %c0_i32, %c0_i32_0 : i32, i32
  }
  func.func @transform_6(%arg0: i32) -> (i32, i32) {
    %c0_i32 = arith.constant 0 : i32
    %c0_i32_0 = arith.constant 0 : i32
    %c0_i32_1 = arith.constant 0 : i32
    return %c0_i32, %c0_i32_0 : i32, i32
  }
  func.func @transform_7(%arg0: i32) -> (i32, i32, i32, i32) {
    %c0_i32 = arith.constant 0 : i32
    %c0_i32_0 = arith.constant 0 : i32
    %c0_i32_1 = arith.constant 0 : i32
    %c0_i32_2 = arith.constant 0 : i32
    return %arg0, %c0_i32, %c0_i32_0, %c0_i32_1 : i32, i32, i32, i32
  }
}

</mosaic_0001>

<llo_original>
// kernel: resblock_forward.1
$region0: #{resblock_forward.1}
  #allocation0 [shape = 'u32[]', space=smem, size = 0x4, offset = 0x4, fixed_abs, tag = 'smem constant byte address 0x4 - core index']
  #allocation1 [shape = 'u32[72,128]{1,0:T(1,128)}', space=vmem, size = 0x9000, scoped, tag = 'internal scratch']
  #allocation2 [shape = 'f32[18,18,8]{2,1,0:T(8,128)}', space=vmem, size = 0x36000, scoped, tag = 'scratch operand']
  %s0 = inlined_call_operand.vmem [shape: f32[2,16,16,8], index: 0, kind: input, shape index: {}]
  %s1 = inlined_call_operand.vmem [shape: bf16[3,24,8], index: 1, kind: input, shape index: {}]
  %s2 = inlined_call_operand.vmem [shape: f32[1,8], index: 2, kind: input, shape index: {}]
  %s3 = inlined_call_operand.vmem [shape: f32[1,8], index: 3, kind: input, shape index: {}]
  %s4 = inlined_call_operand.vmem [shape: bf16[3,24,8], index: 4, kind: input, shape index: {}]
  %s5 = inlined_call_operand.vmem [shape: f32[1,8], index: 5, kind: input, shape index: {}]
  %s6 = inlined_call_operand.vmem [shape: f32[1,8], index: 6, kind: input, shape index: {}]
  %s7 = inlined_call_operand.vmem [shape: f32[2,16,16,8], index: 7, kind: output, shape index: {}]
  %s8 = sld [smem:[#allocation0]]
  $region61: #{resblock_forward.1} parent=0
    _
  %s10 = ssub.s32 1, %s8
  %s11 = scalar_select 0, %s10, %s8
  loop: start=0, step=1, limit=4
  $region2: #{resblock_forward.1} parent=0 // loop_pre_header
    _
  $region3: #{resblock_forward.1} parent=0 // loop_header
    %s13 = sphi 0, %s17
    %p14 = scmp.ge.s32.totalorder %s13, 4
    %s23 = sphi 0, %s25
    %s26 = sphi 0, %s23
    %s27 = sphi 0, %s26
    %s43 = sphi 0, %s27
    %s47 = sphi 0, %s47
    %s49 = sphi 0, %s47
    %s50 = sphi 0, %s49
    %s64 = sphi 0, %s50
    %s68 = sphi 0, %s68
    %s70 = sphi 0, %s68
    %s71 = sphi 0, %s70
    %s85 = sphi 0, %s71
    %s89 = sphi 0, %s89
    %s91 = sphi 0, %s89
    %s92 = sphi 0, %s91
    %s106 = sphi 0, %s92
    %s110 = sphi 0, %s110
    %s112 = sphi 0, %s110
    %s113 = sphi 0, %s112
    %s127 = sphi 0, %s113
    %s131 = sphi 0, %s131
    %s133 = sphi 0, %s131
    %s134 = sphi 0, %s133
    %s148 = sphi 0, %s134
    %s152 = sphi 0, %s152
    %s154 = sphi 0, %s152
    %s155 = sphi 0, %s154
    %s169 = sphi 0, %s155
    %s175 = sphi 0, %s177
    %s178 = sphi 0, %s175
    %s179 = sphi 0, %s178
    %s195 = sphi 0, %s179
  $region4: #{resblock_forward.1} parent=0 // loop_header_branch
    %16 = sbr.rel (%p14) target = $region8
  $region5: #{resblock_forward.1} parent=0 // loop_body
    %s18 = ssub.s32 %s13, 1
    %s19 = ssub.s32 %s13, 2
    %s20 = sadd.s32 %s13, 1
    %s21 = ssub.s32 %s13, %s20
    %p22 = scmp.eq.s32.totalorder %s21, 0
    %s24 = sadd.s32 %s23, 1
    %s25 = scalar_select %p22, %s23, %s24
    %p28 = pneg %p22
    %p29 = scmp.eq.s32.totalorder %s13, 1
    %p30 = por %p28, %p29
    %p31 = scmp.ne.s32.totalorder %s23, %s26
    %p32 = scmp.eq.s32.totalorder %s13, 0
    %p33 = por %p31, %p32
    %p34 = scmp.ne.s32.totalorder %s23, %s26
    %p35 = scmp.eq.s32.totalorder %s18, 1
    %p36 = por %p34, %p35
    %p37 = scmp.ne.s32.totalorder %s26, %s27
    %p38 = scmp.eq.s32.totalorder %s18, 0
    %p39 = por %p37, %p38
    %p40 = scmp.ne.s32.totalorder %s26, %s27
    %p41 = scmp.eq.s32.totalorder %s19, 1
    %p42 = por %p40, %p41
    %p44 = scmp.ne.s32.totalorder %s27, %s43
    %p45 = scmp.eq.s32.totalorder %s19, 0
    %p46 = por %p44, %p45
    %s48 = sadd.s32 %s47, 1
    %p51 = scmp.eq.s32.totalorder %s13, 1
    %p52 = scmp.ne.s32.totalorder %s47, %s49
    %p53 = scmp.eq.s32.totalorder %s13, 0
    %p54 = por %p52, %p53
    %p55 = scmp.ne.s32.totalorder %s47, %s49
    %p56 = scmp.eq.s32.totalorder %s18, 1
    %p57 = por %p55, %p56
    %p58 = scmp.ne.s32.totalorder %s49, %s50
    %p59 = scmp.eq.s32.totalorder %s18, 0
    %p60 = por %p58, %p59
    %p61 = scmp.ne.s32.totalorder %s49, %s50
    %p62 = scmp.eq.s32.totalorder %s19, 1
    %p63 = por %p61, %p62
    %p65 = scmp.ne.s32.totalorder %s50, %s64
    %p66 = scmp.eq.s32.totalorder %s19, 0
    %p67 = por %p65, %p66
    %s69 = sadd.s32 %s68, 1
    %p72 = scmp.eq.s32.totalorder %s13, 1
    %p73 = scmp.ne.s32.totalorder %s68, %s70
    %p74 = scmp.eq.s32.totalorder %s13, 0
    %p75 = por %p73, %p74
    %p76 = scmp.ne.s32.totalorder %s68, %s70
    %p77 = scmp.eq.s32.totalorder %s18, 1
    %p78 = por %p76, %p77
    %p79 = scmp.ne.s32.totalorder %s70, %s71
    %p80 = scmp.eq.s32.totalorder %s18, 0
    %p81 = por %p79, %p80
    %p82 = scmp.ne.s32.totalorder %s70, %s71
    %p83 = scmp.eq.s32.totalorder %s19, 1
    %p84 = por %p82, %p83
    %p86 = scmp.ne.s32.totalorder %s71, %s85
    %p87 = scmp.eq.s32.totalorder %s19, 0
    %p88 = por %p86, %p87
    %s90 = sadd.s32 %s89, 1
    %p93 = scmp.eq.s32.totalorder %s13, 1
    %p94 = scmp.ne.s32.totalorder %s89, %s91
    %p95 = scmp.eq.s32.totalorder %s13, 0
    %p96 = por %p94, %p95
    %p97 = scmp.ne.s32.totalorder %s89, %s91
    %p98 = scmp.eq.s32.totalorder %s18, 1
    %p99 = por %p97, %p98
    %p100 = scmp.ne.s32.totalorder %s91, %s92
    %p101 = scmp.eq.s32.totalorder %s18, 0
    %p102 = por %p100, %p101
    %p103 = scmp.ne.s32.totalorder %s91, %s92
    %p104 = scmp.eq.s32.totalorder %s19, 1
    %p105 = por %p103, %p104
    %p107 = scmp.ne.s32.totalorder %s92, %s106
    %p108 = scmp.eq.s32.totalorder %s19, 0
    %p109 = por %p107, %p108
    %s111 = sadd.s32 %s110, 1
    %p114 = scmp.eq.s32.totalorder %s13, 1
    %p115 = scmp.ne.s32.totalorder %s110, %s112
    %p116 = scmp.eq.s32.totalorder %s13, 0
    %p117 = por %p115, %p116
    %p118 = scmp.ne.s32.totalorder %s110, %s112
    %p119 = scmp.eq.s32.totalorder %s18, 1
    %p120 = por %p118, %p119
    %p121 = scmp.ne.s32.totalorder %s112, %s113
    %p122 = scmp.eq.s32.totalorder %s18, 0
    %p123 = por %p121, %p122
    %p124 = scmp.ne.s32.totalorder %s112, %s113
    %p125 = scmp.eq.s32.totalorder %s19, 1
    %p126 = por %p124, %p125
    %p128 = scmp.ne.s32.totalorder %s113, %s127
    %p129 = scmp.eq.s32.totalorder %s19, 0
    %p130 = por %p128, %p129
    %s132 = sadd.s32 %s131, 1
    %p135 = scmp.eq.s32.totalorder %s13, 1
    %p136 = scmp.ne.s32.totalorder %s131, %s133
    %p137 = scmp.eq.s32.totalorder %s13, 0
    %p138 = por %p136, %p137
    %p139 = scmp.ne.s32.totalorder %s131, %s133
    %p140 = scmp.eq.s32.totalorder %s18, 1
    %p141 = por %p139, %p140
    %p142 = scmp.ne.s32.totalorder %s133, %s134
    %p143 = scmp.eq.s32.totalorder %s18, 0
    %p144 = por %p142, %p143
    %p145 = scmp.ne.s32.totalorder %s133, %s134
    %p146 = scmp.eq.s32.totalorder %s19, 1
    %p147 = por %p145, %p146
    %p149 = scmp.ne.s32.totalorder %s134, %s148
    %p150 = scmp.eq.s32.totalorder %s19, 0
    %p151 = por %p149, %p150
    %s153 = sadd.s32 %s152, 1
    %p156 = scmp.eq.s32.totalorder %s13, 1
    %p157 = scmp.ne.s32.totalorder %s152, %s154
    %p158 = scmp.eq.s32.totalorder %s13, 0
    %p159 = por %p157, %p158
    %p160 = scmp.ne.s32.totalorder %s152, %s154
    %p161 = scmp.eq.s32.totalorder %s18, 1
    %p162 = por %p160, %p161
    %p163 = scmp.ne.s32.totalorder %s154, %s155
    %p164 = scmp.eq.s32.totalorder %s18, 0
    %p165 = por %p163, %p164
    %p166 = scmp.ne.s32.totalorder %s154, %s155
    %p167 = scmp.eq.s32.totalorder %s19, 1
    %p168 = por %p166, %p167
    %p170 = scmp.ne.s32.totalorder %s155, %s169
    %p171 = scmp.eq.s32.totalorder %s19, 0
    %p172 = por %p170, %p171
    %s173 = ssub.s32 %s13, %s20
    %p174 = scmp.eq.s32.totalorder %s173, 0
    %s176 = sadd.s32 %s175, 1
    %s177 = scalar_select %p174, %s175, %s176
    %p180 = pneg %p174
    %p181 = scmp.eq.s32.totalorder %s13, 1
    %p182 = por %p180, %p181
    %p183 = scmp.ne.s32.totalorder %s175, %s178
    %p184 = scmp.eq.s32.totalorder %s13, 0
    %p185 = por %p183, %p184
    %p186 = scmp.ne.s32.totalorder %s175, %s178
    %p187 = scmp.eq.s32.totalorder %s18, 1
    %p188 = por %p186, %p187
    %p189 = scmp.ne.s32.totalorder %s178, %s179
    %p190 = scmp.eq.s32.totalorder %s18, 0
    %p191 = por %p189, %p190
    %p192 = scmp.ne.s32.totalorder %s178, %s179
    %p193 = scmp.eq.s32.totalorder %s19, 1
    %p194 = por %p192, %p193
    %p196 = scmp.ne.s32.totalorder %s179, %s195
    %p197 = scmp.eq.s32.totalorder %s19, 0
    %p198 = por %p196, %p197
    %p199 = scmp.le.s32.totalorder 1, %s13
    %p200 = scmp.lt.s32.totalorder %s13, 3
    %p201 = pnand %p199, %p200
    %p202 = pneg %p201
    // Predicated region
    $region9: #{resblock_forward.1} parent=5 // pred_check
      _
    $region10: #{resblock_forward.1} parent=5 // pred_check_branch
      %204 = sbr.rel (%p201) target = $region12
    $region11: #{resblock_forward.1} parent=5 // pred_region
      %s205 = ssub.s32 %s13, 1
      // Predicated region
      $region13: #{resblock_forward.1} parent=11 // pred_check
        %p206 = pneg %p60
      $region14: #{resblock_forward.1} parent=11 // pred_check_branch
        %208 = sbr.rel (%p206) target = $region16
      $region15: #{resblock_forward.1} parent=11 // pred_region
        _
      $region16: #{resblock_forward.1} parent=11 // pred_fallthru
        _
      // Predicated region
      $region17: #{resblock_forward.1} parent=11 // pred_check
        %p209 = pneg %p81
      $region18: #{resblock_forward.1} parent=11 // pred_check_branch
        %211 = sbr.rel (%p209) target = $region20
      $region19: #{resblock_forward.1} parent=11 // pred_region
        _
      $region20: #{resblock_forward.1} parent=11 // pred_fallthru
        _
      // Predicated region
      $region21: #{resblock_forward.1} parent=11 // pred_check
        %p212 = pneg %p102
      $region22: #{resblock_forward.1} parent=11 // pred_check_branch
        %214 = sbr.rel (%p212) target = $region24
      $region23: #{resblock_forward.1} parent=11 // pred_region
        _
      $region24: #{resblock_forward.1} parent=11 // pred_fallthru
        _
      // Predicated region
      $region25: #{resblock_forward.1} parent=11 // pred_check
        %p215 = pneg %p123
      $region26: #{resblock_forward.1} parent=11 // pred_check_branch
        %217 = sbr.rel (%p215) target = $region28
      $region27: #{resblock_forward.1} parent=11 // pred_region
        _
      $region28: #{resblock_forward.1} parent=11 // pred_fallthru
        _
      // Predicated region
      $region29: #{resblock_forward.1} parent=11 // pred_check
        %p218 = pneg %p144
      $region30: #{resblock_forward.1} parent=11 // pred_check_branch
        %220 = sbr.rel (%p218) target = $region32
      $region31: #{resblock_forward.1} parent=11 // pred_region
        _
      $region32: #{resblock_forward.1} parent=11 // pred_fallthru
        _
      // Predicated region
      $region33: #{resblock_forward.1} parent=11 // pred_check
        %p221 = pneg %p165
      $region34: #{resblock_forward.1} parent=11 // pred_check_branch
        %223 = sbr.rel (%p221) target = $region36
      $region35: #{resblock_forward.1} parent=11 // pred_region
        _
      $region36: #{resblock_forward.1} parent=11 // pred_fallthru
        _
    $region12: #{resblock_forward.1} parent=5 // pred_fallthru
      _
    %p224 = scmp.lt.s32.totalorder %s13, 2
    // Predicated region
    $region37: #{resblock_forward.1} parent=5 // pred_check
      %p225 = pneg %p224
    $region38: #{resblock_forward.1} parent=5 // pred_check_branch
      %227 = sbr.rel (%p225) target = $region40
    $region39: #{resblock_forward.1} parent=5 // pred_region
      // Predicated region
      $region41: #{resblock_forward.1} parent=39 // pred_check
        %p228 = pneg %p33
      $region42: #{resblock_forward.1} parent=39 // pred_check_branch
        %230 = sbr.rel (%p228) target = $region44
      $region43: #{resblock_forward.1} parent=39 // pred_region
        %p231 = scmp.lt.s32.totalorder %s13, 1
        %s232 = scalar_select %p231, %s13, 1
        %s233 = smul.addr %s232, 32
        %s234 = smul.addr %s233, 8
        %s235 = scalar_lea.vmem %s0, %s234
      $region44: #{resblock_forward.1} parent=39 // pred_fallthru
        _
    $region40: #{resblock_forward.1} parent=5 // pred_fallthru
      _
    %p236 = scmp.le.s32.totalorder 1, %s13
    %p237 = scmp.lt.s32.totalorder %s13, 3
    %p238 = pnand %p236, %p237
    %p239 = pneg %p238
    // Predicated region
    $region45: #{resblock_forward.1} parent=5 // pred_check
      _
    $region46: #{resblock_forward.1} parent=5 // pred_check_branch
      %241 = sbr.rel (%p238) target = $region48
    $region47: #{resblock_forward.1} parent=5 // pred_region
      %s242 = ssub.s32 %s13, 1
      %p243 = scmp.lt.s32.totalorder %s18, 1
      %s244 = scalar_select %p243, %s18, 1
      %s245 = smul.addr %s244, 32
      %s246 = smul.addr %s245, 8
      %s247 = scalar_lea.vmem %s0, %s246
      %p248 = pneg %p39
      %p249 = pneg %p36
      %p250 = pneg %p60
      %p251 = pneg %p57
      %p252 = pneg %p81
      %p253 = pneg %p78
      %p254 = pneg %p102
      %p255 = pneg %p99
      %p256 = pneg %p123
      %p257 = pneg %p120
      %p258 = pneg %p144
      %p259 = pneg %p141
      %p260 = pneg %p165
      %p261 = pneg %p162
      %p262 = pneg %p191
      %p263 = pneg %p188
      %p264 = scmp.lt.s32.totalorder %s18, 1
      %s265 = scalar_select %p264, %s18, 1
      %s266 = smul.addr %s265, 32
      %s267 = smul.addr %s266, 8
      %s268 = scalar_lea.vmem %s7, %s267
      %p269 = scmp.lt.s32.totalorder %s18, 1
      %s270 = scalar_select %p269, %s18, 1
      %s271 = smul.addr %s270, 32
      %s272 = smul.addr %s271, 8
      %s273 = scalar_lea.vmem %s0, %s272
      %p274 = scmp.lt.s32.totalorder %s18, 1
      %s275 = scalar_select %p274, %s18, 1
      %s276 = smul.addr %s275, 32
      %s277 = smul.addr %s276, 8
      %s278 = scalar_lea.vmem %s7, %s277
      %v280 = vld [vmem:[%s273] sm:$0xff]
      %v281 = vld [vmem:[%s273 + $0x8] sm:$0xff]
      %v282 = vld [vmem:[%s273 + $0x10] sm:$0xff]
      %v283 = vld [vmem:[%s273 + $0x18] sm:$0xff]
      %v284 = vld [vmem:[%s273 + $0x20] sm:$0xff]
      %v285 = vld [vmem:[%s273 + $0x28] sm:$0xff]
      %v286 = vld [vmem:[%s273 + $0x30] sm:$0xff]
      %v287 = vld [vmem:[%s273 + $0x38] sm:$0xff]
      %v288 = vld [vmem:[%s273 + $0x40] sm:$0xff]
      %v289 = vld [vmem:[%s273 + $0x48] sm:$0xff]
      %v290 = vld [vmem:[%s273 + $0x50] sm:$0xff]
      %v291 = vld [vmem:[%s273 + $0x58] sm:$0xff]
      %v292 = vld [vmem:[%s273 + $0x60] sm:$0xff]
      %v293 = vld [vmem:[%s273 + $0x68] sm:$0xff]
      %v294 = vld [vmem:[%s273 + $0x70] sm:$0xff]
      %v295 = vld [vmem:[%s273 + $0x78] sm:$0xff]
      %v296 = vld [vmem:[%s273 + $0x80] sm:$0xff]
      %v297 = vld [vmem:[%s273 + $0x88] sm:$0xff]
      %v298 = vld [vmem:[%s273 + $0x90] sm:$0xff]
      %v299 = vld [vmem:[%s273 + $0x98] sm:$0xff]
      %v300 = vld [vmem:[%s273 + $0xa0] sm:$0xff]
      %v301 = vld [vmem:[%s273 + $0xa8] sm:$0xff]
      %v302 = vld [vmem:[%s273 + $0xb0] sm:$0xff]
      %v303 = vld [vmem:[%s273 + $0xb8] sm:$0xff]
      %v304 = vld [vmem:[%s273 + $0xc0] sm:$0xff]
      %v305 = vld [vmem:[%s273 + $0xc8] sm:$0xff]
      %v306 = vld [vmem:[%s273 + $0xd0] sm:$0xff]
      %v307 = vld [vmem:[%s273 + $0xd8] sm:$0xff]
      %v308 = vld [vmem:[%s273 + $0xe0] sm:$0xff]
      %v309 = vld [vmem:[%s273 + $0xe8] sm:$0xff]
      %v310 = vld [vmem:[%s273 + $0xf0] sm:$0xff]
      %v311 = vld [vmem:[%s273 + $0xf8] sm:$0xff]
      %s312 = scalar_lea.vmem [#allocation2], 24
      %vm313 = vcmask 64512
      %314 = vst.msk [vmem:[%s312 + $0x1] sm:$0xff] %vm313, %v280
      %315 = vst.msk [vmem:[%s312 + $0x9] sm:$0xff] %vm313, %v281
      %316 = vst.msk [vmem:[%s312 + $0x19] sm:$0xff] %vm313, %v282
      %317 = vst.msk [vmem:[%s312 + $0x21] sm:$0xff] %vm313, %v283
      %318 = vst.msk [vmem:[%s312 + $0x31] sm:$0xff] %vm313, %v284
      %319 = vst.msk [vmem:[%s312 + $0x39] sm:$0xff] %vm313, %v285
      %320 = vst.msk [vmem:[%s312 + $0x49] sm:$0xff] %vm313, %v286
      %321 = vst.msk [vmem:[%s312 + $0x51] sm:$0xff] %vm313, %v287
      %322 = vst.msk [vmem:[%s312 + $0x61] sm:$0xff] %vm313, %v288
      %323 = vst.msk [vmem:[%s312 + $0x69] sm:$0xff] %vm313, %v289
      %324 = vst.msk [vmem:[%s312 + $0x79] sm:$0xff] %vm313, %v290
      %325 = vst.msk [vmem:[%s312 + $0x81] sm:$0xff] %vm313, %v291
      %326 = vst.msk [vmem:[%s312 + $0x91] sm:$0xff] %vm313, %v292
      %327 = vst.msk [vmem:[%s312 + $0x99] sm:$0xff] %vm313, %v293
      %328 = vst.msk [vmem:[%s312 + $0xa9] sm:$0xff] %vm313, %v294
      %329 = vst.msk [vmem:[%s312 + $0xb1] sm:$0xff] %vm313, %v295
      %330 = vst.msk [vmem:[%s312 + $0xc1] sm:$0xff] %vm313, %v296
      %331 = vst.msk [vmem:[%s312 + $0xc9] sm:$0xff] %vm313, %v297
      %332 = vst.msk [vmem:[%s312 + $0xd9] sm:$0xff] %vm313, %v298
      %333 = vst.msk [vmem:[%s312 + $0xe1] sm:$0xff] %vm313, %v299
      %334 = vst.msk [vmem:[%s312 + $0xf1] sm:$0xff] %vm313, %v300
      %335 = vst.msk [vmem:[%s312 + $0xf9] sm:$0xff] %vm313, %v301
      %336 = vst.msk [vmem:[%s312 + $0x109] sm:$0xff] %vm313, %v302
      %337 = vst.msk [vmem:[%s312 + $0x111] sm:$0xff] %vm313, %v303
      %338 = vst.msk [vmem:[%s312 + $0x121] sm:$0xff] %vm313, %v304
      %339 = vst.msk [vmem:[%s312 + $0x129] sm:$0xff] %vm313, %v305
      %340 = vst.msk [vmem:[%s312 + $0x139] sm:$0xff] %vm313, %v306
      %341 = vst.msk [vmem:[%s312 + $0x141] sm:$0xff] %vm313, %v307
      %342 = vst.msk [vmem:[%s312 + $0x151] sm:$0xff] %vm313, %v308
      %343 = vst.msk [vmem:[%s312 + $0x159] sm:$0xff] %vm313, %v309
      %344 = vst.msk [vmem:[%s312 + $0x169] sm:$0xff] %vm313, %v310
      %345 = vst.msk [vmem:[%s312 + $0x171] sm:$0xff] %vm313, %v311
      %346 = vst.msk [vmem:[#allocation2 + $0x1] sm:$0xff] %vm313, %v282
      %347 = vst.msk [vmem:[#allocation2 + $0x9] sm:$0xff] %vm313, %v283
      %s348 = scalar_lea.vmem [#allocation2], 408
      %349 = vst.msk [vmem:[%s348 + $0x1] sm:$0xff] %vm313, %v308
      %350 = vst.msk [vmem:[%s348 + $0x9] sm:$0xff] %vm313, %v309
      %v351 = vld [vmem:[#allocation2 + $0x2] sm:$0x1]
      %v352 = vld [vmem:[#allocation2 + $0x1a] sm:$0x1]
      %v353 = vld [vmem:[#allocation2 + $0x32] sm:$0x1]
      %v354 = vld [vmem:[#allocation2 + $0x4a] sm:$0x1]
      %v355 = vld [vmem:[#allocation2 + $0x62] sm:$0x1]
      %v356 = vld [vmem:[#allocation2 + $0x7a] sm:$0x1]
      %v357 = vld [vmem:[#allocation2 + $0x92] sm:$0x1]
      %v358 = vld [vmem:[#allocation2 + $0xaa] sm:$0x1]
      %v359 = vld [vmem:[#allocation2 + $0xc2] sm:$0x1]
      %v360 = vld [vmem:[#allocation2 + $0xda] sm:$0x1]
      %v361 = vld [vmem:[#allocation2 + $0xf2] sm:$0x1]
      %v362 = vld [vmem:[#allocation2 + $0x10a] sm:$0x1]
      %v363 = vld [vmem:[#allocation2 + $0x122] sm:$0x1]
      %v364 = vld [vmem:[#allocation2 + $0x13a] sm:$0x1]
      %v365 = vld [vmem:[#allocation2 + $0x152] sm:$0x1]
      %v366 = vld [vmem:[#allocation2 + $0x16a] sm:$0x1]
      %v367 = vld [vmem:[#allocation2 + $0x182] sm:$0x1]
      %v368 = vld [vmem:[#allocation2 + $0x19a] sm:$0x1]
      %vm369 = vcmask 57344
      %370 = vst.msk [vmem:[#allocation2] sm:$0x1] %vm369, %v351
      %371 = vst.msk [vmem:[#allocation2 + $0x18] sm:$0x1] %vm369, %v352
      %372 = vst.msk [vmem:[#allocation2 + $0x30] sm:$0x1] %vm369, %v353
      %373 = vst.msk [vmem:[#allocation2 + $0x48] sm:$0x1] %vm369, %v354
      %374 = vst.msk [vmem:[#allocation2 + $0x60] sm:$0x1] %vm369, %v355
      %375 = vst.msk [vmem:[#allocation2 + $0x78] sm:$0x1] %vm369, %v356
      %376 = vst.msk [vmem:[#allocation2 + $0x90] sm:$0x1] %vm369, %v357
      %377 = vst.msk [vmem:[#allocation2 + $0xa8] sm:$0x1] %vm369, %v358
      %378 = vst.msk [vmem:[#allocation2 + $0xc0] sm:$0x1] %vm369, %v359
      %379 = vst.msk [vmem:[#allocation2 + $0xd8] sm:$0x1] %vm369, %v360
      %380 = vst.msk [vmem:[#allocation2 + $0xf0] sm:$0x1] %vm369, %v361
      %381 = vst.msk [vmem:[#allocation2 + $0x108] sm:$0x1] %vm369, %v362
      %382 = vst.msk [vmem:[#allocation2 + $0x120] sm:$0x1] %vm369, %v363
      %383 = vst.msk [vmem:[#allocation2 + $0x138] sm:$0x1] %vm369, %v364
      %384 = vst.msk [vmem:[#allocation2 + $0x150] sm:$0x1] %vm369, %v365
      %385 = vst.msk [vmem:[#allocation2 + $0x168] sm:$0x1] %vm369, %v366
      %386 = vst.msk [vmem:[#allocation2 + $0x180] sm:$0x1] %vm369, %v367
      %387 = vst.msk [vmem:[#allocation2 + $0x198] sm:$0x1] %vm369, %v368
      %v388 = vld [vmem:[#allocation2 + $0xf] sm:$0x1]
      %v389 = vld [vmem:[#allocation2 + $0x27] sm:$0x1]
      %v390 = vld [vmem:[#allocation2 + $0x3f] sm:$0x1]
      %v391 = vld [vmem:[#allocation2 + $0x57] sm:$0x1]
      %v392 = vld [vmem:[#allocation2 + $0x6f] sm:$0x1]
      %v393 = vld [vmem:[#allocation2 + $0x87] sm:$0x1]
      %v394 = vld [vmem:[#allocation2 + $0x9f] sm:$0x1]
      %v395 = vld [vmem:[#allocation2 + $0xb7] sm:$0x1]
      %v396 = vld [vmem:[#allocation2 + $0xcf] sm:$0x1]
      %v397 = vld [vmem:[#allocation2 + $0xe7] sm:$0x1]
      %v398 = vld [vmem:[#allocation2 + $0xff] sm:$0x1]
      %v399 = vld [vmem:[#allocation2 + $0x117] sm:$0x1]
      %v400 = vld [vmem:[#allocation2 + $0x12f] sm:$0x1]
      %v401 = vld [vmem:[#allocation2 + $0x147] sm:$0x1]
      %v402 = vld [vmem:[#allocation2 + $0x15f] sm:$0x1]
      %v403 = vld [vmem:[#allocation2 + $0x177] sm:$0x1]
      %v404 = vld [vmem:[#allocation2 + $0x18f] sm:$0x1]
      %v405 = vld [vmem:[#allocation2 + $0x1a7] sm:$0x1]
      %406 = vst.msk [vmem:[#allocation2 + $0x11] sm:$0x1] %vm369, %v388
      %407 = vst.msk [vmem:[#allocation2 + $0x29] sm:$0x1] %vm369, %v389
      %408 = vst.msk [vmem:[#allocation2 + $0x41] sm:$0x1] %vm369, %v390
      %409 = vst.msk [vmem:[#allocation2 + $0x59] sm:$0x1] %vm369, %v391
      %410 = vst.msk [vmem:[#allocation2 + $0x71] sm:$0x1] %vm369, %v392
      %411 = vst.msk [vmem:[#allocation2 + $0x89] sm:$0x1] %vm369, %v393
      %412 = vst.msk [vmem:[#allocation2 + $0xa1] sm:$0x1] %vm369, %v394
      %413 = vst.msk [vmem:[#allocation2 + $0xb9] sm:$0x1] %vm369, %v395
      %414 = vst.msk [vmem:[#allocation2 + $0xd1] sm:$0x1] %vm369, %v396
      %415 = vst.msk [vmem:[#allocation2 + $0xe9] sm:$0x1] %vm369, %v397
      %416 = vst.msk [vmem:[#allocation2 + $0x101] sm:$0x1] %vm369, %v398
      %417 = vst.msk [vmem:[#allocation2 + $0x119] sm:$0x1] %vm369, %v399
      %418 = vst.msk [vmem:[#allocation2 + $0x131] sm:$0x1] %vm369, %v400
      %419 = vst.msk [vmem:[#allocation2 + $0x149] sm:$0x1] %vm369, %v401
      %420 = vst.msk [vmem:[#allocation2 + $0x161] sm:$0x1] %vm369, %v402
      %421 = vst.msk [vmem:[#allocation2 + $0x179] sm:$0x1] %vm369, %v403
      %422 = vst.msk [vmem:[#allocation2 + $0x191] sm:$0x1] %vm369, %v404
      %423 = vst.msk [vmem:[#allocation2 + $0x1a9] sm:$0x1] %vm369, %v405
      %v424 = vld [vmem:[%s2] sm:$0x1]
      %v425 = vld [vmem:[%s3] sm:$0x1]
      %v426 = vld [vmem:[#allocation2] sm:$0xff]
      %v427 = vld [vmem:[#allocation2 + $0x8] sm:$0xff]
      %v428 = vld [vmem:[#allocation2 + $0x18] sm:$0xff]
      %v429 = vld [vmem:[#allocation2 + $0x20] sm:$0xff]
      %v430 = vld [vmem:[#allocation2 + $0x30] sm:$0xff]
      %v431 = vld [vmem:[#allocation2 + $0x38] sm:$0xff]
      %v432 = vld [vmem:[#allocation2 + $0x48] sm:$0xff]
      %v433 = vld [vmem:[#allocation2 + $0x50] sm:$0xff]
      %v434 = vld [vmem:[#allocation2 + $0x60] sm:$0xff]
      %v435 = vld [vmem:[#allocation2 + $0x68] sm:$0xff]
      %v436 = vld [vmem:[#allocation2 + $0x78] sm:$0xff]
      %v437 = vld [vmem:[#allocation2 + $0x80] sm:$0xff]
      %v438 = vld [vmem:[#allocation2 + $0x90] sm:$0xff]
      %v439 = vld [vmem:[#allocation2 + $0x98] sm:$0xff]
      %v440 = vld [vmem:[#allocation2 + $0xa8] sm:$0xff]
      %v441 = vld [vmem:[#allocation2 + $0xb0] sm:$0xff]
      %v442 = vld [vmem:[#allocation2 + $0xc0] sm:$0xff]
      %v443 = vld [vmem:[#allocation2 + $0xc8] sm:$0xff]
      %v444 = vld [vmem:[#allocation2 + $0xd8] sm:$0xff]
      %v445 = vld [vmem:[#allocation2 + $0xe0] sm:$0xff]
      %v446 = vld [vmem:[#allocation2 + $0xf0] sm:$0xff]
      %v447 = vld [vmem:[#allocation2 + $0xf8] sm:$0xff]
      %v448 = vld [vmem:[#allocation2 + $0x108] sm:$0xff]
      %v449 = vld [vmem:[#allocation2 + $0x110] sm:$0xff]
      %v450 = vld [vmem:[#allocation2 + $0x120] sm:$0xff]
      %v451 = vld [vmem:[#allocation2 + $0x128] sm:$0xff]
      %v452 = vld [vmem:[#allocation2 + $0x138] sm:$0xff]
      %v453 = vld [vmem:[#allocation2 + $0x140] sm:$0xff]
      %v454 = vld [vmem:[#allocation2 + $0x150] sm:$0xff]
      %v455 = vld [vmem:[#allocation2 + $0x158] sm:$0xff]
      %v456 = vld [vmem:[#allocation2 + $0x168] sm:$0xff]
      %v457 = vld [vmem:[#allocation2 + $0x170] sm:$0xff]
      %v458 = vld [vmem:[#allocation2 + $0x1] sm:$0xff]
      %v459 = vld [vmem:[#allocation2 + $0x9] sm:$0xff]
      %v460 = vld [vmem:[#allocation2 + $0x19] sm:$0xff]
      %v461 = vld [vmem:[#allocation2 + $0x21] sm:$0xff]
      %v462 = vld [vmem:[#allocation2 + $0x31] sm:$0xff]
      %v463 = vld [vmem:[#allocation2 + $0x39] sm:$0xff]
      %v464 = vld [vmem:[#allocation2 + $0x49] sm:$0xff]
      %v465 = vld [vmem:[#allocation2 + $0x51] sm:$0xff]
      %v466 = vld [vmem:[#allocation2 + $0x61] sm:$0xff]
      %v467 = vld [vmem:[#allocation2 + $0x69] sm:$0xff]
      %v468 = vld [vmem:[#allocation2 + $0x79] sm:$0xff]
      %v469 = vld [vmem:[#allocation2 + $0x81] sm:$0xff]
      %v470 = vld [vmem:[#allocation2 + $0x91] sm:$0xff]
      %v471 = vld [vmem:[#allocation2 + $0x99] sm:$0xff]
      %v472 = vld [vmem:[#allocation2 + $0xa9] sm:$0xff]
      %v473 = vld [vmem:[#allocation2 + $0xb1] sm:$0xff]
      %v474 = vld [vmem:[#allocation2 + $0xc1] sm:$0xff]
      %v475 = vld [vmem:[#allocation2 + $0xc9] sm:$0xff]
      %v476 = vld [vmem:[#allocation2 + $0xd9] sm:$0xff]
      %v477 = vld [vmem:[#allocation2 + $0xe1] sm:$0xff]
      %v478 = vld [vmem:[#allocation2 + $0xf1] sm:$0xff]
      %v479 = vld [vmem:[#allocation2 + $0xf9] sm:$0xff]
      %v480 = vld [vmem:[#allocation2 + $0x109] sm:$0xff]
      %v481 = vld [vmem:[#allocation2 + $0x111] sm:$0xff]
      %v482 = vld [vmem:[#allocation2 + $0x121] sm:$0xff]
      %v483 = vld [vmem:[#allocation2 + $0x129] sm:$0xff]
      %v484 = vld [vmem:[#allocation2 + $0x139] sm:$0xff]
      %v485 = vld [vmem:[#allocation2 + $0x141] sm:$0xff]
      %v486 = vld [vmem:[#allocation2 + $0x151] sm:$0xff]
      %v487 = vld [vmem:[#allocation2 + $0x159] sm:$0xff]
      %v488 = vld [vmem:[#allocation2 + $0x169] sm:$0xff]
      %v489 = vld [vmem:[#allocation2 + $0x171] sm:$0xff]
      %v490 = vld [vmem:[#allocation2 + $0x2] sm:$0xff]
      %v491 = vld [vmem:[#allocation2 + $0xa] sm:$0xff]
      %v492 = vld [vmem:[#allocation2 + $0x1a] sm:$0xff]
      %v493 = vld [vmem:[#allocation2 + $0x22] sm:$0xff]
      %v494 = vld [vmem:[#allocation2 + $0x32] sm:$0xff]
      %v495 = vld [vmem:[#allocation2 + $0x3a] sm:$0xff]
      %v496 = vld [vmem:[#allocation2 + $0x4a] sm:$0xff]
      %v497 = vld [vmem:[#allocation2 + $0x52] sm:$0xff]
      %v498 = vld [vmem:[#allocation2 + $0x62] sm:$0xff]
      %v499 = vld [vmem:[#allocation2 + $0x6a] sm:$0xff]
      %v500 = vld [vmem:[#allocation2 + $0x7a] sm:$0xff]
      %v501 = vld [vmem:[#allocation2 + $0x82] sm:$0xff]
      %v502 = vld [vmem:[#allocation2 + $0x92] sm:$0xff]
      %v503 = vld [vmem:[#allocation2 + $0x9a] sm:$0xff]
      %v504 = vld [vmem:[#allocation2 + $0xaa] sm:$0xff]
      %v505 = vld [vmem:[#allocation2 + $0xb2] sm:$0xff]
      %v506 = vld [vmem:[#allocation2 + $0xc2] sm:$0xff]
      %v507 = vld [vmem:[#allocation2 + $0xca] sm:$0xff]
      %v508 = vld [vmem:[#allocation2 + $0xda] sm:$0xff]
      %v509 = vld [vmem:[#allocation2 + $0xe2] sm:$0xff]
      %v510 = vld [vmem:[#allocation2 + $0xf2] sm:$0xff]
      %v511 = vld [vmem:[#allocation2 + $0xfa] sm:$0xff]
      %v512 = vld [vmem:[#allocation2 + $0x10a] sm:$0xff]
      %v513 = vld [vmem:[#allocation2 + $0x112] sm:$0xff]
      %v514 = vld [vmem:[#allocation2 + $0x122] sm:$0xff]
      %v515 = vld [vmem:[#allocation2 + $0x12a] sm:$0xff]
      %v516 = vld [vmem:[#allocation2 + $0x13a] sm:$0xff]
      %v517 = vld [vmem:[#allocation2 + $0x142] sm:$0xff]
      %v518 = vld [vmem:[#allocation2 + $0x152] sm:$0xff]
      %v519 = vld [vmem:[#allocation2 + $0x15a] sm:$0xff]
      %v520 = vld [vmem:[#allocation2 + $0x16a] sm:$0xff]
      %v521 = vld [vmem:[#allocation2 + $0x172] sm:$0xff]
      %554 = vrot.lane.b32.xlu0 %v458, 8
      %v555 = vpop.permute.xlu0 %554
      %556 = vrot.lane.b32.xlu0 %v459, 8
      %v557 = vpop.permute.xlu0 %556
      %558 = vrot.lane.b32.xlu0 %v460, 8
      %v559 = vpop.permute.xlu0 %558
      %560 = vrot.lane.b32.xlu0 %v461, 8
      %v561 = vpop.permute.xlu0 %560
      %562 = vrot.lane.b32.xlu0 %v462, 8
      %v563 = vpop.permute.xlu0 %562
      %564 = vrot.lane.b32.xlu0 %v463, 8
      %v565 = vpop.permute.xlu0 %564
      %566 = vrot.lane.b32.xlu0 %v464, 8
      %v567 = vpop.permute.xlu0 %566
      %568 = vrot.lane.b32.xlu0 %v465, 8
      %v569 = vpop.permute.xlu0 %568
      %570 = vrot.lane.b32.xlu0 %v466, 8
      %v571 = vpop.permute.xlu0 %570
      %572 = vrot.lane.b32.xlu0 %v467, 8
      %v573 = vpop.permute.xlu0 %572
      %574 = vrot.lane.b32.xlu0 %v468, 8
      %v575 = vpop.permute.xlu0 %574
      %576 = vrot.lane.b32.xlu0 %v469, 8
      %v577 = vpop.permute.xlu0 %576
      %578 = vrot.lane.b32.xlu0 %v470, 8
      %v579 = vpop.permute.xlu0 %578
      %580 = vrot.lane.b32.xlu0 %v471, 8
      %v581 = vpop.permute.xlu0 %580
      %582 = vrot.lane.b32.xlu0 %v472, 8
      %v583 = vpop.permute.xlu0 %582
      %584 = vrot.lane.b32.xlu0 %v473, 8
      %v585 = vpop.permute.xlu0 %584
      %586 = vrot.lane.b32.xlu0 %v474, 8
      %v587 = vpop.permute.xlu0 %586
      %588 = vrot.lane.b32.xlu0 %v475, 8
      %v589 = vpop.permute.xlu0 %588
      %590 = vrot.lane.b32.xlu0 %v476, 8
      %v591 = vpop.permute.xlu0 %590
      %592 = vrot.lane.b32.xlu0 %v477, 8
      %v593 = vpop.permute.xlu0 %592
      %594 = vrot.lane.b32.xlu0 %v478, 8
      %v595 = vpop.permute.xlu0 %594
      %596 = vrot.lane.b32.xlu0 %v479, 8
      %v597 = vpop.permute.xlu0 %596
      %598 = vrot.lane.b32.xlu0 %v480, 8
      %v599 = vpop.permute.xlu0 %598
      %600 = vrot.lane.b32.xlu0 %v481, 8
      %v601 = vpop.permute.xlu0 %600
      %602 = vrot.lane.b32.xlu0 %v482, 8
      %v603 = vpop.permute.xlu0 %602
      %604 = vrot.lane.b32.xlu0 %v483, 8
      %v605 = vpop.permute.xlu0 %604
      %606 = vrot.lane.b32.xlu0 %v484, 8
      %v607 = vpop.permute.xlu0 %606
      %608 = vrot.lane.b32.xlu0 %v485, 8
      %v609 = vpop.permute.xlu0 %608
      %610 = vrot.lane.b32.xlu0 %v486, 8
      %v611 = vpop.permute.xlu0 %610
      %612 = vrot.lane.b32.xlu0 %v487, 8
      %v613 = vpop.permute.xlu0 %612
      %614 = vrot.lane.b32.xlu0 %v488, 8
      %v615 = vpop.permute.xlu0 %614
      %616 = vrot.lane.b32.xlu0 %v489, 8
      %v617 = vpop.permute.xlu0 %616
      %682 = vrot.lane.b32.xlu0 %v490, 16
      %v683 = vpop.permute.xlu0 %682
      %684 = vrot.lane.b32.xlu0 %v491, 16
      %v685 = vpop.permute.xlu0 %684
      %686 = vrot.lane.b32.xlu0 %v492, 16
      %v687 = vpop.permute.xlu0 %686
      %688 = vrot.lane.b32.xlu0 %v493, 16
      %v689 = vpop.permute.xlu0 %688
      %690 = vrot.lane.b32.xlu0 %v494, 16
      %v691 = vpop.permute.xlu0 %690
      %692 = vrot.lane.b32.xlu0 %v495, 16
      %v693 = vpop.permute.xlu0 %692
      %694 = vrot.lane.b32.xlu0 %v496, 16
      %v695 = vpop.permute.xlu0 %694
      %696 = vrot.lane.b32.xlu0 %v497, 16
      %v697 = vpop.permute.xlu0 %696
      %698 = vrot.lane.b32.xlu0 %v498, 16
      %v699 = vpop.permute.xlu0 %698
      %700 = vrot.lane.b32.xlu0 %v499, 16
      %v701 = vpop.permute.xlu0 %700
      %702 = vrot.lane.b32.xlu0 %v500, 16
      %v703 = vpop.permute.xlu0 %702
      %704 = vrot.lane.b32.xlu0 %v501, 16
      %v705 = vpop.permute.xlu0 %704
      %706 = vrot.lane.b32.xlu0 %v502, 16
      %v707 = vpop.permute.xlu0 %706
      %708 = vrot.lane.b32.xlu0 %v503, 16
      %v709 = vpop.permute.xlu0 %708
      %710 = vrot.lane.b32.xlu0 %v504, 16
      %v711 = vpop.permute.xlu0 %710
      %712 = vrot.lane.b32.xlu0 %v505, 16
      %v713 = vpop.permute.xlu0 %712
      %714 = vrot.lane.b32.xlu0 %v506, 16
      %v715 = vpop.permute.xlu0 %714
      %716 = vrot.lane.b32.xlu0 %v507, 16
      %v717 = vpop.permute.xlu0 %716
      %718 = vrot.lane.b32.xlu0 %v508, 16
      %v719 = vpop.permute.xlu0 %718
      %720 = vrot.lane.b32.xlu0 %v509, 16
      %v721 = vpop.permute.xlu0 %720
      %722 = vrot.lane.b32.xlu0 %v510, 16
      %v723 = vpop.permute.xlu0 %722
      %724 = vrot.lane.b32.xlu0 %v511, 16
      %v725 = vpop.permute.xlu0 %724
      %726 = vrot.lane.b32.xlu0 %v512, 16
      %v727 = vpop.permute.xlu0 %726
      %728 = vrot.lane.b32.xlu0 %v513, 16
      %v729 = vpop.permute.xlu0 %728
      %730 = vrot.lane.b32.xlu0 %v514, 16
      %v731 = vpop.permute.xlu0 %730
      %732 = vrot.lane.b32.xlu0 %v515, 16
      %v733 = vpop.permute.xlu0 %732
      %734 = vrot.lane.b32.xlu0 %v516, 16
      %v735 = vpop.permute.xlu0 %734
      %736 = vrot.lane.b32.xlu0 %v517, 16
      %v737 = vpop.permute.xlu0 %736
      %738 = vrot.lane.b32.xlu0 %v518, 16
      %v739 = vpop.permute.xlu0 %738
      %740 = vrot.lane.b32.xlu0 %v519, 16
      %v741 = vpop.permute.xlu0 %740
      %742 = vrot.lane.b32.xlu0 %v520, 16
      %v743 = vpop.permute.xlu0 %742
      %744 = vrot.lane.b32.xlu0 %v521, 16
      %v745 = vpop.permute.xlu0 %744
      %v778 = vsel %vm313, %v426, %v555
      %v779 = vsel %vm313, %v427, %v557
      %v780 = vsel %vm313, %v428, %v559
      %v781 = vsel %vm313, %v429, %v561
      %v782 = vsel %vm313, %v430, %v563
      %v783 = vsel %vm313, %v431, %v565
      %v784 = vsel %vm313, %v432, %v567
      %v785 = vsel %vm313, %v433, %v569
      %v786 = vsel %vm313, %v434, %v571
      %v787 = vsel %vm313, %v435, %v573
      %v788 = vsel %vm313, %v436, %v575
      %v789 = vsel %vm313, %v437, %v577
      %v790 = vsel %vm313, %v438, %v579
      %v791 = vsel %vm313, %v439, %v581
      %v792 = vsel %vm313, %v440, %v583
      %v793 = vsel %vm313, %v441, %v585
      %v794 = vsel %vm313, %v442, %v587
      %v795 = vsel %vm313, %v443, %v589
      %v796 = vsel %vm313, %v444, %v591
      %v797 = vsel %vm313, %v445, %v593
      %v798 = vsel %vm313, %v446, %v595
      %v799 = vsel %vm313, %v447, %v597
      %v800 = vsel %vm313, %v448, %v599
      %v801 = vsel %vm313, %v449, %v601
      %v802 = vsel %vm313, %v450, %v603
      %v803 = vsel %vm313, %v451, %v605
      %v804 = vsel %vm313, %v452, %v607
      %v805 = vsel %vm313, %v453, %v609
      %v806 = vsel %vm313, %v454, %v611
      %v807 = vsel %vm313, %v455, %v613
      %v808 = vsel %vm313, %v456, %v615
      %v809 = vsel %vm313, %v457, %v617
      %vm810 = vcmask 130048
      %v811 = vsel %vm810, %v778, %v683
      %v812 = vsel %vm810, %v779, %v685
      %v813 = vsel %vm810, %v780, %v687
      %v814 = vsel %vm810, %v781, %v689
      %v815 = vsel %vm810, %v782, %v691
      %v816 = vsel %vm810, %v783, %v693
      %v817 = vsel %vm810, %v784, %v695
      %v818 = vsel %vm810, %v785, %v697
      %v819 = vsel %vm810, %v786, %v699
      %v820 = vsel %vm810, %v787, %v701
      %v821 = vsel %vm810, %v788, %v703
      %v822 = vsel %vm810, %v789, %v705
      %v823 = vsel %vm810, %v790, %v707
      %v824 = vsel %vm810, %v791, %v709
      %v825 = vsel %vm810, %v792, %v711
      %v826 = vsel %vm810, %v793, %v713
      %v827 = vsel %vm810, %v794, %v715
      %v828 = vsel %vm810, %v795, %v717
      %v829 = vsel %vm810, %v796, %v719
      %v830 = vsel %vm810, %v797, %v721
      %v831 = vsel %vm810, %v798, %v723
      %v832 = vsel %vm810, %v799, %v725
      %v833 = vsel %vm810, %v800, %v727
      %v834 = vsel %vm810, %v801, %v729
      %v835 = vsel %vm810, %v802, %v731
      %v836 = vsel %vm810, %v803, %v733
      %v837 = vsel %vm810, %v804, %v735
      %v838 = vsel %vm810, %v805, %v737
      %v839 = vsel %vm810, %v806, %v739
      %v840 = vsel %vm810, %v807, %v741
      %v841 = vsel %vm810, %v808, %v743
      %v842 = vsel %vm810, %v809, %v745
      %v843 = vpack.c.bf16 %v812, %v811
      %v844 = vpack.c.bf16 %v814, %v813
      %v845 = vpack.c.bf16 %v816, %v815
      %v846 = vpack.c.bf16 %v818, %v817
      %v847 = vpack.c.bf16 %v820, %v819
      %v848 = vpack.c.bf16 %v822, %v821
      %v849 = vpack.c.bf16 %v824, %v823
      %v850 = vpack.c.bf16 %v826, %v825
      %v851 = vpack.c.bf16 %v828, %v827
      %v852 = vpack.c.bf16 %v830, %v829
      %v853 = vpack.c.bf16 %v832, %v831
      %v854 = vpack.c.bf16 %v834, %v833
      %v855 = vpack.c.bf16 %v836, %v835
      %v856 = vpack.c.bf16 %v838, %v837
      %v857 = vpack.c.bf16 %v840, %v839
      %v858 = vpack.c.bf16 %v842, %v841
      %v859 = vld [vmem:[%s1] sm:$0xf]
      %v860 = vld [vmem:[%s1 + $0x4] sm:$0xf]
      %v861 = vld [vmem:[%s1 + $0x8] sm:$0xf]
      %v862 = vld [vmem:[%s312] sm:$0xff]
      %v863 = vld [vmem:[%s312 + $0x8] sm:$0xff]
      %v864 = vld [vmem:[%s312 + $0x18] sm:$0xff]
      %v865 = vld [vmem:[%s312 + $0x20] sm:$0xff]
      %v866 = vld [vmem:[%s312 + $0x30] sm:$0xff]
      %v867 = vld [vmem:[%s312 + $0x38] sm:$0xff]
      %v868 = vld [vmem:[%s312 + $0x48] sm:$0xff]
      %v869 = vld [vmem:[%s312 + $0x50] sm:$0xff]
      %v870 = vld [vmem:[%s312 + $0x60] sm:$0xff]
      %v871 = vld [vmem:[%s312 + $0x68] sm:$0xff]
      %v872 = vld [vmem:[%s312 + $0x78] sm:$0xff]
      %v873 = vld [vmem:[%s312 + $0x80] sm:$0xff]
      %v874 = vld [vmem:[%s312 + $0x90] sm:$0xff]
      %v875 = vld [vmem:[%s312 + $0x98] sm:$0xff]
      %v876 = vld [vmem:[%s312 + $0xa8] sm:$0xff]
      %v877 = vld [vmem:[%s312 + $0xb0] sm:$0xff]
      %v878 = vld [vmem:[%s312 + $0xc0] sm:$0xff]
      %v879 = vld [vmem:[%s312 + $0xc8] sm:$0xff]
      %v880 = vld [vmem:[%s312 + $0xd8] sm:$0xff]
      %v881 = vld [vmem:[%s312 + $0xe0] sm:$0xff]
      %v882 = vld [vmem:[%s312 + $0xf0] sm:$0xff]
      %v883 = vld [vmem:[%s312 + $0xf8] sm:$0xff]
      %v884 = vld [vmem:[%s312 + $0x108] sm:$0xff]
      %v885 = vld [vmem:[%s312 + $0x110] sm:$0xff]
      %v886 = vld [vmem:[%s312 + $0x120] sm:$0xff]
      %v887 = vld [vmem:[%s312 + $0x128] sm:$0xff]
      %v888 = vld [vmem:[%s312 + $0x138] sm:$0xff]
      %v889 = vld [vmem:[%s312 + $0x140] sm:$0xff]
      %v890 = vld [vmem:[%s312 + $0x150] sm:$0xff]
      %v891 = vld [vmem:[%s312 + $0x158] sm:$0xff]
      %v892 = vld [vmem:[%s312 + $0x168] sm:$0xff]
      %v893 = vld [vmem:[%s312 + $0x170] sm:$0xff]
      %v894 = vld [vmem:[%s312 + $0x1] sm:$0xff]
      %v895 = vld [vmem:[%s312 + $0x9] sm:$0xff]
      %v896 = vld [vmem:[%s312 + $0x19] sm:$0xff]
      %v897 = vld [vmem:[%s312 + $0x21] sm:$0xff]
      %v898 = vld [vmem:[%s312 + $0x31] sm:$0xff]
      %v899 = vld [vmem:[%s312 + $0x39] sm:$0xff]
      %v900 = vld [vmem:[%s312 + $0x49] sm:$0xff]
      %v901 = vld [vmem:[%s312 + $0x51] sm:$0xff]
      %v902 = vld [vmem:[%s312 + $0x61] sm:$0xff]
      %v903 = vld [vmem:[%s312 + $0x69] sm:$0xff]
      %v904 = vld [vmem:[%s312 + $0x79] sm:$0xff]
      %v905 = vld [vmem:[%s312 + $0x81] sm:$0xff]
      %v906 = vld [vmem:[%s312 + $0x91] sm:$0xff]
      %v907 = vld [vmem:[%s312 + $0x99] sm:$0xff]
      %v908 = vld [vmem:[%s312 + $0xa9] sm:$0xff]
      %v909 = vld [vmem:[%s312 + $0xb1] sm:$0xff]
      %v910 = vld [vmem:[%s312 + $0xc1] sm:$0xff]
      %v911 = vld [vmem:[%s312 + $0xc9] sm:$0xff]
      %v912 = vld [vmem:[%s312 + $0xd9] sm:$0xff]
      %v913 = vld [vmem:[%s312 + $0xe1] sm:$0xff]
      %v914 = vld [vmem:[%s312 + $0xf1] sm:$0xff]
      %v915 = vld [vmem:[%s312 + $0xf9] sm:$0xff]
      %v916 = vld [vmem:[%s312 + $0x109] sm:$0xff]
      %v917 = vld [vmem:[%s312 + $0x111] sm:$0xff]
      %v918 = vld [vmem:[%s312 + $0x121] sm:$0xff]
      %v919 = vld [vmem:[%s312 + $0x129] sm:$0xff]
      %v920 = vld [vmem:[%s312 + $0x139] sm:$0xff]
      %v921 = vld [vmem:[%s312 + $0x141] sm:$0xff]
      %v922 = vld [vmem:[%s312 + $0x151] sm:$0xff]
      %v923 = vld [vmem:[%s312 + $0x159] sm:$0xff]
      %v924 = vld [vmem:[%s312 + $0x169] sm:$0xff]
      %v925 = vld [vmem:[%s312 + $0x171] sm:$0xff]
      %v926 = vld [vmem:[%s312 + $0x2] sm:$0xff]
      %v927 = vld [vmem:[%s312 + $0xa] sm:$0xff]
      %v928 = vld [vmem:[%s312 + $0x1a] sm:$0xff]
      %v929 = vld [vmem:[%s312 + $0x22] sm:$0xff]
      %v930 = vld [vmem:[%s312 + $0x32] sm:$0xff]
      %v931 = vld [vmem:[%s312 + $0x3a] sm:$0xff]
      %v932 = vld [vmem:[%s312 + $0x4a] sm:$0xff]
      %v933 = vld [vmem:[%s312 + $0x52] sm:$0xff]
      %v934 = vld [vmem:[%s312 + $0x62] sm:$0xff]
      %v935 = vld [vmem:[%s312 + $0x6a] sm:$0xff]
      %v936 = vld [vmem:[%s312 + $0x7a] sm:$0xff]
      %v937 = vld [vmem:[%s312 + $0x82] sm:$0xff]
      %v938 = vld [vmem:[%s312 + $0x92] sm:$0xff]
      %v939 = vld [vmem:[%s312 + $0x9a] sm:$0xff]
      %v940 = vld [vmem:[%s312 + $0xaa] sm:$0xff]
      %v941 = vld [vmem:[%s312 + $0xb2] sm:$0xff]
      %v942 = vld [vmem:[%s312 + $0xc2] sm:$0xff]
      %v943 = vld [vmem:[%s312 + $0xca] sm:$0xff]
      %v944 = vld [vmem:[%s312 + $0xda] sm:$0xff]
      %v945 = vld [vmem:[%s312 + $0xe2] sm:$0xff]
      %v946 = vld [vmem:[%s312 + $0xf2] sm:$0xff]
      %v947 = vld [vmem:[%s312 + $0xfa] sm:$0xff]
      %v948 = vld [vmem:[%s312 + $0x10a] sm:$0xff]
      %v949 = vld [vmem:[%s312 + $0x112] sm:$0xff]
      %v950 = vld [vmem:[%s312 + $0x122] sm:$0xff]
      %v951 = vld [vmem:[%s312 + $0x12a] sm:$0xff]
      %v952 = vld [vmem:[%s312 + $0x13a] sm:$0xff]
      %v953 = vld [vmem:[%s312 + $0x142] sm:$0xff]
      %v954 = vld [vmem:[%s312 + $0x152] sm:$0xff]
      %v955 = vld [vmem:[%s312 + $0x15a] sm:$0xff]
      %v956 = vld [vmem:[%s312 + $0x16a] sm:$0xff]
      %v957 = vld [vmem:[%s312 + $0x172] sm:$0xff]
      %990 = vrot.lane.b32.xlu0 %v894, 8
      %v991 = vpop.permute.xlu0 %990
      %992 = vrot.lane.b32.xlu0 %v895, 8
      %v993 = vpop.permute.xlu0 %992
      %994 = vrot.lane.b32.xlu0 %v896, 8
      %v995 = vpop.permute.xlu0 %994
      %996 = vrot.lane.b32.xlu0 %v897, 8
      %v997 = vpop.permute.xlu0 %996
      %998 = vrot.lane.b32.xlu0 %v898, 8
      %v999 = vpop.permute.xlu0 %998
      %1000 = vrot.lane.b32.xlu0 %v899, 8
      %v1001 = vpop.permute.xlu0 %1000
      %1002 = vrot.lane.b32.xlu0 %v900, 8
      %v1003 = vpop.permute.xlu0 %1002
      %1004 = vrot.lane.b32.xlu0 %v901, 8
      %v1005 = vpop.permute.xlu0 %1004
      %1006 = vrot.lane.b32.xlu0 %v902, 8
      %v1007 = vpop.permute.xlu0 %1006
      %1008 = vrot.lane.b32.xlu0 %v903, 8
      %v1009 = vpop.permute.xlu0 %1008
      %1010 = vrot.lane.b32.xlu0 %v904, 8
      %v1011 = vpop.permute.xlu0 %1010
      %1012 = vrot.lane.b32.xlu0 %v905, 8
      %v1013 = vpop.permute.xlu0 %1012
      %1014 = vrot.lane.b32.xlu0 %v906, 8
      %v1015 = vpop.permute.xlu0 %1014
      %1016 = vrot.lane.b32.xlu0 %v907, 8
      %v1017 = vpop.permute.xlu0 %1016
      %1018 = vrot.lane.b32.xlu0 %v908, 8
      %v1019 = vpop.permute.xlu0 %1018
      %1020 = vrot.lane.b32.xlu0 %v909, 8
      %v1021 = vpop.permute.xlu0 %1020
      %1022 = vrot.lane.b32.xlu0 %v910, 8
      %v1023 = vpop.permute.xlu0 %1022
      %1024 = vrot.lane.b32.xlu0 %v911, 8
      %v1025 = vpop.permute.xlu0 %1024
      %1026 = vrot.lane.b32.xlu0 %v912, 8
      %v1027 = vpop.permute.xlu0 %1026
      %1028 = vrot.lane.b32.xlu0 %v913, 8
      %v1029 = vpop.permute.xlu0 %1028
      %1030 = vrot.lane.b32.xlu0 %v914, 8
      %v1031 = vpop.permute.xlu0 %1030
      %1032 = vrot.lane.b32.xlu0 %v915, 8
      %v1033 = vpop.permute.xlu0 %1032
      %1034 = vrot.lane.b32.xlu0 %v916, 8
      %v1035 = vpop.permute.xlu0 %1034
      %1036 = vrot.lane.b32.xlu0 %v917, 8
      %v1037 = vpop.permute.xlu0 %1036
      %1038 = vrot.lane.b32.xlu0 %v918, 8
      %v1039 = vpop.permute.xlu0 %1038
      %1040 = vrot.lane.b32.xlu0 %v919, 8
      %v1041 = vpop.permute.xlu0 %1040
      %1042 = vrot.lane.b32.xlu0 %v920, 8
      %v1043 = vpop.permute.xlu0 %1042
      %1044 = vrot.lane.b32.xlu0 %v921, 8
      %v1045 = vpop.permute.xlu0 %1044
      %1046 = vrot.lane.b32.xlu0 %v922, 8
      %v1047 = vpop.permute.xlu0 %1046
      %1048 = vrot.lane.b32.xlu0 %v923, 8
      %v1049 = vpop.permute.xlu0 %1048
      %1050 = vrot.lane.b32.xlu0 %v924, 8
      %v1051 = vpop.permute.xlu0 %1050
      %1052 = vrot.lane.b32.xlu0 %v925, 8
      %v1053 = vpop.permute.xlu0 %1052
      %1118 = vrot.lane.b32.xlu0 %v926, 16
      %v1119 = vpop.permute.xlu0 %1118
      %1120 = vrot.lane.b32.xlu0 %v927, 16
      %v1121 = vpop.permute.xlu0 %1120
      %1122 = vrot.lane.b32.xlu0 %v928, 16
      %v1123 = vpop.permute.xlu0 %1122
      %1124 = vrot.lane.b32.xlu0 %v929, 16
      %v1125 = vpop.permute.xlu0 %1124
      %1126 = vrot.lane.b32.xlu0 %v930, 16
      %v1127 = vpop.permute.xlu0 %1126
      %1128 = vrot.lane.b32.xlu0 %v931, 16
      %v1129 = vpop.permute.xlu0 %1128
      %1130 = vrot.lane.b32.xlu0 %v932, 16
      %v1131 = vpop.permute.xlu0 %1130
      %1132 = vrot.lane.b32.xlu0 %v933, 16
      %v1133 = vpop.permute.xlu0 %1132
      %1134 = vrot.lane.b32.xlu0 %v934, 16
      %v1135 = vpop.permute.xlu0 %1134
      %1136 = vrot.lane.b32.xlu0 %v935, 16
      %v1137 = vpop.permute.xlu0 %1136
      %1138 = vrot.lane.b32.xlu0 %v936, 16
      %v1139 = vpop.permute.xlu0 %1138
      %1140 = vrot.lane.b32.xlu0 %v937, 16
      %v1141 = vpop.permute.xlu0 %1140
      %1142 = vrot.lane.b32.xlu0 %v938, 16
      %v1143 = vpop.permute.xlu0 %1142
      %1144 = vrot.lane.b32.xlu0 %v939, 16
      %v1145 = vpop.permute.xlu0 %1144
      %1146 = vrot.lane.b32.xlu0 %v940, 16
      %v1147 = vpop.permute.xlu0 %1146
      %1148 = vrot.lane.b32.xlu0 %v941, 16
      %v1149 = vpop.permute.xlu0 %1148
      %1150 = vrot.lane.b32.xlu0 %v942, 16
      %v1151 = vpop.permute.xlu0 %1150
      %1152 = vrot.lane.b32.xlu0 %v943, 16
      %v1153 = vpop.permute.xlu0 %1152
      %1154 = vrot.lane.b32.xlu0 %v944, 16
      %v1155 = vpop.permute.xlu0 %1154
      %1156 = vrot.lane.b32.xlu0 %v945, 16
      %v1157 = vpop.permute.xlu0 %1156
      %1158 = vrot.lane.b32.xlu0 %v946, 16
      %v1159 = vpop.permute.xlu0 %1158
      %1160 = vrot.lane.b32.xlu0 %v947, 16
      %v1161 = vpop.permute.xlu0 %1160
      %1162 = vrot.lane.b32.xlu0 %v948, 16
      %v1163 = vpop.permute.xlu0 %1162
      %1164 = vrot.lane.b32.xlu0 %v949, 16
      %v1165 = vpop.permute.xlu0 %1164
      %1166 = vrot.lane.b32.xlu0 %v950, 16
      %v1167 = vpop.permute.xlu0 %1166
      %1168 = vrot.lane.b32.xlu0 %v951, 16
      %v1169 = vpop.permute.xlu0 %1168
      %1170 = vrot.lane.b32.xlu0 %v952, 16
      %v1171 = vpop.permute.xlu0 %1170
      %1172 = vrot.lane.b32.xlu0 %v953, 16
      %v1173 = vpop.permute.xlu0 %1172
      %1174 = vrot.lane.b32.xlu0 %v954, 16
      %v1175 = vpop.permute.xlu0 %1174
      %1176 = vrot.lane.b32.xlu0 %v955, 16
      %v1177 = vpop.permute.xlu0 %1176
      %1178 = vrot.lane.b32.xlu0 %v956, 16
      %v1179 = vpop.permute.xlu0 %1178
      %1180 = vrot.lane.b32.xlu0 %v957, 16
      %v1181 = vpop.permute.xlu0 %1180
      %v1214 = vsel %vm313, %v862, %v991
      %v1215 = vsel %vm313, %v863, %v993
      %v1216 = vsel %vm313, %v864, %v995
      %v1217 = vsel %vm313, %v865, %v997
      %v1218 = vsel %vm313, %v866, %v999
      %v1219 = vsel %vm313, %v867, %v1001
      %v1220 = vsel %vm313, %v868, %v1003
      %v1221 = vsel %vm313, %v869, %v1005
      %v1222 = vsel %vm313, %v870, %v1007
      %v1223 = vsel %vm313, %v871, %v1009
      %v1224 = vsel %vm313, %v872, %v1011
      %v1225 = vsel %vm313, %v873, %v1013
      %v1226 = vsel %vm313, %v874, %v1015
      %v1227 = vsel %vm313, %v875, %v1017
      %v1228 = vsel %vm313, %v876, %v1019
      %v1229 = vsel %vm313, %v877, %v1021
      %v1230 = vsel %vm313, %v878, %v1023
      %v1231 = vsel %vm313, %v879, %v1025
      %v1232 = vsel %vm313, %v880, %v1027
      %v1233 = vsel %vm313, %v881, %v1029
      %v1234 = vsel %vm313, %v882, %v1031
      %v1235 = vsel %vm313, %v883, %v1033
      %v1236 = vsel %vm313, %v884, %v1035
      %v1237 = vsel %vm313, %v885, %v1037
      %v1238 = vsel %vm313, %v886, %v1039
      %v1239 = vsel %vm313, %v887, %v1041
      %v1240 = vsel %vm313, %v888, %v1043
      %v1241 = vsel %vm313, %v889, %v1045
      %v1242 = vsel %vm313, %v890, %v1047
      %v1243 = vsel %vm313, %v891, %v1049
      %v1244 = vsel %vm313, %v892, %v1051
      %v1245 = vsel %vm313, %v893, %v1053
      %v1246 = vsel %vm810, %v1214, %v1119
      %v1247 = vsel %vm810, %v1215, %v1121
      %v1248 = vsel %vm810, %v1216, %v1123
      %v1249 = vsel %vm810, %v1217, %v1125
      %v1250 = vsel %vm810, %v1218, %v1127
      %v1251 = vsel %vm810, %v1219, %v1129
      %v1252 = vsel %vm810, %v1220, %v1131
      %v1253 = vsel %vm810, %v1221, %v1133
      %v1254 = vsel %vm810, %v1222, %v1135
      %v1255 = vsel %vm810, %v1223, %v1137
      %v1256 = vsel %vm810, %v1224, %v1139
      %v1257 = vsel %vm810, %v1225, %v1141
      %v1258 = vsel %vm810, %v1226, %v1143
      %v1259 = vsel %vm810, %v1227, %v1145
      %v1260 = vsel %vm810, %v1228, %v1147
      %v1261 = vsel %vm810, %v1229, %v1149
      %v1262 = vsel %vm810, %v1230, %v1151
      %v1263 = vsel %vm810, %v1231, %v1153
      %v1264 = vsel %vm810, %v1232, %v1155
      %v1265 = vsel %vm810, %v1233, %v1157
      %v1266 = vsel %vm810, %v1234, %v1159
      %v1267 = vsel %vm810, %v1235, %v1161
      %v1268 = vsel %vm810, %v1236, %v1163
      %v1269 = vsel %vm810, %v1237, %v1165
      %v1270 = vsel %vm810, %v1238, %v1167
      %v1271 = vsel %vm810, %v1239, %v1169
      %v1272 = vsel %vm810, %v1240, %v1171
      %v1273 = vsel %vm810, %v1241, %v1173
      %v1274 = vsel %vm810, %v1242, %v1175
      %v1275 = vsel %vm810, %v1243, %v1177
      %v1276 = vsel %vm810, %v1244, %v1179
      %v1277 = vsel %vm810, %v1245, %v1181
      %v1278 = vpack.c.bf16 %v1247, %v1246
      %v1279 = vpack.c.bf16 %v1249, %v1248
      %v1280 = vpack.c.bf16 %v1251, %v1250
      %v1281 = vpack.c.bf16 %v1253, %v1252
      %v1282 = vpack.c.bf16 %v1255, %v1254
      %v1283 = vpack.c.bf16 %v1257, %v1256
      %v1284 = vpack.c.bf16 %v1259, %v1258
      %v1285 = vpack.c.bf16 %v1261, %v1260
      %v1286 = vpack.c.bf16 %v1263, %v1262
      %v1287 = vpack.c.bf16 %v1265, %v1264
      %v1288 = vpack.c.bf16 %v1267, %v1266
      %v1289 = vpack.c.bf16 %v1269, %v1268
      %v1290 = vpack.c.bf16 %v1271, %v1270
      %v1291 = vpack.c.bf16 %v1273, %v1272
      %v1292 = vpack.c.bf16 %v1275, %v1274
      %v1293 = vpack.c.bf16 %v1277, %v1276
      %s1294 = scalar_lea.vmem %s1, 12
      %v1295 = vld [vmem:[%s1294] sm:$0xf]
      %v1296 = vld [vmem:[%s1294 + $0x4] sm:$0xf]
      %v1297 = vld [vmem:[%s1294 + $0x8] sm:$0xf]
      %v1301 = vunpack.c.l.b16 %v1295
      %v1302 = vunpack.c.l.b16 %v1296
      %v1303 = vunpack.c.l.b16 %v1297
      %v1304 = vpack.c.b16 %v1302, %v1301
      %v1305 = vpack.c.b16 %v1303, %v1303
      %vm1307 = vcmask 195584
      %v1309 = vsel %vm1307, %v1278, 0
      %v1312 = vsel %vm1307, %v1279, 0
      %v1315 = vsel %vm1307, %v1280, 0
      %v1318 = vsel %vm1307, %v1281, 0
      %v1321 = vsel %vm1307, %v1282, 0
      %v1324 = vsel %vm1307, %v1283, 0
      %v1327 = vsel %vm1307, %v1284, 0
      %v1330 = vsel %vm1307, %v1285, 0
      %v1333 = vsel %vm1307, %v1286, 0
      %v1336 = vsel %vm1307, %v1287, 0
      %v1339 = vsel %vm1307, %v1288, 0
      %v1342 = vsel %vm1307, %v1289, 0
      %v1345 = vsel %vm1307, %v1290, 0
      %v1348 = vsel %vm1307, %v1291, 0
      %v1351 = vsel %vm1307, %v1292, 0
      %v1354 = vsel %vm1307, %v1293, 0
      %vm1356 = vcmask 1043456
      %v1358 = vsel %vm1356, %v1305, 0
      %1360 = vmatpush.bf16.msra.mxu0 0
      %1361 = vmatpush.bf16.msra.mxu0 0
      %1362 = vmatpush.bf16.msra.mxu0 0
      %1363 = vmatpush.bf16.msra.mxu0 0
      %1364 = vmatpush.bf16.msra.mxu0 0
      %1365 = vmatpush.bf16.msra.mxu0 0
      %1366 = vmatpush.bf16.msra.mxu0 %v1358
      %1367 = vmatpush.bf16.msra.mxu0 %v1304
      %1368 = vmatmul.bf16.gmra.mxu0 %v1309
      %v1369 = vpop.f32.mrf.mxu0
      %v1370 = vadd.f32 0.0, %v1369
      %v1371 = vpop.f32.mrf.mxu0
      %v1372 = vadd.f32 0.0, %v1371
      %1373 = vmatmul.bf16.gmra.mxu0 %v1312
      %v1374 = vpop.f32.mrf.mxu0
      %v1375 = vadd.f32 0.0, %v1374
      %v1376 = vpop.f32.mrf.mxu0
      %v1377 = vadd.f32 0.0, %v1376
      %1378 = vmatmul.bf16.gmra.mxu0 %v1315
      %v1379 = vpop.f32.mrf.mxu0
      %v1380 = vadd.f32 0.0, %v1379
      %v1381 = vpop.f32.mrf.mxu0
      %v1382 = vadd.f32 0.0, %v1381
      %1383 = vmatmul.bf16.gmra.mxu0 %v1318
      %v1384 = vpop.f32.mrf.mxu0
      %v1385 = vadd.f32 0.0, %v1384
      %v1386 = vpop.f32.mrf.mxu0
      %v1387 = vadd.f32 0.0, %v1386
      %1388 = vmatmul.bf16.gmra.mxu0 %v1321
      %v1389 = vpop.f32.mrf.mxu0
      %v1390 = vadd.f32 0.0, %v1389
      %v1391 = vpop.f32.mrf.mxu0
      %v1392 = vadd.f32 0.0, %v1391
      %1393 = vmatmul.bf16.gmra.mxu0 %v1324
      %v1394 = vpop.f32.mrf.mxu0
      %v1395 = vadd.f32 0.0, %v1394
      %v1396 = vpop.f32.mrf.mxu0
      %v1397 = vadd.f32 0.0, %v1396
      %1398 = vmatmul.bf16.gmra.mxu0 %v1327
      %v1399 = vpop.f32.mrf.mxu0
      %v1400 = vadd.f32 0.0, %v1399
      %v1401 = vpop.f32.mrf.mxu0
      %v1402 = vadd.f32 0.0, %v1401
      %1403 = vmatmul.bf16.gmra.mxu0 %v1330
      %v1404 = vpop.f32.mrf.mxu0
      %v1405 = vadd.f32 0.0, %v1404
      %v1406 = vpop.f32.mrf.mxu0
      %v1407 = vadd.f32 0.0, %v1406
      %1408 = vmatmul.bf16.gmra.mxu0 %v1333
      %v1409 = vpop.f32.mrf.mxu0
      %v1410 = vadd.f32 0.0, %v1409
      %v1411 = vpop.f32.mrf.mxu0
      %v1412 = vadd.f32 0.0, %v1411
      %1413 = vmatmul.bf16.gmra.mxu0 %v1336
      %v1414 = vpop.f32.mrf.mxu0
      %v1415 = vadd.f32 0.0, %v1414
      %v1416 = vpop.f32.mrf.mxu0
      %v1417 = vadd.f32 0.0, %v1416
      %1418 = vmatmul.bf16.gmra.mxu0 %v1339
      %v1419 = vpop.f32.mrf.mxu0
      %v1420 = vadd.f32 0.0, %v1419
      %v1421 = vpop.f32.mrf.mxu0
      %v1422 = vadd.f32 0.0, %v1421
      %1423 = vmatmul.bf16.gmra.mxu0 %v1342
      %v1424 = vpop.f32.mrf.mxu0
      %v1425 = vadd.f32 0.0, %v1424
      %v1426 = vpop.f32.mrf.mxu0
      %v1427 = vadd.f32 0.0, %v1426
      %1428 = vmatmul.bf16.gmra.mxu0 %v1345
      %v1429 = vpop.f32.mrf.mxu0
      %v1430 = vadd.f32 0.0, %v1429
      %v1431 = vpop.f32.mrf.mxu0
      %v1432 = vadd.f32 0.0, %v1431
      %1433 = vmatmul.bf16.gmra.mxu0 %v1348
      %v1434 = vpop.f32.mrf.mxu0
      %v1435 = vadd.f32 0.0, %v1434
      %v1436 = vpop.f32.mrf.mxu0
      %v1437 = vadd.f32 0.0, %v1436
      %1438 = vmatmul.bf16.gmra.mxu0 %v1351
      %v1439 = vpop.f32.mrf.mxu0
      %v1440 = vadd.f32 0.0, %v1439
      %v1441 = vpop.f32.mrf.mxu0
      %v1442 = vadd.f32 0.0, %v1441
      %1443 = vmatmul.bf16.gmra.mxu0 %v1354
      %v1444 = vpop.f32.mrf.mxu0
      %v1445 = vadd.f32 0.0, %v1444
      %v1446 = vpop.f32.mrf.mxu0
      %v1447 = vadd.f32 0.0, %v1446
      %1448 = vdwg.mxu0
      %v1452 = vunpack.c.l.b16 %v859
      %v1453 = vunpack.c.l.b16 %v860
      %v1454 = vunpack.c.l.b16 %v861
      %v1455 = vpack.c.b16 %v1453, %v1452
      %v1456 = vpack.c.b16 %v1454, %v1454
      %v1459 = vsel %vm1307, %v843, 0
      %v1462 = vsel %vm1307, %v844, 0
      %v1465 = vsel %vm1307, %v845, 0
      %v1468 = vsel %vm1307, %v846, 0
      %v1471 = vsel %vm1307, %v847, 0
      %v1474 = vsel %vm1307, %v848, 0
      %v1477 = vsel %vm1307, %v849, 0
      %v1480 = vsel %vm1307, %v850, 0
      %v1483 = vsel %vm1307, %v851, 0
      %v1486 = vsel %vm1307, %v852, 0
      %v1489 = vsel %vm1307, %v853, 0
      %v1492 = vsel %vm1307, %v854, 0
      %v1495 = vsel %vm1307, %v855, 0
      %v1498 = vsel %vm1307, %v856, 0
      %v1501 = vsel %vm1307, %v857, 0
      %v1504 = vsel %vm1307, %v858, 0
      %v1507 = vsel %vm1356, %v1456, 0
      %1509 = vmatpush.bf16.msra.mxu0 0
      %1510 = vmatpush.bf16.msra.mxu0 0
      %1511 = vmatpush.bf16.msra.mxu0 0
      %1512 = vmatpush.bf16.msra.mxu0 0
      %1513 = vmatpush.bf16.msra.mxu0 0
      %1514 = vmatpush.bf16.msra.mxu0 0
      %1515 = vmatpush.bf16.msra.mxu0 %v1507
      %1516 = vmatpush.bf16.msra.mxu0 %v1455
      %1517 = vmatmul.bf16.gmra.mxu0 %v1459
      %v1518 = vpop.f32.mrf.mxu0
      %v1519 = vadd.f32 %v1370, %v1518
      %v1520 = vpop.f32.mrf.mxu0
      %v1521 = vadd.f32 %v1372, %v1520
      %1522 = vmatmul.bf16.gmra.mxu0 %v1462
      %v1523 = vpop.f32.mrf.mxu0
      %v1524 = vadd.f32 %v1375, %v1523
      %v1525 = vpop.f32.mrf.mxu0
      %v1526 = vadd.f32 %v1377, %v1525
      %1527 = vmatmul.bf16.gmra.mxu0 %v1465
      %v1528 = vpop.f32.mrf.mxu0
      %v1529 = vadd.f32 %v1380, %v1528
      %v1530 = vpop.f32.mrf.mxu0
      %v1531 = vadd.f32 %v1382, %v1530
      %1532 = vmatmul.bf16.gmra.mxu0 %v1468
      %v1533 = vpop.f32.mrf.mxu0
      %v1534 = vadd.f32 %v1385, %v1533
      %v1535 = vpop.f32.mrf.mxu0
      %v1536 = vadd.f32 %v1387, %v1535
      %1537 = vmatmul.bf16.gmra.mxu0 %v1471
      %v1538 = vpop.f32.mrf.mxu0
      %v1539 = vadd.f32 %v1390, %v1538
      %v1540 = vpop.f32.mrf.mxu0
      %v1541 = vadd.f32 %v1392, %v1540
      %1542 = vmatmul.bf16.gmra.mxu0 %v1474
      %v1543 = vpop.f32.mrf.mxu0
      %v1544 = vadd.f32 %v1395, %v1543
      %v1545 = vpop.f32.mrf.mxu0
      %v1546 = vadd.f32 %v1397, %v1545
      %1547 = vmatmul.bf16.gmra.mxu0 %v1477
      %v1548 = vpop.f32.mrf.mxu0
      %v1549 = vadd.f32 %v1400, %v1548
      %v1550 = vpop.f32.mrf.mxu0
      %v1551 = vadd.f32 %v1402, %v1550
      %1552 = vmatmul.bf16.gmra.mxu0 %v1480
      %v1553 = vpop.f32.mrf.mxu0
      %v1554 = vadd.f32 %v1405, %v1553
      %v1555 = vpop.f32.mrf.mxu0
      %v1556 = vadd.f32 %v1407, %v1555
      %1557 = vmatmul.bf16.gmra.mxu0 %v1483
      %v1558 = vpop.f32.mrf.mxu0
      %v1559 = vadd.f32 %v1410, %v1558
      %v1560 = vpop.f32.mrf.mxu0
      %v1561 = vadd.f32 %v1412, %v1560
      %1562 = vmatmul.bf16.gmra.mxu0 %v1486
      %v1563 = vpop.f32.mrf.mxu0
      %v1564 = vadd.f32 %v1415, %v1563
      %v1565 = vpop.f32.mrf.mxu0
      %v1566 = vadd.f32 %v1417, %v1565
      %1567 = vmatmul.bf16.gmra.mxu0 %v1489
      %v1568 = vpop.f32.mrf.mxu0
      %v1569 = vadd.f32 %v1420, %v1568
      %v1570 = vpop.f32.mrf.mxu0
      %v1571 = vadd.f32 %v1422, %v1570
      %1572 = vmatmul.bf16.gmra.mxu0 %v1492
      %v1573 = vpop.f32.mrf.mxu0
      %v1574 = vadd.f32 %v1425, %v1573
      %v1575 = vpop.f32.mrf.mxu0
      %v1576 = vadd.f32 %v1427, %v1575
      %1577 = vmatmul.bf16.gmra.mxu0 %v1495
      %v1578 = vpop.f32.mrf.mxu0
      %v1579 = vadd.f32 %v1430, %v1578
      %v1580 = vpop.f32.mrf.mxu0
      %v1581 = vadd.f32 %v1432, %v1580
      %1582 = vmatmul.bf16.gmra.mxu0 %v1498
      %v1583 = vpop.f32.mrf.mxu0
      %v1584 = vadd.f32 %v1435, %v1583
      %v1585 = vpop.f32.mrf.mxu0
      %v1586 = vadd.f32 %v1437, %v1585
      %1587 = vmatmul.bf16.gmra.mxu0 %v1501
      %v1588 = vpop.f32.mrf.mxu0
      %v1589 = vadd.f32 %v1440, %v1588
      %v1590 = vpop.f32.mrf.mxu0
      %v1591 = vadd.f32 %v1442, %v1590
      %1592 = vmatmul.bf16.gmra.mxu0 %v1504
      %v1593 = vpop.f32.mrf.mxu0
      %v1594 = vadd.f32 %v1445, %v1593
      %v1595 = vpop.f32.mrf.mxu0
      %v1596 = vadd.f32 %v1447, %v1595
      %1597 = vdwg.mxu0
      %s1598 = scalar_lea.vmem [#allocation2], 48
      %v1599 = vld [vmem:[%s1598] sm:$0xff]
      %v1600 = vld [vmem:[%s1598 + $0x8] sm:$0xff]
      %v1601 = vld [vmem:[%s1598 + $0x18] sm:$0xff]
      %v1602 = vld [vmem:[%s1598 + $0x20] sm:$0xff]
      %v1603 = vld [vmem:[%s1598 + $0x30] sm:$0xff]
      %v1604 = vld [vmem:[%s1598 + $0x38] sm:$0xff]
      %v1605 = vld [vmem:[%s1598 + $0x48] sm:$0xff]
      %v1606 = vld [vmem:[%s1598 + $0x50] sm:$0xff]
      %v1607 = vld [vmem:[%s1598 + $0x60] sm:$0xff]
      %v1608 = vld [vmem:[%s1598 + $0x68] sm:$0xff]
      %v1609 = vld [vmem:[%s1598 + $0x78] sm:$0xff]
      %v1610 = vld [vmem:[%s1598 + $0x80] sm:$0xff]
      %v1611 = vld [vmem:[%s1598 + $0x90] sm:$0xff]
      %v1612 = vld [vmem:[%s1598 + $0x98] sm:$0xff]
      %v1613 = vld [vmem:[%s1598 + $0xa8] sm:$0xff]
      %v1614 = vld [vmem:[%s1598 + $0xb0] sm:$0xff]
      %v1615 = vld [vmem:[%s1598 + $0xc0] sm:$0xff]
      %v1616 = vld [vmem:[%s1598 + $0xc8] sm:$0xff]
      %v1617 = vld [vmem:[%s1598 + $0xd8] sm:$0xff]
      %v1618 = vld [vmem:[%s1598 + $0xe0] sm:$0xff]
      %v1619 = vld [vmem:[%s1598 + $0xf0] sm:$0xff]
      %v1620 = vld [vmem:[%s1598 + $0xf8] sm:$0xff]
      %v1621 = vld [vmem:[%s1598 + $0x108] sm:$0xff]
      %v1622 = vld [vmem:[%s1598 + $0x110] sm:$0xff]
      %v1623 = vld [vmem:[%s1598 + $0x120] sm:$0xff]
      %v1624 = vld [vmem:[%s1598 + $0x128] sm:$0xff]
      %v1625 = vld [vmem:[%s1598 + $0x138] sm:$0xff]
      %v1626 = vld [vmem:[%s1598 + $0x140] sm:$0xff]
      %v1627 = vld [vmem:[%s1598 + $0x150] sm:$0xff]
      %v1628 = vld [vmem:[%s1598 + $0x158] sm:$0xff]
      %v1629 = vld [vmem:[%s1598 + $0x168] sm:$0xff]
      %v1630 = vld [vmem:[%s1598 + $0x170] sm:$0xff]
      %v1631 = vld [vmem:[%s1598 + $0x1] sm:$0xff]
      %v1632 = vld [vmem:[%s1598 + $0x9] sm:$0xff]
      %v1633 = vld [vmem:[%s1598 + $0x19] sm:$0xff]
      %v1634 = vld [vmem:[%s1598 + $0x21] sm:$0xff]
      %v1635 = vld [vmem:[%s1598 + $0x31] sm:$0xff]
      %v1636 = vld [vmem:[%s1598 + $0x39] sm:$0xff]
      %v1637 = vld [vmem:[%s1598 + $0x49] sm:$0xff]
      %v1638 = vld [vmem:[%s1598 + $0x51] sm:$0xff]
      %v1639 = vld [vmem:[%s1598 + $0x61] sm:$0xff]
      %v1640 = vld [vmem:[%s1598 + $0x69] sm:$0xff]
      %v1641 = vld [vmem:[%s1598 + $0x79] sm:$0xff]
      %v1642 = vld [vmem:[%s1598 + $0x81] sm:$0xff]
      %v1643 = vld [vmem:[%s1598 + $0x91] sm:$0xff]
      %v1644 = vld [vmem:[%s1598 + $0x99] sm:$0xff]
      %v1645 = vld [vmem:[%s1598 + $0xa9] sm:$0xff]
      %v1646 = vld [vmem:[%s1598 + $0xb1] sm:$0xff]
      %v1647 = vld [vmem:[%s1598 + $0xc1] sm:$0xff]
      %v1648 = vld [vmem:[%s1598 + $0xc9] sm:$0xff]
      %v1649 = vld [vmem:[%s1598 + $0xd9] sm:$0xff]
      %v1650 = vld [vmem:[%s1598 + $0xe1] sm:$0xff]
      %v1651 = vld [vmem:[%s1598 + $0xf1] sm:$0xff]
      %v1652 = vld [vmem:[%s1598 + $0xf9] sm:$0xff]
      %v1653 = vld [vmem:[%s1598 + $0x109] sm:$0xff]
      %v1654 = vld [vmem:[%s1598 + $0x111] sm:$0xff]
      %v1655 = vld [vmem:[%s1598 + $0x121] sm:$0xff]
      %v1656 = vld [vmem:[%s1598 + $0x129] sm:$0xff]
      %v1657 = vld [vmem:[%s1598 + $0x139] sm:$0xff]
      %v1658 = vld [vmem:[%s1598 + $0x141] sm:$0xff]
      %v1659 = vld [vmem:[%s1598 + $0x151] sm:$0xff]
      %v1660 = vld [vmem:[%s1598 + $0x159] sm:$0xff]
      %v1661 = vld [vmem:[%s1598 + $0x169] sm:$0xff]
      %v1662 = vld [vmem:[%s1598 + $0x171] sm:$0xff]
      %v1663 = vld [vmem:[%s1598 + $0x2] sm:$0xff]
      %v1664 = vld [vmem:[%s1598 + $0xa] sm:$0xff]
      %v1665 = vld [vmem:[%s1598 + $0x1a] sm:$0xff]
      %v1666 = vld [vmem:[%s1598 + $0x22] sm:$0xff]
      %v1667 = vld [vmem:[%s1598 + $0x32] sm:$0xff]
      %v1668 = vld [vmem:[%s1598 + $0x3a] sm:$0xff]
      %v1669 = vld [vmem:[%s1598 + $0x4a] sm:$0xff]
      %v1670 = vld [vmem:[%s1598 + $0x52] sm:$0xff]
      %v1671 = vld [vmem:[%s1598 + $0x62] sm:$0xff]
      %v1672 = vld [vmem:[%s1598 + $0x6a] sm:$0xff]
      %v1673 = vld [vmem:[%s1598 + $0x7a] sm:$0xff]
      %v1674 = vld [vmem:[%s1598 + $0x82] sm:$0xff]
      %v1675 = vld [vmem:[%s1598 + $0x92] sm:$0xff]
      %v1676 = vld [vmem:[%s1598 + $0x9a] sm:$0xff]
      %v1677 = vld [vmem:[%s1598 + $0xaa] sm:$0xff]
      %v1678 = vld [vmem:[%s1598 + $0xb2] sm:$0xff]
      %v1679 = vld [vmem:[%s1598 + $0xc2] sm:$0xff]
      %v1680 = vld [vmem:[%s1598 + $0xca] sm:$0xff]
      %v1681 = vld [vmem:[%s1598 + $0xda] sm:$0xff]
      %v1682 = vld [vmem:[%s1598 + $0xe2] sm:$0xff]
      %v1683 = vld [vmem:[%s1598 + $0xf2] sm:$0xff]
      %v1684 = vld [vmem:[%s1598 + $0xfa] sm:$0xff]
      %v1685 = vld [vmem:[%s1598 + $0x10a] sm:$0xff]
      %v1686 = vld [vmem:[%s1598 + $0x112] sm:$0xff]
      %v1687 = vld [vmem:[%s1598 + $0x122] sm:$0xff]
      %v1688 = vld [vmem:[%s1598 + $0x12a] sm:$0xff]
      %v1689 = vld [vmem:[%s1598 + $0x13a] sm:$0xff]
      %v1690 = vld [vmem:[%s1598 + $0x142] sm:$0xff]
      %v1691 = vld [vmem:[%s1598 + $0x152] sm:$0xff]
      %v1692 = vld [vmem:[%s1598 + $0x15a] sm:$0xff]
      %v1693 = vld [vmem:[%s1598 + $0x16a] sm:$0xff]
      %v1694 = vld [vmem:[%s1598 + $0x172] sm:$0xff]
      %1727 = vrot.lane.b32.xlu0 %v1631, 8
      %v1728 = vpop.permute.xlu0 %1727
      %1729 = vrot.lane.b32.xlu0 %v1632, 8
      %v1730 = vpop.permute.xlu0 %1729
      %1731 = vrot.lane.b32.xlu0 %v1633, 8
      %v1732 = vpop.permute.xlu0 %1731
      %1733 = vrot.lane.b32.xlu0 %v1634, 8
      %v1734 = vpop.permute.xlu0 %1733
      %1735 = vrot.lane.b32.xlu0 %v1635, 8
      %v1736 = vpop.permute.xlu0 %1735
      %1737 = vrot.lane.b32.xlu0 %v1636, 8
      %v1738 = vpop.permute.xlu0 %1737
      %1739 = vrot.lane.b32.xlu0 %v1637, 8
      %v1740 = vpop.permute.xlu0 %1739
      %1741 = vrot.lane.b32.xlu0 %v1638, 8
      %v1742 = vpop.permute.xlu0 %1741
      %1743 = vrot.lane.b32.xlu0 %v1639, 8
      %v1744 = vpop.permute.xlu0 %1743
      %1745 = vrot.lane.b32.xlu0 %v1640, 8
      %v1746 = vpop.permute.xlu0 %1745
      %1747 = vrot.lane.b32.xlu0 %v1641, 8
      %v1748 = vpop.permute.xlu0 %1747
      %1749 = vrot.lane.b32.xlu0 %v1642, 8
      %v1750 = vpop.permute.xlu0 %1749
      %1751 = vrot.lane.b32.xlu0 %v1643, 8
      %v1752 = vpop.permute.xlu0 %1751
      %1753 = vrot.lane.b32.xlu0 %v1644, 8
      %v1754 = vpop.permute.xlu0 %1753
      %1755 = vrot.lane.b32.xlu0 %v1645, 8
      %v1756 = vpop.permute.xlu0 %1755
      %1757 = vrot.lane.b32.xlu0 %v1646, 8
      %v1758 = vpop.permute.xlu0 %1757
      %1759 = vrot.lane.b32.xlu0 %v1647, 8
      %v1760 = vpop.permute.xlu0 %1759
      %1761 = vrot.lane.b32.xlu0 %v1648, 8
      %v1762 = vpop.permute.xlu0 %1761
      %1763 = vrot.lane.b32.xlu0 %v1649, 8
      %v1764 = vpop.permute.xlu0 %1763
      %1765 = vrot.lane.b32.xlu0 %v1650, 8
      %v1766 = vpop.permute.xlu0 %1765
      %1767 = vrot.lane.b32.xlu0 %v1651, 8
      %v1768 = vpop.permute.xlu0 %1767
      %1769 = vrot.lane.b32.xlu0 %v1652, 8
      %v1770 = vpop.permute.xlu0 %1769
      %1771 = vrot.lane.b32.xlu0 %v1653, 8
      %v1772 = vpop.permute.xlu0 %1771
      %1773 = vrot.lane.b32.xlu0 %v1654, 8
      %v1774 = vpop.permute.xlu0 %1773
      %1775 = vrot.lane.b32.xlu0 %v1655, 8
      %v1776 = vpop.permute.xlu0 %1775
      %1777 = vrot.lane.b32.xlu0 %v1656, 8
      %v1778 = vpop.permute.xlu0 %1777
      %1779 = vrot.lane.b32.xlu0 %v1657, 8
      %v1780 = vpop.permute.xlu0 %1779
      %1781 = vrot.lane.b32.xlu0 %v1658, 8
      %v1782 = vpop.permute.xlu0 %1781
      %1783 = vrot.lane.b32.xlu0 %v1659, 8
      %v1784 = vpop.permute.xlu0 %1783
      %1785 = vrot.lane.b32.xlu0 %v1660, 8
      %v1786 = vpop.permute.xlu0 %1785
      %1787 = vrot.lane.b32.xlu0 %v1661, 8
      %v1788 = vpop.permute.xlu0 %1787
      %1789 = vrot.lane.b32.xlu0 %v1662, 8
      %v1790 = vpop.permute.xlu0 %1789
      %1855 = vrot.lane.b32.xlu0 %v1663, 16
      %v1856 = vpop.permute.xlu0 %1855
      %1857 = vrot.lane.b32.xlu0 %v1664, 16
      %v1858 = vpop.permute.xlu0 %1857
      %1859 = vrot.lane.b32.xlu0 %v1665, 16
      %v1860 = vpop.permute.xlu0 %1859
      %1861 = vrot.lane.b32.xlu0 %v1666, 16
      %v1862 = vpop.permute.xlu0 %1861
      %1863 = vrot.lane.b32.xlu0 %v1667, 16
      %v1864 = vpop.permute.xlu0 %1863
      %1865 = vrot.lane.b32.xlu0 %v1668, 16
      %v1866 = vpop.permute.xlu0 %1865
      %1867 = vrot.lane.b32.xlu0 %v1669, 16
      %v1868 = vpop.permute.xlu0 %1867
      %1869 = vrot.lane.b32.xlu0 %v1670, 16
      %v1870 = vpop.permute.xlu0 %1869
      %1871 = vrot.lane.b32.xlu0 %v1671, 16
      %v1872 = vpop.permute.xlu0 %1871
      %1873 = vrot.lane.b32.xlu0 %v1672, 16
      %v1874 = vpop.permute.xlu0 %1873
      %1875 = vrot.lane.b32.xlu0 %v1673, 16
      %v1876 = vpop.permute.xlu0 %1875
      %1877 = vrot.lane.b32.xlu0 %v1674, 16
      %v1878 = vpop.permute.xlu0 %1877
      %1879 = vrot.lane.b32.xlu0 %v1675, 16
      %v1880 = vpop.permute.xlu0 %1879
      %1881 = vrot.lane.b32.xlu0 %v1676, 16
      %v1882 = vpop.permute.xlu0 %1881
      %1883 = vrot.lane.b32.xlu0 %v1677, 16
      %v1884 = vpop.permute.xlu0 %1883
      %1885 = vrot.lane.b32.xlu0 %v1678, 16
      %v1886 = vpop.permute.xlu0 %1885
      %1887 = vrot.lane.b32.xlu0 %v1679, 16
      %v1888 = vpop.permute.xlu0 %1887
      %1889 = vrot.lane.b32.xlu0 %v1680, 16
      %v1890 = vpop.permute.xlu0 %1889
      %1891 = vrot.lane.b32.xlu0 %v1681, 16
      %v1892 = vpop.permute.xlu0 %1891
      %1893 = vrot.lane.b32.xlu0 %v1682, 16
      %v1894 = vpop.permute.xlu0 %1893
      %1895 = vrot.lane.b32.xlu0 %v1683, 16
      %v1896 = vpop.permute.xlu0 %1895
      %1897 = vrot.lane.b32.xlu0 %v1684, 16
      %v1898 = vpop.permute.xlu0 %1897
      %1899 = vrot.lane.b32.xlu0 %v1685, 16
      %v1900 = vpop.permute.xlu0 %1899
      %1901 = vrot.lane.b32.xlu0 %v1686, 16
      %v1902 = vpop.permute.xlu0 %1901
      %1903 = vrot.lane.b32.xlu0 %v1687, 16
      %v1904 = vpop.permute.xlu0 %1903
      %1905 = vrot.lane.b32.xlu0 %v1688, 16
      %v1906 = vpop.permute.xlu0 %1905
      %1907 = vrot.lane.b32.xlu0 %v1689, 16
      %v1908 = vpop.permute.xlu0 %1907
      %1909 = vrot.lane.b32.xlu0 %v1690, 16
      %v1910 = vpop.permute.xlu0 %1909
      %1911 = vrot.lane.b32.xlu0 %v1691, 16
      %v1912 = vpop.permute.xlu0 %1911
      %1913 = vrot.lane.b32.xlu0 %v1692, 16
      %v1914 = vpop.permute.xlu0 %1913
      %1915 = vrot.lane.b32.xlu0 %v1693, 16
      %v1916 = vpop.permute.xlu0 %1915
      %1917 = vrot.lane.b32.xlu0 %v1694, 16
      %v1918 = vpop.permute.xlu0 %1917
      %v1951 = vsel %vm313, %v1599, %v1728
      %v1952 = vsel %vm313, %v1600, %v1730
      %v1953 = vsel %vm313, %v1601, %v1732
      %v1954 = vsel %vm313, %v1602, %v1734
      %v1955 = vsel %vm313, %v1603, %v1736
      %v1956 = vsel %vm313, %v1604, %v1738
      %v1957 = vsel %vm313, %v1605, %v1740
      %v1958 = vsel %vm313, %v1606, %v1742
      %v1959 = vsel %vm313, %v1607, %v1744
      %v1960 = vsel %vm313, %v1608, %v1746
      %v1961 = vsel %vm313, %v1609, %v1748
      %v1962 = vsel %vm313, %v1610, %v1750
      %v1963 = vsel %vm313, %v1611, %v1752
      %v1964 = vsel %vm313, %v1612, %v1754
      %v1965 = vsel %vm313, %v1613, %v1756
      %v1966 = vsel %vm313, %v1614, %v1758
      %v1967 = vsel %vm313, %v1615, %v1760
      %v1968 = vsel %vm313, %v1616, %v1762
      %v1969 = vsel %vm313, %v1617, %v1764
      %v1970 = vsel %vm313, %v1618, %v1766
      %v1971 = vsel %vm313, %v1619, %v1768
      %v1972 = vsel %vm313, %v1620, %v1770
      %v1973 = vsel %vm313, %v1621, %v1772
      %v1974 = vsel %vm313, %v1622, %v1774
      %v1975 = vsel %vm313, %v1623, %v1776
      %v1976 = vsel %vm313, %v1624, %v1778
      %v1977 = vsel %vm313, %v1625, %v1780
      %v1978 = vsel %vm313, %v1626, %v1782
      %v1979 = vsel %vm313, %v1627, %v1784
      %v1980 = vsel %vm313, %v1628, %v1786
      %v1981 = vsel %vm313, %v1629, %v1788
      %v1982 = vsel %vm313, %v1630, %v1790
      %v1983 = vsel %vm810, %v1951, %v1856
      %v1984 = vsel %vm810, %v1952, %v1858
      %v1985 = vsel %vm810, %v1953, %v1860
      %v1986 = vsel %vm810, %v1954, %v1862
      %v1987 = vsel %vm810, %v1955, %v1864
      %v1988 = vsel %vm810, %v1956, %v1866
      %v1989 = vsel %vm810, %v1957, %v1868
      %v1990 = vsel %vm810, %v1958, %v1870
      %v1991 = vsel %vm810, %v1959, %v1872
      %v1992 = vsel %vm810, %v1960, %v1874
      %v1993 = vsel %vm810, %v1961, %v1876
      %v1994 = vsel %vm810, %v1962, %v1878
      %v1995 = vsel %vm810, %v1963, %v1880
      %v1996 = vsel %vm810, %v1964, %v1882
      %v1997 = vsel %vm810, %v1965, %v1884
      %v1998 = vsel %vm810, %v1966, %v1886
      %v1999 = vsel %vm810, %v1967, %v1888
      %v2000 = vsel %vm810, %v1968, %v1890
      %v2001 = vsel %vm810, %v1969, %v1892
      %v2002 = vsel %vm810, %v1970, %v1894
      %v2003 = vsel %vm810, %v1971, %v1896
      %v2004 = vsel %vm810, %v1972, %v1898
      %v2005 = vsel %vm810, %v1973, %v1900
      %v2006 = vsel %vm810, %v1974, %v1902
      %v2007 = vsel %vm810, %v1975, %v1904
      %v2008 = vsel %vm810, %v1976, %v1906
      %v2009 = vsel %vm810, %v1977, %v1908
      %v2010 = vsel %vm810, %v1978, %v1910
      %v2011 = vsel %vm810, %v1979, %v1912
      %v2012 = vsel %vm810, %v1980, %v1914
      %v2013 = vsel %vm810, %v1981, %v1916
      %v2014 = vsel %vm810, %v1982, %v1918
      %v2015 = vpack.c.bf16 %v1984, %v1983
      %v2016 = vpack.c.bf16 %v1986, %v1985
      %v2017 = vpack.c.bf16 %v1988, %v1987
      %v2018 = vpack.c.bf16 %v1990, %v1989
      %v2019 = vpack.c.bf16 %v1992, %v1991
      %v2020 = vpack.c.bf16 %v1994, %v1993
      %v2021 = vpack.c.bf16 %v1996, %v1995
      %v2022 = vpack.c.bf16 %v1998, %v1997
      %v2023 = vpack.c.bf16 %v2000, %v1999
      %v2024 = vpack.c.bf16 %v2002, %v2001
      %v2025 = vpack.c.bf16 %v2004, %v2003
      %v2026 = vpack.c.bf16 %v2006, %v2005
      %v2027 = vpack.c.bf16 %v2008, %v2007
      %v2028 = vpack.c.bf16 %v2010, %v2009
      %v2029 = vpack.c.bf16 %v2012, %v2011
      %v2030 = vpack.c.bf16 %v2014, %v2013
      %s2031 = scalar_lea.vmem %s1, 24
      %v2032 = vld [vmem:[%s2031] sm:$0xf]
      %v2033 = vld [vmem:[%s2031 + $0x4] sm:$0xf]
      %v2034 = vld [vmem:[%s2031 + $0x8] sm:$0xf]
      %v2038 = vunpack.c.l.b16 %v2032
      %v2039 = vunpack.c.l.b16 %v2033
      %v2040 = vunpack.c.l.b16 %v2034
      %v2041 = vpack.c.b16 %v2039, %v2038
      %v2042 = vpack.c.b16 %v2040, %v2040
      %v2045 = vsel %vm1307, %v2015, 0
      %v2048 = vsel %vm1307, %v2016, 0
      %v2051 = vsel %vm1307, %v2017, 0
      %v2054 = vsel %vm1307, %v2018, 0
      %v2057 = vsel %vm1307, %v2019, 0
      %v2060 = vsel %vm1307, %v2020, 0
      %v2063 = vsel %vm1307, %v2021, 0
      %v2066 = vsel %vm1307, %v2022, 0
      %v2069 = vsel %vm1307, %v2023, 0
      %v2072 = vsel %vm1307, %v2024, 0
      %v2075 = vsel %vm1307, %v2025, 0
      %v2078 = vsel %vm1307, %v2026, 0
      %v2081 = vsel %vm1307, %v2027, 0
      %v2084 = vsel %vm1307, %v2028, 0
      %v2087 = vsel %vm1307, %v2029, 0
      %v2090 = vsel %vm1307, %v2030, 0
      %v2093 = vsel %vm1356, %v2042, 0
      %2095 = vmatpush.bf16.msra.mxu0 0
      %2096 = vmatpush.bf16.msra.mxu0 0
      %2097 = vmatpush.bf16.msra.mxu0 0
      %2098 = vmatpush.bf16.msra.mxu0 0
      %2099 = vmatpush.bf16.msra.mxu0 0
      %2100 = vmatpush.bf16.msra.mxu0 0
      %2101 = vmatpush.bf16.msra.mxu0 %v2093
      %2102 = vmatpush.bf16.msra.mxu0 %v2041
      %2103 = vmatmul.bf16.gmra.mxu0 %v2045
      %v2104 = vpop.f32.mrf.mxu0
      %v2105 = vadd.f32 0.0, %v2104
      %v2106 = vpop.f32.mrf.mxu0
      %v2107 = vadd.f32 0.0, %v2106
      %2108 = vmatmul.bf16.gmra.mxu0 %v2048
      %v2109 = vpop.f32.mrf.mxu0
      %v2110 = vadd.f32 0.0, %v2109
      %v2111 = vpop.f32.mrf.mxu0
      %v2112 = vadd.f32 0.0, %v2111
      %2113 = vmatmul.bf16.gmra.mxu0 %v2051
      %v2114 = vpop.f32.mrf.mxu0
      %v2115 = vadd.f32 0.0, %v2114
      %v2116 = vpop.f32.mrf.mxu0
      %v2117 = vadd.f32 0.0, %v2116
      %2118 = vmatmul.bf16.gmra.mxu0 %v2054
      %v2119 = vpop.f32.mrf.mxu0
      %v2120 = vadd.f32 0.0, %v2119
      %v2121 = vpop.f32.mrf.mxu0
      %v2122 = vadd.f32 0.0, %v2121
      %2123 = vmatmul.bf16.gmra.mxu0 %v2057
      %v2124 = vpop.f32.mrf.mxu0
      %v2125 = vadd.f32 0.0, %v2124
      %v2126 = vpop.f32.mrf.mxu0
      %v2127 = vadd.f32 0.0, %v2126
      %2128 = vmatmul.bf16.gmra.mxu0 %v2060
      %v2129 = vpop.f32.mrf.mxu0
      %v2130 = vadd.f32 0.0, %v2129
      %v2131 = vpop.f32.mrf.mxu0
      %v2132 = vadd.f32 0.0, %v2131
      %2133 = vmatmul.bf16.gmra.mxu0 %v2063
      %v2134 = vpop.f32.mrf.mxu0
      %v2135 = vadd.f32 0.0, %v2134
      %v2136 = vpop.f32.mrf.mxu0
      %v2137 = vadd.f32 0.0, %v2136
      %2138 = vmatmul.bf16.gmra.mxu0 %v2066
      %v2139 = vpop.f32.mrf.mxu0
      %v2140 = vadd.f32 0.0, %v2139
      %v2141 = vpop.f32.mrf.mxu0
      %v2142 = vadd.f32 0.0, %v2141
      %2143 = vmatmul.bf16.gmra.mxu0 %v2069
      %v2144 = vpop.f32.mrf.mxu0
      %v2145 = vadd.f32 0.0, %v2144
      %v2146 = vpop.f32.mrf.mxu0
      %v2147 = vadd.f32 0.0, %v2146
      %2148 = vmatmul.bf16.gmra.mxu0 %v2072
      %v2149 = vpop.f32.mrf.mxu0
      %v2150 = vadd.f32 0.0, %v2149
      %v2151 = vpop.f32.mrf.mxu0
      %v2152 = vadd.f32 0.0, %v2151
      %2153 = vmatmul.bf16.gmra.mxu0 %v2075
      %v2154 = vpop.f32.mrf.mxu0
      %v2155 = vadd.f32 0.0, %v2154
      %v2156 = vpop.f32.mrf.mxu0
      %v2157 = vadd.f32 0.0, %v2156
      %2158 = vmatmul.bf16.gmra.mxu0 %v2078
      %v2159 = vpop.f32.mrf.mxu0
      %v2160 = vadd.f32 0.0, %v2159
      %v2161 = vpop.f32.mrf.mxu0
      %v2162 = vadd.f32 0.0, %v2161
      %2163 = vmatmul.bf16.gmra.mxu0 %v2081
      %v2164 = vpop.f32.mrf.mxu0
      %v2165 = vadd.f32 0.0, %v2164
      %v2166 = vpop.f32.mrf.mxu0
      %v2167 = vadd.f32 0.0, %v2166
      %2168 = vmatmul.bf16.gmra.mxu0 %v2084
      %v2169 = vpop.f32.mrf.mxu0
      %v2170 = vadd.f32 0.0, %v2169
      %v2171 = vpop.f32.mrf.mxu0
      %v2172 = vadd.f32 0.0, %v2171
      %2173 = vmatmul.bf16.gmra.mxu0 %v2087
      %v2174 = vpop.f32.mrf.mxu0
      %v2175 = vadd.f32 0.0, %v2174
      %v2176 = vpop.f32.mrf.mxu0
      %v2177 = vadd.f32 0.0, %v2176
      %2178 = vmatmul.bf16.gmra.mxu0 %v2090
      %v2179 = vpop.f32.mrf.mxu0
      %v2180 = vadd.f32 0.0, %v2179
      %v2181 = vpop.f32.mrf.mxu0
      %v2182 = vadd.f32 0.0, %v2181
      %2183 = vdwg.mxu0
      %v2184 = vadd.f32 %v1519, %v2105
      %v2185 = vadd.f32 %v1521, %v2107
      %v2186 = vadd.f32 %v1524, %v2110
      %v2187 = vadd.f32 %v1526, %v2112
      %v2188 = vadd.f32 %v1529, %v2115
      %v2189 = vadd.f32 %v1531, %v2117
      %v2190 = vadd.f32 %v1534, %v2120
      %v2191 = vadd.f32 %v1536, %v2122
      %v2192 = vadd.f32 %v1539, %v2125
      %v2193 = vadd.f32 %v1541, %v2127
      %v2194 = vadd.f32 %v1544, %v2130
      %v2195 = vadd.f32 %v1546, %v2132
      %v2196 = vadd.f32 %v1549, %v2135
      %v2197 = vadd.f32 %v1551, %v2137
      %v2198 = vadd.f32 %v1554, %v2140
      %v2199 = vadd.f32 %v1556, %v2142
      %v2200 = vadd.f32 %v1559, %v2145
      %v2201 = vadd.f32 %v1561, %v2147
      %v2202 = vadd.f32 %v1564, %v2150
      %v2203 = vadd.f32 %v1566, %v2152
      %v2204 = vadd.f32 %v1569, %v2155
      %v2205 = vadd.f32 %v1571, %v2157
      %v2206 = vadd.f32 %v1574, %v2160
      %v2207 = vadd.f32 %v1576, %v2162
      %v2208 = vadd.f32 %v1579, %v2165
      %v2209 = vadd.f32 %v1581, %v2167
      %v2210 = vadd.f32 %v1584, %v2170
      %v2211 = vadd.f32 %v1586, %v2172
      %v2212 = vadd.f32 %v1589, %v2175
      %v2213 = vadd.f32 %v1591, %v2177
      %v2214 = vadd.f32 %v1594, %v2180
      %v2215 = vadd.f32 %v1596, %v2182
      %v2216 = vsel %vm313, %v2184, 0.0
      %v2217 = vsel %vm313, %v2185, 0.0
      %v2218 = vadd.f32 %v2216, %v2217
      %v2219 = vsel %vm313, %v2186, 0.0
      %v2220 = vadd.f32 %v2218, %v2219
      %v2221 = vsel %vm313, %v2187, 0.0
      %v2222 = vadd.f32 %v2220, %v2221
      %v2223 = vsel %vm313, %v2188, 0.0
      %v2224 = vadd.f32 %v2222, %v2223
      %v2225 = vsel %vm313, %v2189, 0.0
      %v2226 = vadd.f32 %v2224, %v2225
      %v2227 = vsel %vm313, %v2190, 0.0
      %v2228 = vadd.f32 %v2226, %v2227
      %v2229 = vsel %vm313, %v2191, 0.0
      %v2230 = vadd.f32 %v2228, %v2229
      %v2231 = vsel %vm313, %v2192, 0.0
      %v2232 = vadd.f32 %v2230, %v2231
      %v2233 = vsel %vm313, %v2193, 0.0
      %v2234 = vadd.f32 %v2232, %v2233
      %v2235 = vsel %vm313, %v2194, 0.0
      %v2236 = vadd.f32 %v2234, %v2235
      %v2237 = vsel %vm313, %v2195, 0.0
      %v2238 = vadd.f32 %v2236, %v2237
      %v2239 = vsel %vm313, %v2196, 0.0
      %v2240 = vadd.f32 %v2238, %v2239
      %v2241 = vsel %vm313, %v2197, 0.0
      %v2242 = vadd.f32 %v2240, %v2241
      %v2243 = vsel %vm313, %v2198, 0.0
      %v2244 = vadd.f32 %v2242, %v2243
      %v2245 = vsel %vm313, %v2199, 0.0
      %v2246 = vadd.f32 %v2244, %v2245
      %v2247 = vsel %vm313, %v2200, 0.0
      %v2248 = vadd.f32 %v2246, %v2247
      %v2249 = vsel %vm313, %v2201, 0.0
      %v2250 = vadd.f32 %v2248, %v2249
      %v2251 = vsel %vm313, %v2202, 0.0
      %v2252 = vadd.f32 %v2250, %v2251
      %v2253 = vsel %vm313, %v2203, 0.0
      %v2254 = vadd.f32 %v2252, %v2253
      %v2255 = vsel %vm313, %v2204, 0.0
      %v2256 = vadd.f32 %v2254, %v2255
      %v2257 = vsel %vm313, %v2205, 0.0
      %v2258 = vadd.f32 %v2256, %v2257
      %v2259 = vsel %vm313, %v2206, 0.0
      %v2260 = vadd.f32 %v2258, %v2259
      %v2261 = vsel %vm313, %v2207, 0.0
      %v2262 = vadd.f32 %v2260, %v2261
      %v2263 = vsel %vm313, %v2208, 0.0
      %v2264 = vadd.f32 %v2262, %v2263
      %v2265 = vsel %vm313, %v2209, 0.0
      %v2266 = vadd.f32 %v2264, %v2265
      %v2267 = vsel %vm313, %v2210, 0.0
      %v2268 = vadd.f32 %v2266, %v2267
      %v2269 = vsel %vm313, %v2211, 0.0
      %v2270 = vadd.f32 %v2268, %v2269
      %v2271 = vsel %vm313, %v2212, 0.0
      %v2272 = vadd.f32 %v2270, %v2271
      %v2273 = vsel %vm313, %v2213, 0.0
      %v2274 = vadd.f32 %v2272, %v2273
      %v2275 = vsel %vm313, %v2214, 0.0
      %v2276 = vadd.f32 %v2274, %v2275
      %v2277 = vsel %vm313, %v2215, 0.0
      %v2278 = vadd.f32 %v2276, %v2277
      %v2279 = vrot.slane %v2278, 4
      %v2280 = vadd.f32 %v2278, %v2279
      %v2281 = vrot.slane %v2280, 2
      %v2282 = vadd.f32 %v2280, %v2281
      %v2283 = vrot.slane %v2282, 1
      %v2284 = vadd.f32 %v2282, %v2283
      %v2285 = vmul.f32 %v2284, 0.00390625
      %v2286 = vmul.f32 %v2184, %v2184
      %v2287 = vmul.f32 %v2185, %v2185
      %v2288 = vmul.f32 %v2186, %v2186
      %v2289 = vmul.f32 %v2187, %v2187
      %v2290 = vmul.f32 %v2188, %v2188
      %v2291 = vmul.f32 %v2189, %v2189
      %v2292 = vmul.f32 %v2190, %v2190
      %v2293 = vmul.f32 %v2191, %v2191
      %v2294 = vmul.f32 %v2192, %v2192
      %v2295 = vmul.f32 %v2193, %v2193
      %v2296 = vmul.f32 %v2194, %v2194
      %v2297 = vmul.f32 %v2195, %v2195
      %v2298 = vmul.f32 %v2196, %v2196
      %v2299 = vmul.f32 %v2197, %v2197
      %v2300 = vmul.f32 %v2198, %v2198
      %v2301 = vmul.f32 %v2199, %v2199
      %v2302 = vmul.f32 %v2200, %v2200
      %v2303 = vmul.f32 %v2201, %v2201
      %v2304 = vmul.f32 %v2202, %v2202
      %v2305 = vmul.f32 %v2203, %v2203
      %v2306 = vmul.f32 %v2204, %v2204
      %v2307 = vmul.f32 %v2205, %v2205
      %v2308 = vmul.f32 %v2206, %v2206
      %v2309 = vmul.f32 %v2207, %v2207
      %v2310 = vmul.f32 %v2208, %v2208
      %v2311 = vmul.f32 %v2209, %v2209
      %v2312 = vmul.f32 %v2210, %v2210
      %v2313 = vmul.f32 %v2211, %v2211
      %v2314 = vmul.f32 %v2212, %v2212
      %v2315 = vmul.f32 %v2213, %v2213
      %v2316 = vmul.f32 %v2214, %v2214
      %v2317 = vmul.f32 %v2215, %v2215
      %v2318 = vsel %vm313, %v2286, 0.0
      %v2319 = vsel %vm313, %v2287, 0.0
      %v2320 = vadd.f32 %v2318, %v2319
      %v2321 = vsel %vm313, %v2288, 0.0
      %v2322 = vadd.f32 %v2320, %v2321
      %v2323 = vsel %vm313, %v2289, 0.0
      %v2324 = vadd.f32 %v2322, %v2323
      %v2325 = vsel %vm313, %v2290, 0.0
      %v2326 = vadd.f32 %v2324, %v2325
      %v2327 = vsel %vm313, %v2291, 0.0
      %v2328 = vadd.f32 %v2326, %v2327
      %v2329 = vsel %vm313, %v2292, 0.0
      %v2330 = vadd.f32 %v2328, %v2329
      %v2331 = vsel %vm313, %v2293, 0.0
      %v2332 = vadd.f32 %v2330, %v2331
      %v2333 = vsel %vm313, %v2294, 0.0
      %v2334 = vadd.f32 %v2332, %v2333
      %v2335 = vsel %vm313, %v2295, 0.0
      %v2336 = vadd.f32 %v2334, %v2335
      %v2337 = vsel %vm313, %v2296, 0.0
      %v2338 = vadd.f32 %v2336, %v2337
      %v2339 = vsel %vm313, %v2297, 0.0
      %v2340 = vadd.f32 %v2338, %v2339
      %v2341 = vsel %vm313, %v2298, 0.0
      %v2342 = vadd.f32 %v2340, %v2341
      %v2343 = vsel %vm313, %v2299, 0.0
      %v2344 = vadd.f32 %v2342, %v2343
      %v2345 = vsel %vm313, %v2300, 0.0
      %v2346 = vadd.f32 %v2344, %v2345
      %v2347 = vsel %vm313, %v2301, 0.0
      %v2348 = vadd.f32 %v2346, %v2347
      %v2349 = vsel %vm313, %v2302, 0.0
      %v2350 = vadd.f32 %v2348, %v2349
      %v2351 = vsel %vm313, %v2303, 0.0
      %v2352 = vadd.f32 %v2350, %v2351
      %v2353 = vsel %vm313, %v2304, 0.0
      %v2354 = vadd.f32 %v2352, %v2353
      %v2355 = vsel %vm313, %v2305, 0.0
      %v2356 = vadd.f32 %v2354, %v2355
      %v2357 = vsel %vm313, %v2306, 0.0
      %v2358 = vadd.f32 %v2356, %v2357
      %v2359 = vsel %vm313, %v2307, 0.0
      %v2360 = vadd.f32 %v2358, %v2359
      %v2361 = vsel %vm313, %v2308, 0.0
      %v2362 = vadd.f32 %v2360, %v2361
      %v2363 = vsel %vm313, %v2309, 0.0
      %v2364 = vadd.f32 %v2362, %v2363
      %v2365 = vsel %vm313, %v2310, 0.0
      %v2366 = vadd.f32 %v2364, %v2365
      %v2367 = vsel %vm313, %v2311, 0.0
      %v2368 = vadd.f32 %v2366, %v2367
      %v2369 = vsel %vm313, %v2312, 0.0
      %v2370 = vadd.f32 %v2368, %v2369
      %v2371 = vsel %vm313, %v2313, 0.0
      %v2372 = vadd.f32 %v2370, %v2371
      %v2373 = vsel %vm313, %v2314, 0.0
      %v2374 = vadd.f32 %v2372, %v2373
      %v2375 = vsel %vm313, %v2315, 0.0
      %v2376 = vadd.f32 %v2374, %v2375
      %v2377 = vsel %vm313, %v2316, 0.0
      %v2378 = vadd.f32 %v2376, %v2377
      %v2379 = vsel %vm313, %v2317, 0.0
      %v2380 = vadd.f32 %v2378, %v2379
      %v2381 = vrot.slane %v2380, 4
      %v2382 = vadd.f32 %v2380, %v2381
      %v2383 = vrot.slane %v2382, 2
      %v2384 = vadd.f32 %v2382, %v2383
      %v2385 = vrot.slane %v2384, 1
      %v2386 = vadd.f32 %v2384, %v2385
      %v2387 = vmul.f32 %v2386, 0.00390625
      %v2388 = vmul.f32 %v2285, %v2285
      %v2389 = vsub.f32 %v2387, %v2388
      %v2390 = vmax.f32 %v2389, 0.0
      %v2391 = vadd.f32 %v2390, 1e-05
      %v2392 = vrsqrt.pop %v2391
      %v2393 = vmul.f32 %v2392, %v2391
      %v2394 = vmul.f32 %v2393, %v2392
      %v2395 = vmul.f32 0.5, %v2394
      %v2396 = vsub.f32 1.5, %v2395
      %v2397 = vmul.f32 %v2392, %v2396
      %vm2398 = vweird.f32 %v2391
      %vm2399 = vweird.f32 %v2392
      %vm2400 = vmor %vm2398, %vm2399
      %v2401 = vsel %vm2400, %v2392, %v2397
      %v2402 = vmul.f32 %v424, %v2401
      %v2403 = vmul.f32 %v2285, %v2402
      %v2404 = vsub.f32 %v425, %v2403
      %v2406 = vperm.slane %v2402, 0
      %v2408 = vmul.f32 %v2184, %v2406
      %v2409 = vmul.f32 %v2185, %v2406
      %v2410 = vmul.f32 %v2186, %v2406
      %v2411 = vmul.f32 %v2187, %v2406
      %v2412 = vmul.f32 %v2188, %v2406
      %v2413 = vmul.f32 %v2189, %v2406
      %v2414 = vmul.f32 %v2190, %v2406
      %v2415 = vmul.f32 %v2191, %v2406
      %v2416 = vmul.f32 %v2192, %v2406
      %v2417 = vmul.f32 %v2193, %v2406
      %v2418 = vmul.f32 %v2194, %v2406
      %v2419 = vmul.f32 %v2195, %v2406
      %v2420 = vmul.f32 %v2196, %v2406
      %v2421 = vmul.f32 %v2197, %v2406
      %v2422 = vmul.f32 %v2198, %v2406
      %v2423 = vmul.f32 %v2199, %v2406
      %v2424 = vmul.f32 %v2200, %v2406
      %v2425 = vmul.f32 %v2201, %v2406
      %v2426 = vmul.f32 %v2202, %v2406
      %v2427 = vmul.f32 %v2203, %v2406
      %v2428 = vmul.f32 %v2204, %v2406
      %v2429 = vmul.f32 %v2205, %v2406
      %v2430 = vmul.f32 %v2206, %v2406
      %v2431 = vmul.f32 %v2207, %v2406
      %v2432 = vmul.f32 %v2208, %v2406
      %v2433 = vmul.f32 %v2209, %v2406
      %v2434 = vmul.f32 %v2210, %v2406
      %v2435 = vmul.f32 %v2211, %v2406
      %v2436 = vmul.f32 %v2212, %v2406
      %v2437 = vmul.f32 %v2213, %v2406
      %v2438 = vmul.f32 %v2214, %v2406
      %v2439 = vmul.f32 %v2215, %v2406
      %v2441 = vperm.slane %v2404, 0
      %v2443 = vadd.f32 %v2408, %v2441
      %v2444 = vadd.f32 %v2409, %v2441
      %v2445 = vadd.f32 %v2410, %v2441
      %v2446 = vadd.f32 %v2411, %v2441
      %v2447 = vadd.f32 %v2412, %v2441
      %v2448 = vadd.f32 %v2413, %v2441
      %v2449 = vadd.f32 %v2414, %v2441
      %v2450 = vadd.f32 %v2415, %v2441
      %v2451 = vadd.f32 %v2416, %v2441
      %v2452 = vadd.f32 %v2417, %v2441
      %v2453 = vadd.f32 %v2418, %v2441
      %v2454 = vadd.f32 %v2419, %v2441
      %v2455 = vadd.f32 %v2420, %v2441
      %v2456 = vadd.f32 %v2421, %v2441
      %v2457 = vadd.f32 %v2422, %v2441
      %v2458 = vadd.f32 %v2423, %v2441
      %v2459 = vadd.f32 %v2424, %v2441
      %v2460 = vadd.f32 %v2425, %v2441
      %v2461 = vadd.f32 %v2426, %v2441
      %v2462 = vadd.f32 %v2427, %v2441
      %v2463 = vadd.f32 %v2428, %v2441
      %v2464 = vadd.f32 %v2429, %v2441
      %v2465 = vadd.f32 %v2430, %v2441
      %v2466 = vadd.f32 %v2431, %v2441
      %v2467 = vadd.f32 %v2432, %v2441
      %v2468 = vadd.f32 %v2433, %v2441
      %v2469 = vadd.f32 %v2434, %v2441
      %v2470 = vadd.f32 %v2435, %v2441
      %v2471 = vadd.f32 %v2436, %v2441
      %v2472 = vadd.f32 %v2437, %v2441
      %v2473 = vadd.f32 %v2438, %v2441
      %v2474 = vadd.f32 %v2439, %v2441
      %v2475 = vmax.f32 %v2443, 0.0
      %v2476 = vmax.f32 %v2444, 0.0
      %v2477 = vmax.f32 %v2445, 0.0
      %v2478 = vmax.f32 %v2446, 0.0
      %v2479 = vmax.f32 %v2447, 0.0
      %v2480 = vmax.f32 %v2448, 0.0
      %v2481 = vmax.f32 %v2449, 0.0
      %v2482 = vmax.f32 %v2450, 0.0
      %v2483 = vmax.f32 %v2451, 0.0
      %v2484 = vmax.f32 %v2452, 0.0
      %v2485 = vmax.f32 %v2453, 0.0
      %v2486 = vmax.f32 %v2454, 0.0
      %v2487 = vmax.f32 %v2455, 0.0
      %v2488 = vmax.f32 %v2456, 0.0
      %v2489 = vmax.f32 %v2457, 0.0
      %v2490 = vmax.f32 %v2458, 0.0
      %v2491 = vmax.f32 %v2459, 0.0
      %v2492 = vmax.f32 %v2460, 0.0
      %v2493 = vmax.f32 %v2461, 0.0
      %v2494 = vmax.f32 %v2462, 0.0
      %v2495 = vmax.f32 %v2463, 0.0
      %v2496 = vmax.f32 %v2464, 0.0
      %v2497 = vmax.f32 %v2465, 0.0
      %v2498 = vmax.f32 %v2466, 0.0
      %v2499 = vmax.f32 %v2467, 0.0
      %v2500 = vmax.f32 %v2468, 0.0
      %v2501 = vmax.f32 %v2469, 0.0
      %v2502 = vmax.f32 %v2470, 0.0
      %v2503 = vmax.f32 %v2471, 0.0
      %v2504 = vmax.f32 %v2472, 0.0
      %v2505 = vmax.f32 %v2473, 0.0
      %v2506 = vmax.f32 %v2474, 0.0
      %2507 = vst.msk [vmem:[%s312 + $0x1] sm:$0xff] %vm313, %v2475
      %2508 = vst.msk [vmem:[%s312 + $0x9] sm:$0xff] %vm313, %v2476
      %2509 = vst.msk [vmem:[%s312 + $0x19] sm:$0xff] %vm313, %v2477
      %2510 = vst.msk [vmem:[%s312 + $0x21] sm:$0xff] %vm313, %v2478
      %2511 = vst.msk [vmem:[%s312 + $0x31] sm:$0xff] %vm313, %v2479
      %2512 = vst.msk [vmem:[%s312 + $0x39] sm:$0xff] %vm313, %v2480
      %2513 = vst.msk [vmem:[%s312 + $0x49] sm:$0xff] %vm313, %v2481
      %2514 = vst.msk [vmem:[%s312 + $0x51] sm:$0xff] %vm313, %v2482
      %2515 = vst.msk [vmem:[%s312 + $0x61] sm:$0xff] %vm313, %v2483
      %2516 = vst.msk [vmem:[%s312 + $0x69] sm:$0xff] %vm313, %v2484
      %2517 = vst.msk [vmem:[%s312 + $0x79] sm:$0xff] %vm313, %v2485
      %2518 = vst.msk [vmem:[%s312 + $0x81] sm:$0xff] %vm313, %v2486
      %2519 = vst.msk [vmem:[%s312 + $0x91] sm:$0xff] %vm313, %v2487
      %2520 = vst.msk [vmem:[%s312 + $0x99] sm:$0xff] %vm313, %v2488
      %2521 = vst.msk [vmem:[%s312 + $0xa9] sm:$0xff] %vm313, %v2489
      %2522 = vst.msk [vmem:[%s312 + $0xb1] sm:$0xff] %vm313, %v2490
      %2523 = vst.msk [vmem:[%s312 + $0xc1] sm:$0xff] %vm313, %v2491
      %2524 = vst.msk [vmem:[%s312 + $0xc9] sm:$0xff] %vm313, %v2492
      %2525 = vst.msk [vmem:[%s312 + $0xd9] sm:$0xff] %vm313, %v2493
      %2526 = vst.msk [vmem:[%s312 + $0xe1] sm:$0xff] %vm313, %v2494
      %2527 = vst.msk [vmem:[%s312 + $0xf1] sm:$0xff] %vm313, %v2495
      %2528 = vst.msk [vmem:[%s312 + $0xf9] sm:$0xff] %vm313, %v2496
      %2529 = vst.msk [vmem:[%s312 + $0x109] sm:$0xff] %vm313, %v2497
      %2530 = vst.msk [vmem:[%s312 + $0x111] sm:$0xff] %vm313, %v2498
      %2531 = vst.msk [vmem:[%s312 + $0x121] sm:$0xff] %vm313, %v2499
      %2532 = vst.msk [vmem:[%s312 + $0x129] sm:$0xff] %vm313, %v2500
      %2533 = vst.msk [vmem:[%s312 + $0x139] sm:$0xff] %vm313, %v2501
      %2534 = vst.msk [vmem:[%s312 + $0x141] sm:$0xff] %vm313, %v2502
      %2535 = vst.msk [vmem:[%s312 + $0x151] sm:$0xff] %vm313, %v2503
      %2536 = vst.msk [vmem:[%s312 + $0x159] sm:$0xff] %vm313, %v2504
      %2537 = vst.msk [vmem:[%s312 + $0x169] sm:$0xff] %vm313, %v2505
      %2538 = vst.msk [vmem:[%s312 + $0x171] sm:$0xff] %vm313, %v2506
      %2539 = vst.msk [vmem:[#allocation2 + $0x1] sm:$0xff] %vm313, %v2477
      %2540 = vst.msk [vmem:[#allocation2 + $0x9] sm:$0xff] %vm313, %v2478
      %2541 = vst.msk [vmem:[%s348 + $0x1] sm:$0xff] %vm313, %v2503
      %2542 = vst.msk [vmem:[%s348 + $0x9] sm:$0xff] %vm313, %v2504
      %v2543 = vld [vmem:[#allocation2 + $0x2] sm:$0x1]
      %v2544 = vld [vmem:[#allocation2 + $0x1a] sm:$0x1]
      %v2545 = vld [vmem:[#allocation2 + $0x32] sm:$0x1]
      %v2546 = vld [vmem:[#allocation2 + $0x4a] sm:$0x1]
      %v2547 = vld [vmem:[#allocation2 + $0x62] sm:$0x1]
      %v2548 = vld [vmem:[#allocation2 + $0x7a] sm:$0x1]
      %v2549 = vld [vmem:[#allocation2 + $0x92] sm:$0x1]
      %v2550 = vld [vmem:[#allocation2 + $0xaa] sm:$0x1]
      %v2551 = vld [vmem:[#allocation2 + $0xc2] sm:$0x1]
      %v2552 = vld [vmem:[#allocation2 + $0xda] sm:$0x1]
      %v2553 = vld [vmem:[#allocation2 + $0xf2] sm:$0x1]
      %v2554 = vld [vmem:[#allocation2 + $0x10a] sm:$0x1]
      %v2555 = vld [vmem:[#allocation2 + $0x122] sm:$0x1]
      %v2556 = vld [vmem:[#allocation2 + $0x13a] sm:$0x1]
      %v2557 = vld [vmem:[#allocation2 + $0x152] sm:$0x1]
      %v2558 = vld [vmem:[#allocation2 + $0x16a] sm:$0x1]
      %v2559 = vld [vmem:[#allocation2 + $0x182] sm:$0x1]
      %v2560 = vld [vmem:[#allocation2 + $0x19a] sm:$0x1]
      %2561 = vst.msk [vmem:[#allocation2] sm:$0x1] %vm369, %v2543
      %2562 = vst.msk [vmem:[#allocation2 + $0x18] sm:$0x1] %vm369, %v2544
      %2563 = vst.msk [vmem:[#allocation2 + $0x30] sm:$0x1] %vm369, %v2545
      %2564 = vst.msk [vmem:[#allocation2 + $0x48] sm:$0x1] %vm369, %v2546
      %2565 = vst.msk [vmem:[#allocation2 + $0x60] sm:$0x1] %vm369, %v2547
      %2566 = vst.msk [vmem:[#allocation2 + $0x78] sm:$0x1] %vm369, %v2548
      %2567 = vst.msk [vmem:[#allocation2 + $0x90] sm:$0x1] %vm369, %v2549
      %2568 = vst.msk [vmem:[#allocation2 + $0xa8] sm:$0x1] %vm369, %v2550
      %2569 = vst.msk [vmem:[#allocation2 + $0xc0] sm:$0x1] %vm369, %v2551
      %2570 = vst.msk [vmem:[#allocation2 + $0xd8] sm:$0x1] %vm369, %v2552
      %2571 = vst.msk [vmem:[#allocation2 + $0xf0] sm:$0x1] %vm369, %v2553
      %2572 = vst.msk [vmem:[#allocation2 + $0x108] sm:$0x1] %vm369, %v2554
      %2573 = vst.msk [vmem:[#allocation2 + $0x120] sm:$0x1] %vm369, %v2555
      %2574 = vst.msk [vmem:[#allocation2 + $0x138] sm:$0x1] %vm369, %v2556
      %2575 = vst.msk [vmem:[#allocation2 + $0x150] sm:$0x1] %vm369, %v2557
      %2576 = vst.msk [vmem:[#allocation2 + $0x168] sm:$0x1] %vm369, %v2558
      %2577 = vst.msk [vmem:[#allocation2 + $0x180] sm:$0x1] %vm369, %v2559
      %2578 = vst.msk [vmem:[#allocation2 + $0x198] sm:$0x1] %vm369, %v2560
      %v2579 = vld [vmem:[#allocation2 + $0xf] sm:$0x1]
      %v2580 = vld [vmem:[#allocation2 + $0x27] sm:$0x1]
      %v2581 = vld [vmem:[#allocation2 + $0x3f] sm:$0x1]
      %v2582 = vld [vmem:[#allocation2 + $0x57] sm:$0x1]
      %v2583 = vld [vmem:[#allocation2 + $0x6f] sm:$0x1]
      %v2584 = vld [vmem:[#allocation2 + $0x87] sm:$0x1]
      %v2585 = vld [vmem:[#allocation2 + $0x9f] sm:$0x1]
      %v2586 = vld [vmem:[#allocation2 + $0xb7] sm:$0x1]
      %v2587 = vld [vmem:[#allocation2 + $0xcf] sm:$0x1]
      %v2588 = vld [vmem:[#allocation2 + $0xe7] sm:$0x1]
      %v2589 = vld [vmem:[#allocation2 + $0xff] sm:$0x1]
      %v2590 = vld [vmem:[#allocation2 + $0x117] sm:$0x1]
      %v2591 = vld [vmem:[#allocation2 + $0x12f] sm:$0x1]
      %v2592 = vld [vmem:[#allocation2 + $0x147] sm:$0x1]
      %v2593 = vld [vmem:[#allocation2 + $0x15f] sm:$0x1]
      %v2594 = vld [vmem:[#allocation2 + $0x177] sm:$0x1]
      %v2595 = vld [vmem:[#allocation2 + $0x18f] sm:$0x1]
      %v2596 = vld [vmem:[#allocation2 + $0x1a7] sm:$0x1]
      %2597 = vst.msk [vmem:[#allocation2 + $0x11] sm:$0x1] %vm369, %v2579
      %2598 = vst.msk [vmem:[#allocation2 + $0x29] sm:$0x1] %vm369, %v2580
      %2599 = vst.msk [vmem:[#allocation2 + $0x41] sm:$0x1] %vm369, %v2581
      %2600 = vst.msk [vmem:[#allocation2 + $0x59] sm:$0x1] %vm369, %v2582
      %2601 = vst.msk [vmem:[#allocation2 + $0x71] sm:$0x1] %vm369, %v2583
      %2602 = vst.msk [vmem:[#allocation2 + $0x89] sm:$0x1] %vm369, %v2584
      %2603 = vst.msk [vmem:[#allocation2 + $0xa1] sm:$0x1] %vm369, %v2585
      %2604 = vst.msk [vmem:[#allocation2 + $0xb9] sm:$0x1] %vm369, %v2586
      %2605 = vst.msk [vmem:[#allocation2 + $0xd1] sm:$0x1] %vm369, %v2587
      %2606 = vst.msk [vmem:[#allocation2 + $0xe9] sm:$0x1] %vm369, %v2588
      %2607 = vst.msk [vmem:[#allocation2 + $0x101] sm:$0x1] %vm369, %v2589
      %2608 = vst.msk [vmem:[#allocation2 + $0x119] sm:$0x1] %vm369, %v2590
      %2609 = vst.msk [vmem:[#allocation2 + $0x131] sm:$0x1] %vm369, %v2591
      %2610 = vst.msk [vmem:[#allocation2 + $0x149] sm:$0x1] %vm369, %v2592
      %2611 = vst.msk [vmem:[#allocation2 + $0x161] sm:$0x1] %vm369, %v2593
      %2612 = vst.msk [vmem:[#allocation2 + $0x179] sm:$0x1] %vm369, %v2594
      %2613 = vst.msk [vmem:[#allocation2 + $0x191] sm:$0x1] %vm369, %v2595
      %2614 = vst.msk [vmem:[#allocation2 + $0x1a9] sm:$0x1] %vm369, %v2596
      %v2615 = vld [vmem:[%s5] sm:$0x1]
      %v2616 = vld [vmem:[%s6] sm:$0x1]
      %v2617 = vld [vmem:[#allocation2] sm:$0xff]
      %v2618 = vld [vmem:[#allocation2 + $0x8] sm:$0xff]
      %v2619 = vld [vmem:[#allocation2 + $0x18] sm:$0xff]
      %v2620 = vld [vmem:[#allocation2 + $0x20] sm:$0xff]
      %v2621 = vld [vmem:[#allocation2 + $0x30] sm:$0xff]
      %v2622 = vld [vmem:[#allocation2 + $0x38] sm:$0xff]
      %v2623 = vld [vmem:[#allocation2 + $0x48] sm:$0xff]
      %v2624 = vld [vmem:[#allocation2 + $0x50] sm:$0xff]
      %v2625 = vld [vmem:[#allocation2 + $0x60] sm:$0xff]
      %v2626 = vld [vmem:[#allocation2 + $0x68] sm:$0xff]
      %v2627 = vld [vmem:[#allocation2 + $0x78] sm:$0xff]
      %v2628 = vld [vmem:[#allocation2 + $0x80] sm:$0xff]
      %v2629 = vld [vmem:[#allocation2 + $0x90] sm:$0xff]
      %v2630 = vld [vmem:[#allocation2 + $0x98] sm:$0xff]
      %v2631 = vld [vmem:[#allocation2 + $0xa8] sm:$0xff]
      %v2632 = vld [vmem:[#allocation2 + $0xb0] sm:$0xff]
      %v2633 = vld [vmem:[#allocation2 + $0xc0] sm:$0xff]
      %v2634 = vld [vmem:[#allocation2 + $0xc8] sm:$0xff]
      %v2635 = vld [vmem:[#allocation2 + $0xd8] sm:$0xff]
      %v2636 = vld [vmem:[#allocation2 + $0xe0] sm:$0xff]
      %v2637 = vld [vmem:[#allocation2 + $0xf0] sm:$0xff]
      %v2638 = vld [vmem:[#allocation2 + $0xf8] sm:$0xff]
      %v2639 = vld [vmem:[#allocation2 + $0x108] sm:$0xff]
      %v2640 = vld [vmem:[#allocation2 + $0x110] sm:$0xff]
      %v2641 = vld [vmem:[#allocation2 + $0x120] sm:$0xff]
      %v2642 = vld [vmem:[#allocation2 + $0x128] sm:$0xff]
      %v2643 = vld [vmem:[#allocation2 + $0x138] sm:$0xff]
      %v2644 = vld [vmem:[#allocation2 + $0x140] sm:$0xff]
      %v2645 = vld [vmem:[#allocation2 + $0x150] sm:$0xff]
      %v2646 = vld [vmem:[#allocation2 + $0x158] sm:$0xff]
      %v2647 = vld [vmem:[#allocation2 + $0x168] sm:$0xff]
      %v2648 = vld [vmem:[#allocation2 + $0x170] sm:$0xff]
      %v2649 = vld [vmem:[#allocation2 + $0x1] sm:$0xff]
      %v2650 = vld [vmem:[#allocation2 + $0x9] sm:$0xff]
      %v2651 = vld [vmem:[#allocation2 + $0x19] sm:$0xff]
      %v2652 = vld [vmem:[#allocation2 + $0x21] sm:$0xff]
      %v2653 = vld [vmem:[#allocation2 + $0x31] sm:$0xff]
      %v2654 = vld [vmem:[#allocation2 + $0x39] sm:$0xff]
      %v2655 = vld [vmem:[#allocation2 + $0x49] sm:$0xff]
      %v2656 = vld [vmem:[#allocation2 + $0x51] sm:$0xff]
      %v2657 = vld [vmem:[#allocation2 + $0x61] sm:$0xff]
      %v2658 = vld [vmem:[#allocation2 + $0x69] sm:$0xff]
      %v2659 = vld [vmem:[#allocation2 + $0x79] sm:$0xff]
      %v2660 = vld [vmem:[#allocation2 + $0x81] sm:$0xff]
      %v2661 = vld [vmem:[#allocation2 + $0x91] sm:$0xff]
      %v2662 = vld [vmem:[#allocation2 + $0x99] sm:$0xff]
      %v2663 = vld [vmem:[#allocation2 + $0xa9] sm:$0xff]
      %v2664 = vld [vmem:[#allocation2 + $0xb1] sm:$0xff]
      %v2665 = vld [vmem:[#allocation2 + $0xc1] sm:$0xff]
      %v2666 = vld [vmem:[#allocation2 + $0xc9] sm:$0xff]
      %v2667 = vld [vmem:[#allocation2 + $0xd9] sm:$0xff]
      %v2668 = vld [vmem:[#allocation2 + $0xe1] sm:$0xff]
      %v2669 = vld [vmem:[#allocation2 + $0xf1] sm:$0xff]
      %v2670 = vld [vmem:[#allocation2 + $0xf9] sm:$0xff]
      %v2671 = vld [vmem:[#allocation2 + $0x109] sm:$0xff]
      %v2672 = vld [vmem:[#allocation2 + $0x111] sm:$0xff]
      %v2673 = vld [vmem:[#allocation2 + $0x121] sm:$0xff]
      %v2674 = vld [vmem:[#allocation2 + $0x129] sm:$0xff]
      %v2675 = vld [vmem:[#allocation2 + $0x139] sm:$0xff]
      %v2676 = vld [vmem:[#allocation2 + $0x141] sm:$0xff]
      %v2677 = vld [vmem:[#allocation2 + $0x151] sm:$0xff]
      %v2678 = vld [vmem:[#allocation2 + $0x159] sm:$0xff]
      %v2679 = vld [vmem:[#allocation2 + $0x169] sm:$0xff]
      %v2680 = vld [vmem:[#allocation2 + $0x171] sm:$0xff]
      %v2681 = vld [vmem:[#allocation2 + $0x2] sm:$0xff]
      %v2682 = vld [vmem:[#allocation2 + $0xa] sm:$0xff]
      %v2683 = vld [vmem:[#allocation2 + $0x1a] sm:$0xff]
      %v2684 = vld [vmem:[#allocation2 + $0x22] sm:$0xff]
      %v2685 = vld [vmem:[#allocation2 + $0x32] sm:$0xff]
      %v2686 = vld [vmem:[#allocation2 + $0x3a] sm:$0xff]
      %v2687 = vld [vmem:[#allocation2 + $0x4a] sm:$0xff]
      %v2688 = vld [vmem:[#allocation2 + $0x52] sm:$0xff]
      %v2689 = vld [vmem:[#allocation2 + $0x62] sm:$0xff]
      %v2690 = vld [vmem:[#allocation2 + $0x6a] sm:$0xff]
      %v2691 = vld [vmem:[#allocation2 + $0x7a] sm:$0xff]
      %v2692 = vld [vmem:[#allocation2 + $0x82] sm:$0xff]
      %v2693 = vld [vmem:[#allocation2 + $0x92] sm:$0xff]
      %v2694 = vld [vmem:[#allocation2 + $0x9a] sm:$0xff]
      %v2695 = vld [vmem:[#allocation2 + $0xaa] sm:$0xff]
      %v2696 = vld [vmem:[#allocation2 + $0xb2] sm:$0xff]
      %v2697 = vld [vmem:[#allocation2 + $0xc2] sm:$0xff]
      %v2698 = vld [vmem:[#allocation2 + $0xca] sm:$0xff]
      %v2699 = vld [vmem:[#allocation2 + $0xda] sm:$0xff]
      %v2700 = vld [vmem:[#allocation2 + $0xe2] sm:$0xff]
      %v2701 = vld [vmem:[#allocation2 + $0xf2] sm:$0xff]
      %v2702 = vld [vmem:[#allocation2 + $0xfa] sm:$0xff]
      %v2703 = vld [vmem:[#allocation2 + $0x10a] sm:$0xff]
      %v2704 = vld [vmem:[#allocation2 + $0x112] sm:$0xff]
      %v2705 = vld [vmem:[#allocation2 + $0x122] sm:$0xff]
      %v2706 = vld [vmem:[#allocation2 + $0x12a] sm:$0xff]
      %v2707 = vld [vmem:[#allocation2 + $0x13a] sm:$0xff]
      %v2708 = vld [vmem:[#allocation2 + $0x142] sm:$0xff]
      %v2709 = vld [vmem:[#allocation2 + $0x152] sm:$0xff]
      %v2710 = vld [vmem:[#allocation2 + $0x15a] sm:$0xff]
      %v2711 = vld [vmem:[#allocation2 + $0x16a] sm:$0xff]
      %v2712 = vld [vmem:[#allocation2 + $0x172] sm:$0xff]
      %2745 = vrot.lane.b32.xlu0 %v2649, 8
      %v2746 = vpop.permute.xlu0 %2745
      %2747 = vrot.lane.b32.xlu0 %v2650, 8
      %v2748 = vpop.permute.xlu0 %2747
      %2749 = vrot.lane.b32.xlu0 %v2651, 8
      %v2750 = vpop.permute.xlu0 %2749
      %2751 = vrot.lane.b32.xlu0 %v2652, 8
      %v2752 = vpop.permute.xlu0 %2751
      %2753 = vrot.lane.b32.xlu0 %v2653, 8
      %v2754 = vpop.permute.xlu0 %2753
      %2755 = vrot.lane.b32.xlu0 %v2654, 8
      %v2756 = vpop.permute.xlu0 %2755
      %2757 = vrot.lane.b32.xlu0 %v2655, 8
      %v2758 = vpop.permute.xlu0 %2757
      %2759 = vrot.lane.b32.xlu0 %v2656, 8
      %v2760 = vpop.permute.xlu0 %2759
      %2761 = vrot.lane.b32.xlu0 %v2657, 8
      %v2762 = vpop.permute.xlu0 %2761
      %2763 = vrot.lane.b32.xlu0 %v2658, 8
      %v2764 = vpop.permute.xlu0 %2763
      %2765 = vrot.lane.b32.xlu0 %v2659, 8
      %v2766 = vpop.permute.xlu0 %2765
      %2767 = vrot.lane.b32.xlu0 %v2660, 8
      %v2768 = vpop.permute.xlu0 %2767
      %2769 = vrot.lane.b32.xlu0 %v2661, 8
      %v2770 = vpop.permute.xlu0 %2769
      %2771 = vrot.lane.b32.xlu0 %v2662, 8
      %v2772 = vpop.permute.xlu0 %2771
      %2773 = vrot.lane.b32.xlu0 %v2663, 8
      %v2774 = vpop.permute.xlu0 %2773
      %2775 = vrot.lane.b32.xlu0 %v2664, 8
      %v2776 = vpop.permute.xlu0 %2775
      %2777 = vrot.lane.b32.xlu0 %v2665, 8
      %v2778 = vpop.permute.xlu0 %2777
      %2779 = vrot.lane.b32.xlu0 %v2666, 8
      %v2780 = vpop.permute.xlu0 %2779
      %2781 = vrot.lane.b32.xlu0 %v2667, 8
      %v2782 = vpop.permute.xlu0 %2781
      %2783 = vrot.lane.b32.xlu0 %v2668, 8
      %v2784 = vpop.permute.xlu0 %2783
      %2785 = vrot.lane.b32.xlu0 %v2669, 8
      %v2786 = vpop.permute.xlu0 %2785
      %2787 = vrot.lane.b32.xlu0 %v2670, 8
      %v2788 = vpop.permute.xlu0 %2787
      %2789 = vrot.lane.b32.xlu0 %v2671, 8
      %v2790 = vpop.permute.xlu0 %2789
      %2791 = vrot.lane.b32.xlu0 %v2672, 8
      %v2792 = vpop.permute.xlu0 %2791
      %2793 = vrot.lane.b32.xlu0 %v2673, 8
      %v2794 = vpop.permute.xlu0 %2793
      %2795 = vrot.lane.b32.xlu0 %v2674, 8
      %v2796 = vpop.permute.xlu0 %2795
      %2797 = vrot.lane.b32.xlu0 %v2675, 8
      %v2798 = vpop.permute.xlu0 %2797
      %2799 = vrot.lane.b32.xlu0 %v2676, 8
      %v2800 = vpop.permute.xlu0 %2799
      %2801 = vrot.lane.b32.xlu0 %v2677, 8
      %v2802 = vpop.permute.xlu0 %2801
      %2803 = vrot.lane.b32.xlu0 %v2678, 8
      %v2804 = vpop.permute.xlu0 %2803
      %2805 = vrot.lane.b32.xlu0 %v2679, 8
      %v2806 = vpop.permute.xlu0 %2805
      %2807 = vrot.lane.b32.xlu0 %v2680, 8
      %v2808 = vpop.permute.xlu0 %2807
      %2873 = vrot.lane.b32.xlu0 %v2681, 16
      %v2874 = vpop.permute.xlu0 %2873
      %2875 = vrot.lane.b32.xlu0 %v2682, 16
      %v2876 = vpop.permute.xlu0 %2875
      %2877 = vrot.lane.b32.xlu0 %v2683, 16
      %v2878 = vpop.permute.xlu0 %2877
      %2879 = vrot.lane.b32.xlu0 %v2684, 16
      %v2880 = vpop.permute.xlu0 %2879
      %2881 = vrot.lane.b32.xlu0 %v2685, 16
      %v2882 = vpop.permute.xlu0 %2881
      %2883 = vrot.lane.b32.xlu0 %v2686, 16
      %v2884 = vpop.permute.xlu0 %2883
      %2885 = vrot.lane.b32.xlu0 %v2687, 16
      %v2886 = vpop.permute.xlu0 %2885
      %2887 = vrot.lane.b32.xlu0 %v2688, 16
      %v2888 = vpop.permute.xlu0 %2887
      %2889 = vrot.lane.b32.xlu0 %v2689, 16
      %v2890 = vpop.permute.xlu0 %2889
      %2891 = vrot.lane.b32.xlu0 %v2690, 16
      %v2892 = vpop.permute.xlu0 %2891
      %2893 = vrot.lane.b32.xlu0 %v2691, 16
      %v2894 = vpop.permute.xlu0 %2893
      %2895 = vrot.lane.b32.xlu0 %v2692, 16
      %v2896 = vpop.permute.xlu0 %2895
      %2897 = vrot.lane.b32.xlu0 %v2693, 16
      %v2898 = vpop.permute.xlu0 %2897
      %2899 = vrot.lane.b32.xlu0 %v2694, 16
      %v2900 = vpop.permute.xlu0 %2899
      %2901 = vrot.lane.b32.xlu0 %v2695, 16
      %v2902 = vpop.permute.xlu0 %2901
      %2903 = vrot.lane.b32.xlu0 %v2696, 16
      %v2904 = vpop.permute.xlu0 %2903
      %2905 = vrot.lane.b32.xlu0 %v2697, 16
      %v2906 = vpop.permute.xlu0 %2905
      %2907 = vrot.lane.b32.xlu0 %v2698, 16
      %v2908 = vpop.permute.xlu0 %2907
      %2909 = vrot.lane.b32.xlu0 %v2699, 16
      %v2910 = vpop.permute.xlu0 %2909
      %2911 = vrot.lane.b32.xlu0 %v2700, 16
      %v2912 = vpop.permute.xlu0 %2911
      %2913 = vrot.lane.b32.xlu0 %v2701, 16
      %v2914 = vpop.permute.xlu0 %2913
      %2915 = vrot.lane.b32.xlu0 %v2702, 16
      %v2916 = vpop.permute.xlu0 %2915
      %2917 = vrot.lane.b32.xlu0 %v2703, 16
      %v2918 = vpop.permute.xlu0 %2917
      %2919 = vrot.lane.b32.xlu0 %v2704, 16
      %v2920 = vpop.permute.xlu0 %2919
      %2921 = vrot.lane.b32.xlu0 %v2705, 16
      %v2922 = vpop.permute.xlu0 %2921
      %2923 = vrot.lane.b32.xlu0 %v2706, 16
      %v2924 = vpop.permute.xlu0 %2923
      %2925 = vrot.lane.b32.xlu0 %v2707, 16
      %v2926 = vpop.permute.xlu0 %2925
      %2927 = vrot.lane.b32.xlu0 %v2708, 16
      %v2928 = vpop.permute.xlu0 %2927
      %2929 = vrot.lane.b32.xlu0 %v2709, 16
      %v2930 = vpop.permute.xlu0 %2929
      %2931 = vrot.lane.b32.xlu0 %v2710, 16
      %v2932 = vpop.permute.xlu0 %2931
      %2933 = vrot.lane.b32.xlu0 %v2711, 16
      %v2934 = vpop.permute.xlu0 %2933
      %2935 = vrot.lane.b32.xlu0 %v2712, 16
      %v2936 = vpop.permute.xlu0 %2935
      %v2969 = vsel %vm313, %v2617, %v2746
      %v2970 = vsel %vm313, %v2618, %v2748
      %v2971 = vsel %vm313, %v2619, %v2750
      %v2972 = vsel %vm313, %v2620, %v2752
      %v2973 = vsel %vm313, %v2621, %v2754
      %v2974 = vsel %vm313, %v2622, %v2756
      %v2975 = vsel %vm313, %v2623, %v2758
      %v2976 = vsel %vm313, %v2624, %v2760
      %v2977 = vsel %vm313, %v2625, %v2762
      %v2978 = vsel %vm313, %v2626, %v2764
      %v2979 = vsel %vm313, %v2627, %v2766
      %v2980 = vsel %vm313, %v2628, %v2768
      %v2981 = vsel %vm313, %v2629, %v2770
      %v2982 = vsel %vm313, %v2630, %v2772
      %v2983 = vsel %vm313, %v2631, %v2774
      %v2984 = vsel %vm313, %v2632, %v2776
      %v2985 = vsel %vm313, %v2633, %v2778
      %v2986 = vsel %vm313, %v2634, %v2780
      %v2987 = vsel %vm313, %v2635, %v2782
      %v2988 = vsel %vm313, %v2636, %v2784
      %v2989 = vsel %vm313, %v2637, %v2786
      %v2990 = vsel %vm313, %v2638, %v2788
      %v2991 = vsel %vm313, %v2639, %v2790
      %v2992 = vsel %vm313, %v2640, %v2792
      %v2993 = vsel %vm313, %v2641, %v2794
      %v2994 = vsel %vm313, %v2642, %v2796
      %v2995 = vsel %vm313, %v2643, %v2798
      %v2996 = vsel %vm313, %v2644, %v2800
      %v2997 = vsel %vm313, %v2645, %v2802
      %v2998 = vsel %vm313, %v2646, %v2804
      %v2999 = vsel %vm313, %v2647, %v2806
      %v3000 = vsel %vm313, %v2648, %v2808
      %v3001 = vsel %vm810, %v2969, %v2874
      %v3002 = vsel %vm810, %v2970, %v2876
      %v3003 = vsel %vm810, %v2971, %v2878
      %v3004 = vsel %vm810, %v2972, %v2880
      %v3005 = vsel %vm810, %v2973, %v2882
      %v3006 = vsel %vm810, %v2974, %v2884
      %v3007 = vsel %vm810, %v2975, %v2886
      %v3008 = vsel %vm810, %v2976, %v2888
      %v3009 = vsel %vm810, %v2977, %v2890
      %v3010 = vsel %vm810, %v2978, %v2892
      %v3011 = vsel %vm810, %v2979, %v2894
      %v3012 = vsel %vm810, %v2980, %v2896
      %v3013 = vsel %vm810, %v2981, %v2898
      %v3014 = vsel %vm810, %v2982, %v2900
      %v3015 = vsel %vm810, %v2983, %v2902
      %v3016 = vsel %vm810, %v2984, %v2904
      %v3017 = vsel %vm810, %v2985, %v2906
      %v3018 = vsel %vm810, %v2986, %v2908
      %v3019 = vsel %vm810, %v2987, %v2910
      %v3020 = vsel %vm810, %v2988, %v2912
      %v3021 = vsel %vm810, %v2989, %v2914
      %v3022 = vsel %vm810, %v2990, %v2916
      %v3023 = vsel %vm810, %v2991, %v2918
      %v3024 = vsel %vm810, %v2992, %v2920
      %v3025 = vsel %vm810, %v2993, %v2922
      %v3026 = vsel %vm810, %v2994, %v2924
      %v3027 = vsel %vm810, %v2995, %v2926
      %v3028 = vsel %vm810, %v2996, %v2928
      %v3029 = vsel %vm810, %v2997, %v2930
      %v3030 = vsel %vm810, %v2998, %v2932
      %v3031 = vsel %vm810, %v2999, %v2934
      %v3032 = vsel %vm810, %v3000, %v2936
      %v3033 = vpack.c.bf16 %v3002, %v3001
      %v3034 = vpack.c.bf16 %v3004, %v3003
      %v3035 = vpack.c.bf16 %v3006, %v3005
      %v3036 = vpack.c.bf16 %v3008, %v3007
      %v3037 = vpack.c.bf16 %v3010, %v3009
      %v3038 = vpack.c.bf16 %v3012, %v3011
      %v3039 = vpack.c.bf16 %v3014, %v3013
      %v3040 = vpack.c.bf16 %v3016, %v3015
      %v3041 = vpack.c.bf16 %v3018, %v3017
      %v3042 = vpack.c.bf16 %v3020, %v3019
      %v3043 = vpack.c.bf16 %v3022, %v3021
      %v3044 = vpack.c.bf16 %v3024, %v3023
      %v3045 = vpack.c.bf16 %v3026, %v3025
      %v3046 = vpack.c.bf16 %v3028, %v3027
      %v3047 = vpack.c.bf16 %v3030, %v3029
      %v3048 = vpack.c.bf16 %v3032, %v3031
      %v3049 = vld [vmem:[%s4] sm:$0xf]
      %v3050 = vld [vmem:[%s4 + $0x4] sm:$0xf]
      %v3051 = vld [vmem:[%s4 + $0x8] sm:$0xf]
      %v3052 = vld [vmem:[%s312] sm:$0xff]
      %v3053 = vld [vmem:[%s312 + $0x8] sm:$0xff]
      %v3054 = vld [vmem:[%s312 + $0x18] sm:$0xff]
      %v3055 = vld [vmem:[%s312 + $0x20] sm:$0xff]
      %v3056 = vld [vmem:[%s312 + $0x30] sm:$0xff]
      %v3057 = vld [vmem:[%s312 + $0x38] sm:$0xff]
      %v3058 = vld [vmem:[%s312 + $0x48] sm:$0xff]
      %v3059 = vld [vmem:[%s312 + $0x50] sm:$0xff]
      %v3060 = vld [vmem:[%s312 + $0x60] sm:$0xff]
      %v3061 = vld [vmem:[%s312 + $0x68] sm:$0xff]
      %v3062 = vld [vmem:[%s312 + $0x78] sm:$0xff]
      %v3063 = vld [vmem:[%s312 + $0x80] sm:$0xff]
      %v3064 = vld [vmem:[%s312 + $0x90] sm:$0xff]
      %v3065 = vld [vmem:[%s312 + $0x98] sm:$0xff]
      %v3066 = vld [vmem:[%s312 + $0xa8] sm:$0xff]
      %v3067 = vld [vmem:[%s312 + $0xb0] sm:$0xff]
      %v3068 = vld [vmem:[%s312 + $0xc0] sm:$0xff]
      %v3069 = vld [vmem:[%s312 + $0xc8] sm:$0xff]
      %v3070 = vld [vmem:[%s312 + $0xd8] sm:$0xff]
      %v3071 = vld [vmem:[%s312 + $0xe0] sm:$0xff]
      %v3072 = vld [vmem:[%s312 + $0xf0] sm:$0xff]
      %v3073 = vld [vmem:[%s312 + $0xf8] sm:$0xff]
      %v3074 = vld [vmem:[%s312 + $0x108] sm:$0xff]
      %v3075 = vld [vmem:[%s312 + $0x110] sm:$0xff]
      %v3076 = vld [vmem:[%s312 + $0x120] sm:$0xff]
      %v3077 = vld [vmem:[%s312 + $0x128] sm:$0xff]
      %v3078 = vld [vmem:[%s312 + $0x138] sm:$0xff]
      %v3079 = vld [vmem:[%s312 + $0x140] sm:$0xff]
      %v3080 = vld [vmem:[%s312 + $0x150] sm:$0xff]
      %v3081 = vld [vmem:[%s312 + $0x158] sm:$0xff]
      %v3082 = vld [vmem:[%s312 + $0x168] sm:$0xff]
      %v3083 = vld [vmem:[%s312 + $0x170] sm:$0xff]
      %v3084 = vld [vmem:[%s312 + $0x1] sm:$0xff]
      %v3085 = vld [vmem:[%s312 + $0x9] sm:$0xff]
      %v3086 = vld [vmem:[%s312 + $0x19] sm:$0xff]
      %v3087 = vld [vmem:[%s312 + $0x21] sm:$0xff]
      %v3088 = vld [vmem:[%s312 + $0x31] sm:$0xff]
      %v3089 = vld [vmem:[%s312 + $0x39] sm:$0xff]
      %v3090 = vld [vmem:[%s312 + $0x49] sm:$0xff]
      %v3091 = vld [vmem:[%s312 + $0x51] sm:$0xff]
      %v3092 = vld [vmem:[%s312 + $0x61] sm:$0xff]
      %v3093 = vld [vmem:[%s312 + $0x69] sm:$0xff]
      %v3094 = vld [vmem:[%s312 + $0x79] sm:$0xff]
      %v3095 = vld [vmem:[%s312 + $0x81] sm:$0xff]
      %v3096 = vld [vmem:[%s312 + $0x91] sm:$0xff]
      %v3097 = vld [vmem:[%s312 + $0x99] sm:$0xff]
      %v3098 = vld [vmem:[%s312 + $0xa9] sm:$0xff]
      %v3099 = vld [vmem:[%s312 + $0xb1] sm:$0xff]
      %v3100 = vld [vmem:[%s312 + $0xc1] sm:$0xff]
      %v3101 = vld [vmem:[%s312 + $0xc9] sm:$0xff]
      %v3102 = vld [vmem:[%s312 + $0xd9] sm:$0xff]
      %v3103 = vld [vmem:[%s312 + $0xe1] sm:$0xff]
      %v3104 = vld [vmem:[%s312 + $0xf1] sm:$0xff]
      %v3105 = vld [vmem:[%s312 + $0xf9] sm:$0xff]
      %v3106 = vld [vmem:[%s312 + $0x109] sm:$0xff]
      %v3107 = vld [vmem:[%s312 + $0x111] sm:$0xff]
      %v3108 = vld [vmem:[%s312 + $0x121] sm:$0xff]
      %v3109 = vld [vmem:[%s312 + $0x129] sm:$0xff]
      %v3110 = vld [vmem:[%s312 + $0x139] sm:$0xff]
      %v3111 = vld [vmem:[%s312 + $0x141] sm:$0xff]
      %v3112 = vld [vmem:[%s312 + $0x151] sm:$0xff]
      %v3113 = vld [vmem:[%s312 + $0x159] sm:$0xff]
      %v3114 = vld [vmem:[%s312 + $0x169] sm:$0xff]
      %v3115 = vld [vmem:[%s312 + $0x171] sm:$0xff]
      %v3116 = vld [vmem:[%s312 + $0x2] sm:$0xff]
      %v3117 = vld [vmem:[%s312 + $0xa] sm:$0xff]
      %v3118 = vld [vmem:[%s312 + $0x1a] sm:$0xff]
      %v3119 = vld [vmem:[%s312 + $0x22] sm:$0xff]
      %v3120 = vld [vmem:[%s312 + $0x32] sm:$0xff]
      %v3121 = vld [vmem:[%s312 + $0x3a] sm:$0xff]
      %v3122 = vld [vmem:[%s312 + $0x4a] sm:$0xff]
      %v3123 = vld [vmem:[%s312 + $0x52] sm:$0xff]
      %v3124 = vld [vmem:[%s312 + $0x62] sm:$0xff]
      %v3125 = vld [vmem:[%s312 + $0x6a] sm:$0xff]
      %v3126 = vld [vmem:[%s312 + $0x7a] sm:$0xff]
      %v3127 = vld [vmem:[%s312 + $0x82] sm:$0xff]
      %v3128 = vld [vmem:[%s312 + $0x92] sm:$0xff]
      %v3129 = vld [vmem:[%s312 + $0x9a] sm:$0xff]
      %v3130 = vld [vmem:[%s312 + $0xaa] sm:$0xff]
      %v3131 = vld [vmem:[%s312 + $0xb2] sm:$0xff]
      %v3132 = vld [vmem:[%s312 + $0xc2] sm:$0xff]
      %v3133 = vld [vmem:[%s312 + $0xca] sm:$0xff]
      %v3134 = vld [vmem:[%s312 + $0xda] sm:$0xff]
      %v3135 = vld [vmem:[%s312 + $0xe2] sm:$0xff]
      %v3136 = vld [vmem:[%s312 + $0xf2] sm:$0xff]
      %v3137 = vld [vmem:[%s312 + $0xfa] sm:$0xff]
      %v3138 = vld [vmem:[%s312 + $0x10a] sm:$0xff]
      %v3139 = vld [vmem:[%s312 + $0x112] sm:$0xff]
      %v3140 = vld [vmem:[%s312 + $0x122] sm:$0xff]
      %v3141 = vld [vmem:[%s312 + $0x12a] sm:$0xff]
      %v3142 = vld [vmem:[%s312 + $0x13a] sm:$0xff]
      %v3143 = vld [vmem:[%s312 + $0x142] sm:$0xff]
      %v3144 = vld [vmem:[%s312 + $0x152] sm:$0xff]
      %v3145 = vld [vmem:[%s312 + $0x15a] sm:$0xff]
      %v3146 = vld [vmem:[%s312 + $0x16a] sm:$0xff]
      %v3147 = vld [vmem:[%s312 + $0x172] sm:$0xff]
      %3180 = vrot.lane.b32.xlu0 %v3084, 8
      %v3181 = vpop.permute.xlu0 %3180
      %3182 = vrot.lane.b32.xlu0 %v3085, 8
      %v3183 = vpop.permute.xlu0 %3182
      %3184 = vrot.lane.b32.xlu0 %v3086, 8
      %v3185 = vpop.permute.xlu0 %3184
      %3186 = vrot.lane.b32.xlu0 %v3087, 8
      %v3187 = vpop.permute.xlu0 %3186
      %3188 = vrot.lane.b32.xlu0 %v3088, 8
      %v3189 = vpop.permute.xlu0 %3188
      %3190 = vrot.lane.b32.xlu0 %v3089, 8
      %v3191 = vpop.permute.xlu0 %3190
      %3192 = vrot.lane.b32.xlu0 %v3090, 8
      %v3193 = vpop.permute.xlu0 %3192
      %3194 = vrot.lane.b32.xlu0 %v3091, 8
      %v3195 = vpop.permute.xlu0 %3194
      %3196 = vrot.lane.b32.xlu0 %v3092, 8
      %v3197 = vpop.permute.xlu0 %3196
      %3198 = vrot.lane.b32.xlu0 %v3093, 8
      %v3199 = vpop.permute.xlu0 %3198
      %3200 = vrot.lane.b32.xlu0 %v3094, 8
      %v3201 = vpop.permute.xlu0 %3200
      %3202 = vrot.lane.b32.xlu0 %v3095, 8
      %v3203 = vpop.permute.xlu0 %3202
      %3204 = vrot.lane.b32.xlu0 %v3096, 8
      %v3205 = vpop.permute.xlu0 %3204
      %3206 = vrot.lane.b32.xlu0 %v3097, 8
      %v3207 = vpop.permute.xlu0 %3206
      %3208 = vrot.lane.b32.xlu0 %v3098, 8
      %v3209 = vpop.permute.xlu0 %3208
      %3210 = vrot.lane.b32.xlu0 %v3099, 8
      %v3211 = vpop.permute.xlu0 %3210
      %3212 = vrot.lane.b32.xlu0 %v3100, 8
      %v3213 = vpop.permute.xlu0 %3212
      %3214 = vrot.lane.b32.xlu0 %v3101, 8
      %v3215 = vpop.permute.xlu0 %3214
      %3216 = vrot.lane.b32.xlu0 %v3102, 8
      %v3217 = vpop.permute.xlu0 %3216
      %3218 = vrot.lane.b32.xlu0 %v3103, 8
      %v3219 = vpop.permute.xlu0 %3218
      %3220 = vrot.lane.b32.xlu0 %v3104, 8
      %v3221 = vpop.permute.xlu0 %3220
      %3222 = vrot.lane.b32.xlu0 %v3105, 8
      %v3223 = vpop.permute.xlu0 %3222
      %3224 = vrot.lane.b32.xlu0 %v3106, 8
      %v3225 = vpop.permute.xlu0 %3224
      %3226 = vrot.lane.b32.xlu0 %v3107, 8
      %v3227 = vpop.permute.xlu0 %3226
      %3228 = vrot.lane.b32.xlu0 %v3108, 8
      %v3229 = vpop.permute.xlu0 %3228
      %3230 = vrot.lane.b32.xlu0 %v3109, 8
      %v3231 = vpop.permute.xlu0 %3230
      %3232 = vrot.lane.b32.xlu0 %v3110, 8
      %v3233 = vpop.permute.xlu0 %3232
      %3234 = vrot.lane.b32.xlu0 %v3111, 8
      %v3235 = vpop.permute.xlu0 %3234
      %3236 = vrot.lane.b32.xlu0 %v3112, 8
      %v3237 = vpop.permute.xlu0 %3236
      %3238 = vrot.lane.b32.xlu0 %v3113, 8
      %v3239 = vpop.permute.xlu0 %3238
      %3240 = vrot.lane.b32.xlu0 %v3114, 8
      %v3241 = vpop.permute.xlu0 %3240
      %3242 = vrot.lane.b32.xlu0 %v3115, 8
      %v3243 = vpop.permute.xlu0 %3242
      %3308 = vrot.lane.b32.xlu0 %v3116, 16
      %v3309 = vpop.permute.xlu0 %3308
      %3310 = vrot.lane.b32.xlu0 %v3117, 16
      %v3311 = vpop.permute.xlu0 %3310
      %3312 = vrot.lane.b32.xlu0 %v3118, 16
      %v3313 = vpop.permute.xlu0 %3312
      %3314 = vrot.lane.b32.xlu0 %v3119, 16
      %v3315 = vpop.permute.xlu0 %3314
      %3316 = vrot.lane.b32.xlu0 %v3120, 16
      %v3317 = vpop.permute.xlu0 %3316
      %3318 = vrot.lane.b32.xlu0 %v3121, 16
      %v3319 = vpop.permute.xlu0 %3318
      %3320 = vrot.lane.b32.xlu0 %v3122, 16
      %v3321 = vpop.permute.xlu0 %3320
      %3322 = vrot.lane.b32.xlu0 %v3123, 16
      %v3323 = vpop.permute.xlu0 %3322
      %3324 = vrot.lane.b32.xlu0 %v3124, 16
      %v3325 = vpop.permute.xlu0 %3324
      %3326 = vrot.lane.b32.xlu0 %v3125, 16
      %v3327 = vpop.permute.xlu0 %3326
      %3328 = vrot.lane.b32.xlu0 %v3126, 16
      %v3329 = vpop.permute.xlu0 %3328
      %3330 = vrot.lane.b32.xlu0 %v3127, 16
      %v3331 = vpop.permute.xlu0 %3330
      %3332 = vrot.lane.b32.xlu0 %v3128, 16
      %v3333 = vpop.permute.xlu0 %3332
      %3334 = vrot.lane.b32.xlu0 %v3129, 16
      %v3335 = vpop.permute.xlu0 %3334
      %3336 = vrot.lane.b32.xlu0 %v3130, 16
      %v3337 = vpop.permute.xlu0 %3336
      %3338 = vrot.lane.b32.xlu0 %v3131, 16
      %v3339 = vpop.permute.xlu0 %3338
      %3340 = vrot.lane.b32.xlu0 %v3132, 16
      %v3341 = vpop.permute.xlu0 %3340
      %3342 = vrot.lane.b32.xlu0 %v3133, 16
      %v3343 = vpop.permute.xlu0 %3342
      %3344 = vrot.lane.b32.xlu0 %v3134, 16
      %v3345 = vpop.permute.xlu0 %3344
      %3346 = vrot.lane.b32.xlu0 %v3135, 16
      %v3347 = vpop.permute.xlu0 %3346
      %3348 = vrot.lane.b32.xlu0 %v3136, 16
      %v3349 = vpop.permute.xlu0 %3348
      %3350 = vrot.lane.b32.xlu0 %v3137, 16
      %v3351 = vpop.permute.xlu0 %3350
      %3352 = vrot.lane.b32.xlu0 %v3138, 16
      %v3353 = vpop.permute.xlu0 %3352
      %3354 = vrot.lane.b32.xlu0 %v3139, 16
      %v3355 = vpop.permute.xlu0 %3354
      %3356 = vrot.lane.b32.xlu0 %v3140, 16
      %v3357 = vpop.permute.xlu0 %3356
      %3358 = vrot.lane.b32.xlu0 %v3141, 16
      %v3359 = vpop.permute.xlu0 %3358
      %3360 = vrot.lane.b32.xlu0 %v3142, 16
      %v3361 = vpop.permute.xlu0 %3360
      %3362 = vrot.lane.b32.xlu0 %v3143, 16
      %v3363 = vpop.permute.xlu0 %3362
      %3364 = vrot.lane.b32.xlu0 %v3144, 16
      %v3365 = vpop.permute.xlu0 %3364
      %3366 = vrot.lane.b32.xlu0 %v3145, 16
      %v3367 = vpop.permute.xlu0 %3366
      %3368 = vrot.lane.b32.xlu0 %v3146, 16
      %v3369 = vpop.permute.xlu0 %3368
      %3370 = vrot.lane.b32.xlu0 %v3147, 16
      %v3371 = vpop.permute.xlu0 %3370
      %v3404 = vsel %vm313, %v3052, %v3181
      %v3405 = vsel %vm313, %v3053, %v3183
      %v3406 = vsel %vm313, %v3054, %v3185
      %v3407 = vsel %vm313, %v3055, %v3187
      %v3408 = vsel %vm313, %v3056, %v3189
      %v3409 = vsel %vm313, %v3057, %v3191
      %v3410 = vsel %vm313, %v3058, %v3193
      %v3411 = vsel %vm313, %v3059, %v3195
      %v3412 = vsel %vm313, %v3060, %v3197
      %v3413 = vsel %vm313, %v3061, %v3199
      %v3414 = vsel %vm313, %v3062, %v3201
      %v3415 = vsel %vm313, %v3063, %v3203
      %v3416 = vsel %vm313, %v3064, %v3205
      %v3417 = vsel %vm313, %v3065, %v3207
      %v3418 = vsel %vm313, %v3066, %v3209
      %v3419 = vsel %vm313, %v3067, %v3211
      %v3420 = vsel %vm313, %v3068, %v3213
      %v3421 = vsel %vm313, %v3069, %v3215
      %v3422 = vsel %vm313, %v3070, %v3217
      %v3423 = vsel %vm313, %v3071, %v3219
      %v3424 = vsel %vm313, %v3072, %v3221
      %v3425 = vsel %vm313, %v3073, %v3223
      %v3426 = vsel %vm313, %v3074, %v3225
      %v3427 = vsel %vm313, %v3075, %v3227
      %v3428 = vsel %vm313, %v3076, %v3229
      %v3429 = vsel %vm313, %v3077, %v3231
      %v3430 = vsel %vm313, %v3078, %v3233
      %v3431 = vsel %vm313, %v3079, %v3235
      %v3432 = vsel %vm313, %v3080, %v3237
      %v3433 = vsel %vm313, %v3081, %v3239
      %v3434 = vsel %vm313, %v3082, %v3241
      %v3435 = vsel %vm313, %v3083, %v3243
      %v3436 = vsel %vm810, %v3404, %v3309
      %v3437 = vsel %vm810, %v3405, %v3311
      %v3438 = vsel %vm810, %v3406, %v3313
      %v3439 = vsel %vm810, %v3407, %v3315
      %v3440 = vsel %vm810, %v3408, %v3317
      %v3441 = vsel %vm810, %v3409, %v3319
      %v3442 = vsel %vm810, %v3410, %v3321
      %v3443 = vsel %vm810, %v3411, %v3323
      %v3444 = vsel %vm810, %v3412, %v3325
      %v3445 = vsel %vm810, %v3413, %v3327
      %v3446 = vsel %vm810, %v3414, %v3329
      %v3447 = vsel %vm810, %v3415, %v3331
      %v3448 = vsel %vm810, %v3416, %v3333
      %v3449 = vsel %vm810, %v3417, %v3335
      %v3450 = vsel %vm810, %v3418, %v3337
      %v3451 = vsel %vm810, %v3419, %v3339
      %v3452 = vsel %vm810, %v3420, %v3341
      %v3453 = vsel %vm810, %v3421, %v3343
      %v3454 = vsel %vm810, %v3422, %v3345
      %v3455 = vsel %vm810, %v3423, %v3347
      %v3456 = vsel %vm810, %v3424, %v3349
      %v3457 = vsel %vm810, %v3425, %v3351
      %v3458 = vsel %vm810, %v3426, %v3353
      %v3459 = vsel %vm810, %v3427, %v3355
      %v3460 = vsel %vm810, %v3428, %v3357
      %v3461 = vsel %vm810, %v3429, %v3359
      %v3462 = vsel %vm810, %v3430, %v3361
      %v3463 = vsel %vm810, %v3431, %v3363
      %v3464 = vsel %vm810, %v3432, %v3365
      %v3465 = vsel %vm810, %v3433, %v3367
      %v3466 = vsel %vm810, %v3434, %v3369
      %v3467 = vsel %vm810, %v3435, %v3371
      %v3468 = vpack.c.bf16 %v3437, %v3436
      %v3469 = vpack.c.bf16 %v3439, %v3438
      %v3470 = vpack.c.bf16 %v3441, %v3440
      %v3471 = vpack.c.bf16 %v3443, %v3442
      %v3472 = vpack.c.bf16 %v3445, %v3444
      %v3473 = vpack.c.bf16 %v3447, %v3446
      %v3474 = vpack.c.bf16 %v3449, %v3448
      %v3475 = vpack.c.bf16 %v3451, %v3450
      %v3476 = vpack.c.bf16 %v3453, %v3452
      %v3477 = vpack.c.bf16 %v3455, %v3454
      %v3478 = vpack.c.bf16 %v3457, %v3456
      %v3479 = vpack.c.bf16 %v3459, %v3458
      %v3480 = vpack.c.bf16 %v3461, %v3460
      %v3481 = vpack.c.bf16 %v3463, %v3462
      %v3482 = vpack.c.bf16 %v3465, %v3464
      %v3483 = vpack.c.bf16 %v3467, %v3466
      %s3484 = scalar_lea.vmem %s4, 12
      %v3485 = vld [vmem:[%s3484] sm:$0xf]
      %v3486 = vld [vmem:[%s3484 + $0x4] sm:$0xf]
      %v3487 = vld [vmem:[%s3484 + $0x8] sm:$0xf]
      %v3491 = vunpack.c.l.b16 %v3485
      %v3492 = vunpack.c.l.b16 %v3486
      %v3493 = vunpack.c.l.b16 %v3487
      %v3494 = vpack.c.b16 %v3492, %v3491
      %v3495 = vpack.c.b16 %v3493, %v3493
      %v3498 = vsel %vm1307, %v3468, 0
      %v3501 = vsel %vm1307, %v3469, 0
      %v3504 = vsel %vm1307, %v3470, 0
      %v3507 = vsel %vm1307, %v3471, 0
      %v3510 = vsel %vm1307, %v3472, 0
      %v3513 = vsel %vm1307, %v3473, 0
      %v3516 = vsel %vm1307, %v3474, 0
      %v3519 = vsel %vm1307, %v3475, 0
      %v3522 = vsel %vm1307, %v3476, 0
      %v3525 = vsel %vm1307, %v3477, 0
      %v3528 = vsel %vm1307, %v3478, 0
      %v3531 = vsel %vm1307, %v3479, 0
      %v3534 = vsel %vm1307, %v3480, 0
      %v3537 = vsel %vm1307, %v3481, 0
      %v3540 = vsel %vm1307, %v3482, 0
      %v3543 = vsel %vm1307, %v3483, 0
      %v3546 = vsel %vm1356, %v3495, 0
      %3548 = vmatpush.bf16.msra.mxu0 0
      %3549 = vmatpush.bf16.msra.mxu0 0
      %3550 = vmatpush.bf16.msra.mxu0 0
      %3551 = vmatpush.bf16.msra.mxu0 0
      %3552 = vmatpush.bf16.msra.mxu0 0
      %3553 = vmatpush.bf16.msra.mxu0 0
      %3554 = vmatpush.bf16.msra.mxu0 %v3546
      %3555 = vmatpush.bf16.msra.mxu0 %v3494
      %3556 = vmatmul.bf16.gmra.mxu0 %v3498
      %v3557 = vpop.f32.mrf.mxu0
      %v3558 = vadd.f32 0.0, %v3557
      %v3559 = vpop.f32.mrf.mxu0
      %v3560 = vadd.f32 0.0, %v3559
      %3561 = vmatmul.bf16.gmra.mxu0 %v3501
      %v3562 = vpop.f32.mrf.mxu0
      %v3563 = vadd.f32 0.0, %v3562
      %v3564 = vpop.f32.mrf.mxu0
      %v3565 = vadd.f32 0.0, %v3564
      %3566 = vmatmul.bf16.gmra.mxu0 %v3504
      %v3567 = vpop.f32.mrf.mxu0
      %v3568 = vadd.f32 0.0, %v3567
      %v3569 = vpop.f32.mrf.mxu0
      %v3570 = vadd.f32 0.0, %v3569
      %3571 = vmatmul.bf16.gmra.mxu0 %v3507
      %v3572 = vpop.f32.mrf.mxu0
      %v3573 = vadd.f32 0.0, %v3572
      %v3574 = vpop.f32.mrf.mxu0
      %v3575 = vadd.f32 0.0, %v3574
      %3576 = vmatmul.bf16.gmra.mxu0 %v3510
      %v3577 = vpop.f32.mrf.mxu0
      %v3578 = vadd.f32 0.0, %v3577
      %v3579 = vpop.f32.mrf.mxu0
      %v3580 = vadd.f32 0.0, %v3579
      %3581 = vmatmul.bf16.gmra.mxu0 %v3513
      %v3582 = vpop.f32.mrf.mxu0
      %v3583 = vadd.f32 0.0, %v3582
      %v3584 = vpop.f32.mrf.mxu0
      %v3585 = vadd.f32 0.0, %v3584
      %3586 = vmatmul.bf16.gmra.mxu0 %v3516
      %v3587 = vpop.f32.mrf.mxu0
      %v3588 = vadd.f32 0.0, %v3587
      %v3589 = vpop.f32.mrf.mxu0
      %v3590 = vadd.f32 0.0, %v3589
      %3591 = vmatmul.bf16.gmra.mxu0 %v3519
      %v3592 = vpop.f32.mrf.mxu0
      %v3593 = vadd.f32 0.0, %v3592
      %v3594 = vpop.f32.mrf.mxu0
      %v3595 = vadd.f32 0.0, %v3594
      %3596 = vmatmul.bf16.gmra.mxu0 %v3522
      %v3597 = vpop.f32.mrf.mxu0
      %v3598 = vadd.f32 0.0, %v3597
      %v3599 = vpop.f32.mrf.mxu0
      %v3600 = vadd.f32 0.0, %v3599
      %3601 = vmatmul.bf16.gmra.mxu0 %v3525
      %v3602 = vpop.f32.mrf.mxu0
      %v3603 = vadd.f32 0.0, %v3602
      %v3604 = vpop.f32.mrf.mxu0
      %v3605 = vadd.f32 0.0, %v3604
      %3606 = vmatmul.bf16.gmra.mxu0 %v3528
      %v3607 = vpop.f32.mrf.mxu0
      %v3608 = vadd.f32 0.0, %v3607
      %v3609 = vpop.f32.mrf.mxu0
      %v3610 = vadd.f32 0.0, %v3609
      %3611 = vmatmul.bf16.gmra.mxu0 %v3531
      %v3612 = vpop.f32.mrf.mxu0
      %v3613 = vadd.f32 0.0, %v3612
      %v3614 = vpop.f32.mrf.mxu0
      %v3615 = vadd.f32 0.0, %v3614
      %3616 = vmatmul.bf16.gmra.mxu0 %v3534
      %v3617 = vpop.f32.mrf.mxu0
      %v3618 = vadd.f32 0.0, %v3617
      %v3619 = vpop.f32.mrf.mxu0
      %v3620 = vadd.f32 0.0, %v3619
      %3621 = vmatmul.bf16.gmra.mxu0 %v3537
      %v3622 = vpop.f32.mrf.mxu0
      %v3623 = vadd.f32 0.0, %v3622
      %v3624 = vpop.f32.mrf.mxu0
      %v3625 = vadd.f32 0.0, %v3624
      %3626 = vmatmul.bf16.gmra.mxu0 %v3540
      %v3627 = vpop.f32.mrf.mxu0
      %v3628 = vadd.f32 0.0, %v3627
      %v3629 = vpop.f32.mrf.mxu0
      %v3630 = vadd.f32 0.0, %v3629
      %3631 = vmatmul.bf16.gmra.mxu0 %v3543
      %v3632 = vpop.f32.mrf.mxu0
      %v3633 = vadd.f32 0.0, %v3632
      %v3634 = vpop.f32.mrf.mxu0
      %v3635 = vadd.f32 0.0, %v3634
      %3636 = vdwg.mxu0
      %v3640 = vunpack.c.l.b16 %v3049
      %v3641 = vunpack.c.l.b16 %v3050
      %v3642 = vunpack.c.l.b16 %v3051
      %v3643 = vpack.c.b16 %v3641, %v3640
      %v3644 = vpack.c.b16 %v3642, %v3642
      %v3647 = vsel %vm1307, %v3033, 0
      %v3650 = vsel %vm1307, %v3034, 0
      %v3653 = vsel %vm1307, %v3035, 0
      %v3656 = vsel %vm1307, %v3036, 0
      %v3659 = vsel %vm1307, %v3037, 0
      %v3662 = vsel %vm1307, %v3038, 0
      %v3665 = vsel %vm1307, %v3039, 0
      %v3668 = vsel %vm1307, %v3040, 0
      %v3671 = vsel %vm1307, %v3041, 0
      %v3674 = vsel %vm1307, %v3042, 0
      %v3677 = vsel %vm1307, %v3043, 0
      %v3680 = vsel %vm1307, %v3044, 0
      %v3683 = vsel %vm1307, %v3045, 0
      %v3686 = vsel %vm1307, %v3046, 0
      %v3689 = vsel %vm1307, %v3047, 0
      %v3692 = vsel %vm1307, %v3048, 0
      %v3695 = vsel %vm1356, %v3644, 0
      %3697 = vmatpush.bf16.msra.mxu0 0
      %3698 = vmatpush.bf16.msra.mxu0 0
      %3699 = vmatpush.bf16.msra.mxu0 0
      %3700 = vmatpush.bf16.msra.mxu0 0
      %3701 = vmatpush.bf16.msra.mxu0 0
      %3702 = vmatpush.bf16.msra.mxu0 0
      %3703 = vmatpush.bf16.msra.mxu0 %v3695
      %3704 = vmatpush.bf16.msra.mxu0 %v3643
      %3705 = vmatmul.bf16.gmra.mxu0 %v3647
      %v3706 = vpop.f32.mrf.mxu0
      %v3707 = vadd.f32 %v3558, %v3706
      %v3708 = vpop.f32.mrf.mxu0
      %v3709 = vadd.f32 %v3560, %v3708
      %3710 = vmatmul.bf16.gmra.mxu0 %v3650
      %v3711 = vpop.f32.mrf.mxu0
      %v3712 = vadd.f32 %v3563, %v3711
      %v3713 = vpop.f32.mrf.mxu0
      %v3714 = vadd.f32 %v3565, %v3713
      %3715 = vmatmul.bf16.gmra.mxu0 %v3653
      %v3716 = vpop.f32.mrf.mxu0
      %v3717 = vadd.f32 %v3568, %v3716
      %v3718 = vpop.f32.mrf.mxu0
      %v3719 = vadd.f32 %v3570, %v3718
      %3720 = vmatmul.bf16.gmra.mxu0 %v3656
      %v3721 = vpop.f32.mrf.mxu0
      %v3722 = vadd.f32 %v3573, %v3721
      %v3723 = vpop.f32.mrf.mxu0
      %v3724 = vadd.f32 %v3575, %v3723
      %3725 = vmatmul.bf16.gmra.mxu0 %v3659
      %v3726 = vpop.f32.mrf.mxu0
      %v3727 = vadd.f32 %v3578, %v3726
      %v3728 = vpop.f32.mrf.mxu0
      %v3729 = vadd.f32 %v3580, %v3728
      %3730 = vmatmul.bf16.gmra.mxu0 %v3662
      %v3731 = vpop.f32.mrf.mxu0
      %v3732 = vadd.f32 %v3583, %v3731
      %v3733 = vpop.f32.mrf.mxu0
      %v3734 = vadd.f32 %v3585, %v3733
      %3735 = vmatmul.bf16.gmra.mxu0 %v3665
      %v3736 = vpop.f32.mrf.mxu0
      %v3737 = vadd.f32 %v3588, %v3736
      %v3738 = vpop.f32.mrf.mxu0
      %v3739 = vadd.f32 %v3590, %v3738
      %3740 = vmatmul.bf16.gmra.mxu0 %v3668
      %v3741 = vpop.f32.mrf.mxu0
      %v3742 = vadd.f32 %v3593, %v3741
      %v3743 = vpop.f32.mrf.mxu0
      %v3744 = vadd.f32 %v3595, %v3743
      %3745 = vmatmul.bf16.gmra.mxu0 %v3671
      %v3746 = vpop.f32.mrf.mxu0
      %v3747 = vadd.f32 %v3598, %v3746
      %v3748 = vpop.f32.mrf.mxu0
      %v3749 = vadd.f32 %v3600, %v3748
      %3750 = vmatmul.bf16.gmra.mxu0 %v3674
      %v3751 = vpop.f32.mrf.mxu0
      %v3752 = vadd.f32 %v3603, %v3751
      %v3753 = vpop.f32.mrf.mxu0
      %v3754 = vadd.f32 %v3605, %v3753
      %3755 = vmatmul.bf16.gmra.mxu0 %v3677
      %v3756 = vpop.f32.mrf.mxu0
      %v3757 = vadd.f32 %v3608, %v3756
      %v3758 = vpop.f32.mrf.mxu0
      %v3759 = vadd.f32 %v3610, %v3758
      %3760 = vmatmul.bf16.gmra.mxu0 %v3680
      %v3761 = vpop.f32.mrf.mxu0
      %v3762 = vadd.f32 %v3613, %v3761
      %v3763 = vpop.f32.mrf.mxu0
      %v3764 = vadd.f32 %v3615, %v3763
      %3765 = vmatmul.bf16.gmra.mxu0 %v3683
      %v3766 = vpop.f32.mrf.mxu0
      %v3767 = vadd.f32 %v3618, %v3766
      %v3768 = vpop.f32.mrf.mxu0
      %v3769 = vadd.f32 %v3620, %v3768
      %3770 = vmatmul.bf16.gmra.mxu0 %v3686
      %v3771 = vpop.f32.mrf.mxu0
      %v3772 = vadd.f32 %v3623, %v3771
      %v3773 = vpop.f32.mrf.mxu0
      %v3774 = vadd.f32 %v3625, %v3773
      %3775 = vmatmul.bf16.gmra.mxu0 %v3689
      %v3776 = vpop.f32.mrf.mxu0
      %v3777 = vadd.f32 %v3628, %v3776
      %v3778 = vpop.f32.mrf.mxu0
      %v3779 = vadd.f32 %v3630, %v3778
      %3780 = vmatmul.bf16.gmra.mxu0 %v3692
      %v3781 = vpop.f32.mrf.mxu0
      %v3782 = vadd.f32 %v3633, %v3781
      %v3783 = vpop.f32.mrf.mxu0
      %v3784 = vadd.f32 %v3635, %v3783
      %3785 = vdwg.mxu0
      %v3786 = vld [vmem:[%s1598] sm:$0xff]
      %v3787 = vld [vmem:[%s1598 + $0x8] sm:$0xff]
      %v3788 = vld [vmem:[%s1598 + $0x18] sm:$0xff]
      %v3789 = vld [vmem:[%s1598 + $0x20] sm:$0xff]
      %v3790 = vld [vmem:[%s1598 + $0x30] sm:$0xff]
      %v3791 = vld [vmem:[%s1598 + $0x38] sm:$0xff]
      %v3792 = vld [vmem:[%s1598 + $0x48] sm:$0xff]
      %v3793 = vld [vmem:[%s1598 + $0x50] sm:$0xff]
      %v3794 = vld [vmem:[%s1598 + $0x60] sm:$0xff]
      %v3795 = vld [vmem:[%s1598 + $0x68] sm:$0xff]
      %v3796 = vld [vmem:[%s1598 + $0x78] sm:$0xff]
      %v3797 = vld [vmem:[%s1598 + $0x80] sm:$0xff]
      %v3798 = vld [vmem:[%s1598 + $0x90] sm:$0xff]
      %v3799 = vld [vmem:[%s1598 + $0x98] sm:$0xff]
      %v3800 = vld [vmem:[%s1598 + $0xa8] sm:$0xff]
      %v3801 = vld [vmem:[%s1598 + $0xb0] sm:$0xff]
      %v3802 = vld [vmem:[%s1598 + $0xc0] sm:$0xff]
      %v3803 = vld [vmem:[%s1598 + $0xc8] sm:$0xff]
      %v3804 = vld [vmem:[%s1598 + $0xd8] sm:$0xff]
      %v3805 = vld [vmem:[%s1598 + $0xe0] sm:$0xff]
      %v3806 = vld [vmem:[%s1598 + $0xf0] sm:$0xff]
      %v3807 = vld [vmem:[%s1598 + $0xf8] sm:$0xff]
      %v3808 = vld [vmem:[%s1598 + $0x108] sm:$0xff]
      %v3809 = vld [vmem:[%s1598 + $0x110] sm:$0xff]
      %v3810 = vld [vmem:[%s1598 + $0x120] sm:$0xff]
      %v3811 = vld [vmem:[%s1598 + $0x128] sm:$0xff]
      %v3812 = vld [vmem:[%s1598 + $0x138] sm:$0xff]
      %v3813 = vld [vmem:[%s1598 + $0x140] sm:$0xff]
      %v3814 = vld [vmem:[%s1598 + $0x150] sm:$0xff]
      %v3815 = vld [vmem:[%s1598 + $0x158] sm:$0xff]
      %v3816 = vld [vmem:[%s1598 + $0x168] sm:$0xff]
      %v3817 = vld [vmem:[%s1598 + $0x170] sm:$0xff]
      %v3818 = vld [vmem:[%s1598 + $0x1] sm:$0xff]
      %v3819 = vld [vmem:[%s1598 + $0x9] sm:$0xff]
      %v3820 = vld [vmem:[%s1598 + $0x19] sm:$0xff]
      %v3821 = vld [vmem:[%s1598 + $0x21] sm:$0xff]
      %v3822 = vld [vmem:[%s1598 + $0x31] sm:$0xff]
      %v3823 = vld [vmem:[%s1598 + $0x39] sm:$0xff]
      %v3824 = vld [vmem:[%s1598 + $0x49] sm:$0xff]
      %v3825 = vld [vmem:[%s1598 + $0x51] sm:$0xff]
      %v3826 = vld [vmem:[%s1598 + $0x61] sm:$0xff]
      %v3827 = vld [vmem:[%s1598 + $0x69] sm:$0xff]
      %v3828 = vld [vmem:[%s1598 + $0x79] sm:$0xff]
      %v3829 = vld [vmem:[%s1598 + $0x81] sm:$0xff]
      %v3830 = vld [vmem:[%s1598 + $0x91] sm:$0xff]
      %v3831 = vld [vmem:[%s1598 + $0x99] sm:$0xff]
      %v3832 = vld [vmem:[%s1598 + $0xa9] sm:$0xff]
      %v3833 = vld [vmem:[%s1598 + $0xb1] sm:$0xff]
      %v3834 = vld [vmem:[%s1598 + $0xc1] sm:$0xff]
      %v3835 = vld [vmem:[%s1598 + $0xc9] sm:$0xff]
      %v3836 = vld [vmem:[%s1598 + $0xd9] sm:$0xff]
      %v3837 = vld [vmem:[%s1598 + $0xe1] sm:$0xff]
      %v3838 = vld [vmem:[%s1598 + $0xf1] sm:$0xff]
      %v3839 = vld [vmem:[%s1598 + $0xf9] sm:$0xff]
      %v3840 = vld [vmem:[%s1598 + $0x109] sm:$0xff]
      %v3841 = vld [vmem:[%s1598 + $0x111] sm:$0xff]
      %v3842 = vld [vmem:[%s1598 + $0x121] sm:$0xff]
      %v3843 = vld [vmem:[%s1598 + $0x129] sm:$0xff]
      %v3844 = vld [vmem:[%s1598 + $0x139] sm:$0xff]
      %v3845 = vld [vmem:[%s1598 + $0x141] sm:$0xff]
      %v3846 = vld [vmem:[%s1598 + $0x151] sm:$0xff]
      %v3847 = vld [vmem:[%s1598 + $0x159] sm:$0xff]
      %v3848 = vld [vmem:[%s1598 + $0x169] sm:$0xff]
      %v3849 = vld [vmem:[%s1598 + $0x171] sm:$0xff]
      %v3850 = vld [vmem:[%s1598 + $0x2] sm:$0xff]
      %v3851 = vld [vmem:[%s1598 + $0xa] sm:$0xff]
      %v3852 = vld [vmem:[%s1598 + $0x1a] sm:$0xff]
      %v3853 = vld [vmem:[%s1598 + $0x22] sm:$0xff]
      %v3854 = vld [vmem:[%s1598 + $0x32] sm:$0xff]
      %v3855 = vld [vmem:[%s1598 + $0x3a] sm:$0xff]
      %v3856 = vld [vmem:[%s1598 + $0x4a] sm:$0xff]
      %v3857 = vld [vmem:[%s1598 + $0x52] sm:$0xff]
      %v3858 = vld [vmem:[%s1598 + $0x62] sm:$0xff]
      %v3859 = vld [vmem:[%s1598 + $0x6a] sm:$0xff]
      %v3860 = vld [vmem:[%s1598 + $0x7a] sm:$0xff]
      %v3861 = vld [vmem:[%s1598 + $0x82] sm:$0xff]
      %v3862 = vld [vmem:[%s1598 + $0x92] sm:$0xff]
      %v3863 = vld [vmem:[%s1598 + $0x9a] sm:$0xff]
      %v3864 = vld [vmem:[%s1598 + $0xaa] sm:$0xff]
      %v3865 = vld [vmem:[%s1598 + $0xb2] sm:$0xff]
      %v3866 = vld [vmem:[%s1598 + $0xc2] sm:$0xff]
      %v3867 = vld [vmem:[%s1598 + $0xca] sm:$0xff]
      %v3868 = vld [vmem:[%s1598 + $0xda] sm:$0xff]
      %v3869 = vld [vmem:[%s1598 + $0xe2] sm:$0xff]
      %v3870 = vld [vmem:[%s1598 + $0xf2] sm:$0xff]
      %v3871 = vld [vmem:[%s1598 + $0xfa] sm:$0xff]
      %v3872 = vld [vmem:[%s1598 + $0x10a] sm:$0xff]
      %v3873 = vld [vmem:[%s1598 + $0x112] sm:$0xff]
      %v3874 = vld [vmem:[%s1598 + $0x122] sm:$0xff]
      %v3875 = vld [vmem:[%s1598 + $0x12a] sm:$0xff]
      %v3876 = vld [vmem:[%s1598 + $0x13a] sm:$0xff]
      %v3877 = vld [vmem:[%s1598 + $0x142] sm:$0xff]
      %v3878 = vld [vmem:[%s1598 + $0x152] sm:$0xff]
      %v3879 = vld [vmem:[%s1598 + $0x15a] sm:$0xff]
      %v3880 = vld [vmem:[%s1598 + $0x16a] sm:$0xff]
      %v3881 = vld [vmem:[%s1598 + $0x172] sm:$0xff]
      %3914 = vrot.lane.b32.xlu0 %v3818, 8
      %v3915 = vpop.permute.xlu0 %3914
      %3916 = vrot.lane.b32.xlu0 %v3819, 8
      %v3917 = vpop.permute.xlu0 %3916
      %3918 = vrot.lane.b32.xlu0 %v3820, 8
      %v3919 = vpop.permute.xlu0 %3918
      %3920 = vrot.lane.b32.xlu0 %v3821, 8
      %v3921 = vpop.permute.xlu0 %3920
      %3922 = vrot.lane.b32.xlu0 %v3822, 8
      %v3923 = vpop.permute.xlu0 %3922
      %3924 = vrot.lane.b32.xlu0 %v3823, 8
      %v3925 = vpop.permute.xlu0 %3924
      %3926 = vrot.lane.b32.xlu0 %v3824, 8
      %v3927 = vpop.permute.xlu0 %3926
      %3928 = vrot.lane.b32.xlu0 %v3825, 8
      %v3929 = vpop.permute.xlu0 %3928
      %3930 = vrot.lane.b32.xlu0 %v3826, 8
      %v3931 = vpop.permute.xlu0 %3930
      %3932 = vrot.lane.b32.xlu0 %v3827, 8
      %v3933 = vpop.permute.xlu0 %3932
      %3934 = vrot.lane.b32.xlu0 %v3828, 8
      %v3935 = vpop.permute.xlu0 %3934
      %3936 = vrot.lane.b32.xlu0 %v3829, 8
      %v3937 = vpop.permute.xlu0 %3936
      %3938 = vrot.lane.b32.xlu0 %v3830, 8
      %v3939 = vpop.permute.xlu0 %3938
      %3940 = vrot.lane.b32.xlu0 %v3831, 8
      %v3941 = vpop.permute.xlu0 %3940
      %3942 = vrot.lane.b32.xlu0 %v3832, 8
      %v3943 = vpop.permute.xlu0 %3942
      %3944 = vrot.lane.b32.xlu0 %v3833, 8
      %v3945 = vpop.permute.xlu0 %3944
      %3946 = vrot.lane.b32.xlu0 %v3834, 8
      %v3947 = vpop.permute.xlu0 %3946
      %3948 = vrot.lane.b32.xlu0 %v3835, 8
      %v3949 = vpop.permute.xlu0 %3948
      %3950 = vrot.lane.b32.xlu0 %v3836, 8
      %v3951 = vpop.permute.xlu0 %3950
      %3952 = vrot.lane.b32.xlu0 %v3837, 8
      %v3953 = vpop.permute.xlu0 %3952
      %3954 = vrot.lane.b32.xlu0 %v3838, 8
      %v3955 = vpop.permute.xlu0 %3954
      %3956 = vrot.lane.b32.xlu0 %v3839, 8
      %v3957 = vpop.permute.xlu0 %3956
      %3958 = vrot.lane.b32.xlu0 %v3840, 8
      %v3959 = vpop.permute.xlu0 %3958
      %3960 = vrot.lane.b32.xlu0 %v3841, 8
      %v3961 = vpop.permute.xlu0 %3960
      %3962 = vrot.lane.b32.xlu0 %v3842, 8
      %v3963 = vpop.permute.xlu0 %3962
      %3964 = vrot.lane.b32.xlu0 %v3843, 8
      %v3965 = vpop.permute.xlu0 %3964
      %3966 = vrot.lane.b32.xlu0 %v3844, 8
      %v3967 = vpop.permute.xlu0 %3966
      %3968 = vrot.lane.b32.xlu0 %v3845, 8
      %v3969 = vpop.permute.xlu0 %3968
      %3970 = vrot.lane.b32.xlu0 %v3846, 8
      %v3971 = vpop.permute.xlu0 %3970
      %3972 = vrot.lane.b32.xlu0 %v3847, 8
      %v3973 = vpop.permute.xlu0 %3972
      %3974 = vrot.lane.b32.xlu0 %v3848, 8
      %v3975 = vpop.permute.xlu0 %3974
      %3976 = vrot.lane.b32.xlu0 %v3849, 8
      %v3977 = vpop.permute.xlu0 %3976
      %4042 = vrot.lane.b32.xlu0 %v3850, 16
      %v4043 = vpop.permute.xlu0 %4042
      %4044 = vrot.lane.b32.xlu0 %v3851, 16
      %v4045 = vpop.permute.xlu0 %4044
      %4046 = vrot.lane.b32.xlu0 %v3852, 16
      %v4047 = vpop.permute.xlu0 %4046
      %4048 = vrot.lane.b32.xlu0 %v3853, 16
      %v4049 = vpop.permute.xlu0 %4048
      %4050 = vrot.lane.b32.xlu0 %v3854, 16
      %v4051 = vpop.permute.xlu0 %4050
      %4052 = vrot.lane.b32.xlu0 %v3855, 16
      %v4053 = vpop.permute.xlu0 %4052
      %4054 = vrot.lane.b32.xlu0 %v3856, 16
      %v4055 = vpop.permute.xlu0 %4054
      %4056 = vrot.lane.b32.xlu0 %v3857, 16
      %v4057 = vpop.permute.xlu0 %4056
      %4058 = vrot.lane.b32.xlu0 %v3858, 16
      %v4059 = vpop.permute.xlu0 %4058
      %4060 = vrot.lane.b32.xlu0 %v3859, 16
      %v4061 = vpop.permute.xlu0 %4060
      %4062 = vrot.lane.b32.xlu0 %v3860, 16
      %v4063 = vpop.permute.xlu0 %4062
      %4064 = vrot.lane.b32.xlu0 %v3861, 16
      %v4065 = vpop.permute.xlu0 %4064
      %4066 = vrot.lane.b32.xlu0 %v3862, 16
      %v4067 = vpop.permute.xlu0 %4066
      %4068 = vrot.lane.b32.xlu0 %v3863, 16
      %v4069 = vpop.permute.xlu0 %4068
      %4070 = vrot.lane.b32.xlu0 %v3864, 16
      %v4071 = vpop.permute.xlu0 %4070
      %4072 = vrot.lane.b32.xlu0 %v3865, 16
      %v4073 = vpop.permute.xlu0 %4072
      %4074 = vrot.lane.b32.xlu0 %v3866, 16
      %v4075 = vpop.permute.xlu0 %4074
      %4076 = vrot.lane.b32.xlu0 %v3867, 16
      %v4077 = vpop.permute.xlu0 %4076
      %4078 = vrot.lane.b32.xlu0 %v3868, 16
      %v4079 = vpop.permute.xlu0 %4078
      %4080 = vrot.lane.b32.xlu0 %v3869, 16
      %v4081 = vpop.permute.xlu0 %4080
      %4082 = vrot.lane.b32.xlu0 %v3870, 16
      %v4083 = vpop.permute.xlu0 %4082
      %4084 = vrot.lane.b32.xlu0 %v3871, 16
      %v4085 = vpop.permute.xlu0 %4084
      %4086 = vrot.lane.b32.xlu0 %v3872, 16
      %v4087 = vpop.permute.xlu0 %4086
      %4088 = vrot.lane.b32.xlu0 %v3873, 16
      %v4089 = vpop.permute.xlu0 %4088
      %4090 = vrot.lane.b32.xlu0 %v3874, 16
      %v4091 = vpop.permute.xlu0 %4090
      %4092 = vrot.lane.b32.xlu0 %v3875, 16
      %v4093 = vpop.permute.xlu0 %4092
      %4094 = vrot.lane.b32.xlu0 %v3876, 16
      %v4095 = vpop.permute.xlu0 %4094
      %4096 = vrot.lane.b32.xlu0 %v3877, 16
      %v4097 = vpop.permute.xlu0 %4096
      %4098 = vrot.lane.b32.xlu0 %v3878, 16
      %v4099 = vpop.permute.xlu0 %4098
      %4100 = vrot.lane.b32.xlu0 %v3879, 16
      %v4101 = vpop.permute.xlu0 %4100
      %4102 = vrot.lane.b32.xlu0 %v3880, 16
      %v4103 = vpop.permute.xlu0 %4102
      %4104 = vrot.lane.b32.xlu0 %v3881, 16
      %v4105 = vpop.permute.xlu0 %4104
      %v4138 = vsel %vm313, %v3786, %v3915
      %v4139 = vsel %vm313, %v3787, %v3917
      %v4140 = vsel %vm313, %v3788, %v3919
      %v4141 = vsel %vm313, %v3789, %v3921
      %v4142 = vsel %vm313, %v3790, %v3923
      %v4143 = vsel %vm313, %v3791, %v3925
      %v4144 = vsel %vm313, %v3792, %v3927
      %v4145 = vsel %vm313, %v3793, %v3929
      %v4146 = vsel %vm313, %v3794, %v3931
      %v4147 = vsel %vm313, %v3795, %v3933
      %v4148 = vsel %vm313, %v3796, %v3935
      %v4149 = vsel %vm313, %v3797, %v3937
      %v4150 = vsel %vm313, %v3798, %v3939
      %v4151 = vsel %vm313, %v3799, %v3941
      %v4152 = vsel %vm313, %v3800, %v3943
      %v4153 = vsel %vm313, %v3801, %v3945
      %v4154 = vsel %vm313, %v3802, %v3947
      %v4155 = vsel %vm313, %v3803, %v3949
      %v4156 = vsel %vm313, %v3804, %v3951
      %v4157 = vsel %vm313, %v3805, %v3953
      %v4158 = vsel %vm313, %v3806, %v3955
      %v4159 = vsel %vm313, %v3807, %v3957
      %v4160 = vsel %vm313, %v3808, %v3959
      %v4161 = vsel %vm313, %v3809, %v3961
      %v4162 = vsel %vm313, %v3810, %v3963
      %v4163 = vsel %vm313, %v3811, %v3965
      %v4164 = vsel %vm313, %v3812, %v3967
      %v4165 = vsel %vm313, %v3813, %v3969
      %v4166 = vsel %vm313, %v3814, %v3971
      %v4167 = vsel %vm313, %v3815, %v3973
      %v4168 = vsel %vm313, %v3816, %v3975
      %v4169 = vsel %vm313, %v3817, %v3977
      %v4170 = vsel %vm810, %v4138, %v4043
      %v4171 = vsel %vm810, %v4139, %v4045
      %v4172 = vsel %vm810, %v4140, %v4047
      %v4173 = vsel %vm810, %v4141, %v4049
      %v4174 = vsel %vm810, %v4142, %v4051
      %v4175 = vsel %vm810, %v4143, %v4053
      %v4176 = vsel %vm810, %v4144, %v4055
      %v4177 = vsel %vm810, %v4145, %v4057
      %v4178 = vsel %vm810, %v4146, %v4059
      %v4179 = vsel %vm810, %v4147, %v4061
      %v4180 = vsel %vm810, %v4148, %v4063
      %v4181 = vsel %vm810, %v4149, %v4065
      %v4182 = vsel %vm810, %v4150, %v4067
      %v4183 = vsel %vm810, %v4151, %v4069
      %v4184 = vsel %vm810, %v4152, %v4071
      %v4185 = vsel %vm810, %v4153, %v4073
      %v4186 = vsel %vm810, %v4154, %v4075
      %v4187 = vsel %vm810, %v4155, %v4077
      %v4188 = vsel %vm810, %v4156, %v4079
      %v4189 = vsel %vm810, %v4157, %v4081
      %v4190 = vsel %vm810, %v4158, %v4083
      %v4191 = vsel %vm810, %v4159, %v4085
      %v4192 = vsel %vm810, %v4160, %v4087
      %v4193 = vsel %vm810, %v4161, %v4089
      %v4194 = vsel %vm810, %v4162, %v4091
      %v4195 = vsel %vm810, %v4163, %v4093
      %v4196 = vsel %vm810, %v4164, %v4095
      %v4197 = vsel %vm810, %v4165, %v4097
      %v4198 = vsel %vm810, %v4166, %v4099
      %v4199 = vsel %vm810, %v4167, %v4101
      %v4200 = vsel %vm810, %v4168, %v4103
      %v4201 = vsel %vm810, %v4169, %v4105
      %v4202 = vpack.c.bf16 %v4171, %v4170
      %v4203 = vpack.c.bf16 %v4173, %v4172
      %v4204 = vpack.c.bf16 %v4175, %v4174
      %v4205 = vpack.c.bf16 %v4177, %v4176
      %v4206 = vpack.c.bf16 %v4179, %v4178
      %v4207 = vpack.c.bf16 %v4181, %v4180
      %v4208 = vpack.c.bf16 %v4183, %v4182
      %v4209 = vpack.c.bf16 %v4185, %v4184
      %v4210 = vpack.c.bf16 %v4187, %v4186
      %v4211 = vpack.c.bf16 %v4189, %v4188
      %v4212 = vpack.c.bf16 %v4191, %v4190
      %v4213 = vpack.c.bf16 %v4193, %v4192
      %v4214 = vpack.c.bf16 %v4195, %v4194
      %v4215 = vpack.c.bf16 %v4197, %v4196
      %v4216 = vpack.c.bf16 %v4199, %v4198
      %v4217 = vpack.c.bf16 %v4201, %v4200
      %s4218 = scalar_lea.vmem %s4, 24
      %v4219 = vld [vmem:[%s4218] sm:$0xf]
      %v4220 = vld [vmem:[%s4218 + $0x4] sm:$0xf]
      %v4221 = vld [vmem:[%s4218 + $0x8] sm:$0xf]
      %v4225 = vunpack.c.l.b16 %v4219
      %v4226 = vunpack.c.l.b16 %v4220
      %v4227 = vunpack.c.l.b16 %v4221
      %v4228 = vpack.c.b16 %v4226, %v4225
      %v4229 = vpack.c.b16 %v4227, %v4227
      %v4232 = vsel %vm1307, %v4202, 0
      %v4235 = vsel %vm1307, %v4203, 0
      %v4238 = vsel %vm1307, %v4204, 0
      %v4241 = vsel %vm1307, %v4205, 0
      %v4244 = vsel %vm1307, %v4206, 0
      %v4247 = vsel %vm1307, %v4207, 0
      %v4250 = vsel %vm1307, %v4208, 0
      %v4253 = vsel %vm1307, %v4209, 0
      %v4256 = vsel %vm1307, %v4210, 0
      %v4259 = vsel %vm1307, %v4211, 0
      %v4262 = vsel %vm1307, %v4212, 0
      %v4265 = vsel %vm1307, %v4213, 0
      %v4268 = vsel %vm1307, %v4214, 0
      %v4271 = vsel %vm1307, %v4215, 0
      %v4274 = vsel %vm1307, %v4216, 0
      %v4277 = vsel %vm1307, %v4217, 0
      %v4280 = vsel %vm1356, %v4229, 0
      %4282 = vmatpush.bf16.msra.mxu0 0
      %4283 = vmatpush.bf16.msra.mxu0 0
      %4284 = vmatpush.bf16.msra.mxu0 0
      %4285 = vmatpush.bf16.msra.mxu0 0
      %4286 = vmatpush.bf16.msra.mxu0 0
      %4287 = vmatpush.bf16.msra.mxu0 0
      %4288 = vmatpush.bf16.msra.mxu0 %v4280
      %4289 = vmatpush.bf16.msra.mxu0 %v4228
      %4290 = vmatmul.bf16.gmra.mxu0 %v4232
      %v4291 = vpop.f32.mrf.mxu0
      %v4292 = vadd.f32 0.0, %v4291
      %v4293 = vpop.f32.mrf.mxu0
      %v4294 = vadd.f32 0.0, %v4293
      %4295 = vmatmul.bf16.gmra.mxu0 %v4235
      %v4296 = vpop.f32.mrf.mxu0
      %v4297 = vadd.f32 0.0, %v4296
      %v4298 = vpop.f32.mrf.mxu0
      %v4299 = vadd.f32 0.0, %v4298
      %4300 = vmatmul.bf16.gmra.mxu0 %v4238
      %v4301 = vpop.f32.mrf.mxu0
      %v4302 = vadd.f32 0.0, %v4301
      %v4303 = vpop.f32.mrf.mxu0
      %v4304 = vadd.f32 0.0, %v4303
      %4305 = vmatmul.bf16.gmra.mxu0 %v4241
      %v4306 = vpop.f32.mrf.mxu0
      %v4307 = vadd.f32 0.0, %v4306
      %v4308 = vpop.f32.mrf.mxu0
      %v4309 = vadd.f32 0.0, %v4308
      %4310 = vmatmul.bf16.gmra.mxu0 %v4244
      %v4311 = vpop.f32.mrf.mxu0
      %v4312 = vadd.f32 0.0, %v4311
      %v4313 = vpop.f32.mrf.mxu0
      %v4314 = vadd.f32 0.0, %v4313
      %4315 = vmatmul.bf16.gmra.mxu0 %v4247
      %v4316 = vpop.f32.mrf.mxu0
      %v4317 = vadd.f32 0.0, %v4316
      %v4318 = vpop.f32.mrf.mxu0
      %v4319 = vadd.f32 0.0, %v4318
      %4320 = vmatmul.bf16.gmra.mxu0 %v4250
      %v4321 = vpop.f32.mrf.mxu0
      %v4322 = vadd.f32 0.0, %v4321
      %v4323 = vpop.f32.mrf.mxu0
      %v4324 = vadd.f32 0.0, %v4323
      %4325 = vmatmul.bf16.gmra.mxu0 %v4253
      %v4326 = vpop.f32.mrf.mxu0
      %v4327 = vadd.f32 0.0, %v4326
      %v4328 = vpop.f32.mrf.mxu0
      %v4329 = vadd.f32 0.0, %v4328
      %4330 = vmatmul.bf16.gmra.mxu0 %v4256
      %v4331 = vpop.f32.mrf.mxu0
      %v4332 = vadd.f32 0.0, %v4331
      %v4333 = vpop.f32.mrf.mxu0
      %v4334 = vadd.f32 0.0, %v4333
      %4335 = vmatmul.bf16.gmra.mxu0 %v4259
      %v4336 = vpop.f32.mrf.mxu0
      %v4337 = vadd.f32 0.0, %v4336
      %v4338 = vpop.f32.mrf.mxu0
      %v4339 = vadd.f32 0.0, %v4338
      %4340 = vmatmul.bf16.gmra.mxu0 %v4262
      %v4341 = vpop.f32.mrf.mxu0
      %v4342 = vadd.f32 0.0, %v4341
      %v4343 = vpop.f32.mrf.mxu0
      %v4344 = vadd.f32 0.0, %v4343
      %4345 = vmatmul.bf16.gmra.mxu0 %v4265
      %v4346 = vpop.f32.mrf.mxu0
      %v4347 = vadd.f32 0.0, %v4346
      %v4348 = vpop.f32.mrf.mxu0
      %v4349 = vadd.f32 0.0, %v4348
      %4350 = vmatmul.bf16.gmra.mxu0 %v4268
      %v4351 = vpop.f32.mrf.mxu0
      %v4352 = vadd.f32 0.0, %v4351
      %v4353 = vpop.f32.mrf.mxu0
      %v4354 = vadd.f32 0.0, %v4353
      %4355 = vmatmul.bf16.gmra.mxu0 %v4271
      %v4356 = vpop.f32.mrf.mxu0
      %v4357 = vadd.f32 0.0, %v4356
      %v4358 = vpop.f32.mrf.mxu0
      %v4359 = vadd.f32 0.0, %v4358
      %4360 = vmatmul.bf16.gmra.mxu0 %v4274
      %v4361 = vpop.f32.mrf.mxu0
      %v4362 = vadd.f32 0.0, %v4361
      %v4363 = vpop.f32.mrf.mxu0
      %v4364 = vadd.f32 0.0, %v4363
      %4365 = vmatmul.bf16.gmra.mxu0 %v4277
      %v4366 = vpop.f32.mrf.mxu0
      %v4367 = vadd.f32 0.0, %v4366
      %v4368 = vpop.f32.mrf.mxu0
      %v4369 = vadd.f32 0.0, %v4368
      %4370 = vdwg.mxu0
      %v4371 = vadd.f32 %v3707, %v4292
      %v4372 = vadd.f32 %v3709, %v4294
      %v4373 = vadd.f32 %v3712, %v4297
      %v4374 = vadd.f32 %v3714, %v4299
      %v4375 = vadd.f32 %v3717, %v4302
      %v4376 = vadd.f32 %v3719, %v4304
      %v4377 = vadd.f32 %v3722, %v4307
      %v4378 = vadd.f32 %v3724, %v4309
      %v4379 = vadd.f32 %v3727, %v4312
      %v4380 = vadd.f32 %v3729, %v4314
      %v4381 = vadd.f32 %v3732, %v4317
      %v4382 = vadd.f32 %v3734, %v4319
      %v4383 = vadd.f32 %v3737, %v4322
      %v4384 = vadd.f32 %v3739, %v4324
      %v4385 = vadd.f32 %v3742, %v4327
      %v4386 = vadd.f32 %v3744, %v4329
      %v4387 = vadd.f32 %v3747, %v4332
      %v4388 = vadd.f32 %v3749, %v4334
      %v4389 = vadd.f32 %v3752, %v4337
      %v4390 = vadd.f32 %v3754, %v4339
      %v4391 = vadd.f32 %v3757, %v4342
      %v4392 = vadd.f32 %v3759, %v4344
      %v4393 = vadd.f32 %v3762, %v4347
      %v4394 = vadd.f32 %v3764, %v4349
      %v4395 = vadd.f32 %v3767, %v4352
      %v4396 = vadd.f32 %v3769, %v4354
      %v4397 = vadd.f32 %v3772, %v4357
      %v4398 = vadd.f32 %v3774, %v4359
      %v4399 = vadd.f32 %v3777, %v4362
      %v4400 = vadd.f32 %v3779, %v4364
      %v4401 = vadd.f32 %v3782, %v4367
      %v4402 = vadd.f32 %v3784, %v4369
      %v4403 = vsel %vm313, %v4371, 0.0
      %v4404 = vsel %vm313, %v4372, 0.0
      %v4405 = vadd.f32 %v4403, %v4404
      %v4406 = vsel %vm313, %v4373, 0.0
      %v4407 = vadd.f32 %v4405, %v4406
      %v4408 = vsel %vm313, %v4374, 0.0
      %v4409 = vadd.f32 %v4407, %v4408
      %v4410 = vsel %vm313, %v4375, 0.0
      %v4411 = vadd.f32 %v4409, %v4410
      %v4412 = vsel %vm313, %v4376, 0.0
      %v4413 = vadd.f32 %v4411, %v4412
      %v4414 = vsel %vm313, %v4377, 0.0
      %v4415 = vadd.f32 %v4413, %v4414
      %v4416 = vsel %vm313, %v4378, 0.0
      %v4417 = vadd.f32 %v4415, %v4416
      %v4418 = vsel %vm313, %v4379, 0.0
      %v4419 = vadd.f32 %v4417, %v4418
      %v4420 = vsel %vm313, %v4380, 0.0
      %v4421 = vadd.f32 %v4419, %v4420
      %v4422 = vsel %vm313, %v4381, 0.0
      %v4423 = vadd.f32 %v4421, %v4422
      %v4424 = vsel %vm313, %v4382, 0.0
      %v4425 = vadd.f32 %v4423, %v4424
      %v4426 = vsel %vm313, %v4383, 0.0
      %v4427 = vadd.f32 %v4425, %v4426
      %v4428 = vsel %vm313, %v4384, 0.0
      %v4429 = vadd.f32 %v4427, %v4428
      %v4430 = vsel %vm313, %v4385, 0.0
      %v4431 = vadd.f32 %v4429, %v4430
      %v4432 = vsel %vm313, %v4386, 0.0
      %v4433 = vadd.f32 %v4431, %v4432
      %v4434 = vsel %vm313, %v4387, 0.0
      %v4435 = vadd.f32 %v4433, %v4434
      %v4436 = vsel %vm313, %v4388, 0.0
      %v4437 = vadd.f32 %v4435, %v4436
      %v4438 = vsel %vm313, %v4389, 0.0
      %v4439 = vadd.f32 %v4437, %v4438
      %v4440 = vsel %vm313, %v4390, 0.0
      %v4441 = vadd.f32 %v4439, %v4440
      %v4442 = vsel %vm313, %v4391, 0.0
      %v4443 = vadd.f32 %v4441, %v4442
      %v4444 = vsel %vm313, %v4392, 0.0
      %v4445 = vadd.f32 %v4443, %v4444
      %v4446 = vsel %vm313, %v4393, 0.0
      %v4447 = vadd.f32 %v4445, %v4446
      %v4448 = vsel %vm313, %v4394, 0.0
      %v4449 = vadd.f32 %v4447, %v4448
      %v4450 = vsel %vm313, %v4395, 0.0
      %v4451 = vadd.f32 %v4449, %v4450
      %v4452 = vsel %vm313, %v4396, 0.0
      %v4453 = vadd.f32 %v4451, %v4452
      %v4454 = vsel %vm313, %v4397, 0.0
      %v4455 = vadd.f32 %v4453, %v4454
      %v4456 = vsel %vm313, %v4398, 0.0
      %v4457 = vadd.f32 %v4455, %v4456
      %v4458 = vsel %vm313, %v4399, 0.0
      %v4459 = vadd.f32 %v4457, %v4458
      %v4460 = vsel %vm313, %v4400, 0.0
      %v4461 = vadd.f32 %v4459, %v4460
      %v4462 = vsel %vm313, %v4401, 0.0
      %v4463 = vadd.f32 %v4461, %v4462
      %v4464 = vsel %vm313, %v4402, 0.0
      %v4465 = vadd.f32 %v4463, %v4464
      %v4466 = vrot.slane %v4465, 4
      %v4467 = vadd.f32 %v4465, %v4466
      %v4468 = vrot.slane %v4467, 2
      %v4469 = vadd.f32 %v4467, %v4468
      %v4470 = vrot.slane %v4469, 1
      %v4471 = vadd.f32 %v4469, %v4470
      %v4472 = vmul.f32 %v4471, 0.00390625
      %v4473 = vmul.f32 %v4371, %v4371
      %v4474 = vmul.f32 %v4372, %v4372
      %v4475 = vmul.f32 %v4373, %v4373
      %v4476 = vmul.f32 %v4374, %v4374
      %v4477 = vmul.f32 %v4375, %v4375
      %v4478 = vmul.f32 %v4376, %v4376
      %v4479 = vmul.f32 %v4377, %v4377
      %v4480 = vmul.f32 %v4378, %v4378
      %v4481 = vmul.f32 %v4379, %v4379
      %v4482 = vmul.f32 %v4380, %v4380
      %v4483 = vmul.f32 %v4381, %v4381
      %v4484 = vmul.f32 %v4382, %v4382
      %v4485 = vmul.f32 %v4383, %v4383
      %v4486 = vmul.f32 %v4384, %v4384
      %v4487 = vmul.f32 %v4385, %v4385
      %v4488 = vmul.f32 %v4386, %v4386
      %v4489 = vmul.f32 %v4387, %v4387
      %v4490 = vmul.f32 %v4388, %v4388
      %v4491 = vmul.f32 %v4389, %v4389
      %v4492 = vmul.f32 %v4390, %v4390
      %v4493 = vmul.f32 %v4391, %v4391
      %v4494 = vmul.f32 %v4392, %v4392
      %v4495 = vmul.f32 %v4393, %v4393
      %v4496 = vmul.f32 %v4394, %v4394
      %v4497 = vmul.f32 %v4395, %v4395
      %v4498 = vmul.f32 %v4396, %v4396
      %v4499 = vmul.f32 %v4397, %v4397
      %v4500 = vmul.f32 %v4398, %v4398
      %v4501 = vmul.f32 %v4399, %v4399
      %v4502 = vmul.f32 %v4400, %v4400
      %v4503 = vmul.f32 %v4401, %v4401
      %v4504 = vmul.f32 %v4402, %v4402
      %v4505 = vsel %vm313, %v4473, 0.0
      %v4506 = vsel %vm313, %v4474, 0.0
      %v4507 = vadd.f32 %v4505, %v4506
      %v4508 = vsel %vm313, %v4475, 0.0
      %v4509 = vadd.f32 %v4507, %v4508
      %v4510 = vsel %vm313, %v4476, 0.0
      %v4511 = vadd.f32 %v4509, %v4510
      %v4512 = vsel %vm313, %v4477, 0.0
      %v4513 = vadd.f32 %v4511, %v4512
      %v4514 = vsel %vm313, %v4478, 0.0
      %v4515 = vadd.f32 %v4513, %v4514
      %v4516 = vsel %vm313, %v4479, 0.0
      %v4517 = vadd.f32 %v4515, %v4516
      %v4518 = vsel %vm313, %v4480, 0.0
      %v4519 = vadd.f32 %v4517, %v4518
      %v4520 = vsel %vm313, %v4481, 0.0
      %v4521 = vadd.f32 %v4519, %v4520
      %v4522 = vsel %vm313, %v4482, 0.0
      %v4523 = vadd.f32 %v4521, %v4522
      %v4524 = vsel %vm313, %v4483, 0.0
      %v4525 = vadd.f32 %v4523, %v4524
      %v4526 = vsel %vm313, %v4484, 0.0
      %v4527 = vadd.f32 %v4525, %v4526
      %v4528 = vsel %vm313, %v4485, 0.0
      %v4529 = vadd.f32 %v4527, %v4528
      %v4530 = vsel %vm313, %v4486, 0.0
      %v4531 = vadd.f32 %v4529, %v4530
      %v4532 = vsel %vm313, %v4487, 0.0
      %v4533 = vadd.f32 %v4531, %v4532
      %v4534 = vsel %vm313, %v4488, 0.0
      %v4535 = vadd.f32 %v4533, %v4534
      %v4536 = vsel %vm313, %v4489, 0.0
      %v4537 = vadd.f32 %v4535, %v4536
      %v4538 = vsel %vm313, %v4490, 0.0
      %v4539 = vadd.f32 %v4537, %v4538
      %v4540 = vsel %vm313, %v4491, 0.0
      %v4541 = vadd.f32 %v4539, %v4540
      %v4542 = vsel %vm313, %v4492, 0.0
      %v4543 = vadd.f32 %v4541, %v4542
      %v4544 = vsel %vm313, %v4493, 0.0
      %v4545 = vadd.f32 %v4543, %v4544
      %v4546 = vsel %vm313, %v4494, 0.0
      %v4547 = vadd.f32 %v4545, %v4546
      %v4548 = vsel %vm313, %v4495, 0.0
      %v4549 = vadd.f32 %v4547, %v4548
      %v4550 = vsel %vm313, %v4496, 0.0
      %v4551 = vadd.f32 %v4549, %v4550
      %v4552 = vsel %vm313, %v4497, 0.0
      %v4553 = vadd.f32 %v4551, %v4552
      %v4554 = vsel %vm313, %v4498, 0.0
      %v4555 = vadd.f32 %v4553, %v4554
      %v4556 = vsel %vm313, %v4499, 0.0
      %v4557 = vadd.f32 %v4555, %v4556
      %v4558 = vsel %vm313, %v4500, 0.0
      %v4559 = vadd.f32 %v4557, %v4558
      %v4560 = vsel %vm313, %v4501, 0.0
      %v4561 = vadd.f32 %v4559, %v4560
      %v4562 = vsel %vm313, %v4502, 0.0
      %v4563 = vadd.f32 %v4561, %v4562
      %v4564 = vsel %vm313, %v4503, 0.0
      %v4565 = vadd.f32 %v4563, %v4564
      %v4566 = vsel %vm313, %v4504, 0.0
      %v4567 = vadd.f32 %v4565, %v4566
      %v4568 = vrot.slane %v4567, 4
      %v4569 = vadd.f32 %v4567, %v4568
      %v4570 = vrot.slane %v4569, 2
      %v4571 = vadd.f32 %v4569, %v4570
      %v4572 = vrot.slane %v4571, 1
      %v4573 = vadd.f32 %v4571, %v4572
      %v4574 = vmul.f32 %v4573, 0.00390625
      %v4575 = vmul.f32 %v4472, %v4472
      %v4576 = vsub.f32 %v4574, %v4575
      %v4577 = vmax.f32 %v4576, 0.0
      %v4578 = vadd.f32 %v4577, 1e-05
      %v4579 = vrsqrt.pop %v4578
      %v4580 = vmul.f32 %v4579, %v4578
      %v4581 = vmul.f32 %v4580, %v4579
      %v4582 = vmul.f32 0.5, %v4581
      %v4583 = vsub.f32 1.5, %v4582
      %v4584 = vmul.f32 %v4579, %v4583
      %vm4585 = vweird.f32 %v4578
      %vm4586 = vweird.f32 %v4579
      %vm4587 = vmor %vm4585, %vm4586
      %v4588 = vsel %vm4587, %v4579, %v4584
      %v4589 = vmul.f32 %v2615, %v4588
      %v4590 = vmul.f32 %v4472, %v4589
      %v4591 = vsub.f32 %v2616, %v4590
      %v4593 = vperm.slane %v4589, 0
      %v4595 = vmul.f32 %v4371, %v4593
      %v4596 = vmul.f32 %v4372, %v4593
      %v4597 = vmul.f32 %v4373, %v4593
      %v4598 = vmul.f32 %v4374, %v4593
      %v4599 = vmul.f32 %v4375, %v4593
      %v4600 = vmul.f32 %v4376, %v4593
      %v4601 = vmul.f32 %v4377, %v4593
      %v4602 = vmul.f32 %v4378, %v4593
      %v4603 = vmul.f32 %v4379, %v4593
      %v4604 = vmul.f32 %v4380, %v4593
      %v4605 = vmul.f32 %v4381, %v4593
      %v4606 = vmul.f32 %v4382, %v4593
      %v4607 = vmul.f32 %v4383, %v4593
      %v4608 = vmul.f32 %v4384, %v4593
      %v4609 = vmul.f32 %v4385, %v4593
      %v4610 = vmul.f32 %v4386, %v4593
      %v4611 = vmul.f32 %v4387, %v4593
      %v4612 = vmul.f32 %v4388, %v4593
      %v4613 = vmul.f32 %v4389, %v4593
      %v4614 = vmul.f32 %v4390, %v4593
      %v4615 = vmul.f32 %v4391, %v4593
      %v4616 = vmul.f32 %v4392, %v4593
      %v4617 = vmul.f32 %v4393, %v4593
      %v4618 = vmul.f32 %v4394, %v4593
      %v4619 = vmul.f32 %v4395, %v4593
      %v4620 = vmul.f32 %v4396, %v4593
      %v4621 = vmul.f32 %v4397, %v4593
      %v4622 = vmul.f32 %v4398, %v4593
      %v4623 = vmul.f32 %v4399, %v4593
      %v4624 = vmul.f32 %v4400, %v4593
      %v4625 = vmul.f32 %v4401, %v4593
      %v4626 = vmul.f32 %v4402, %v4593
      %v4628 = vperm.slane %v4591, 0
      %v4630 = vadd.f32 %v4595, %v4628
      %v4631 = vadd.f32 %v4596, %v4628
      %v4632 = vadd.f32 %v4597, %v4628
      %v4633 = vadd.f32 %v4598, %v4628
      %v4634 = vadd.f32 %v4599, %v4628
      %v4635 = vadd.f32 %v4600, %v4628
      %v4636 = vadd.f32 %v4601, %v4628
      %v4637 = vadd.f32 %v4602, %v4628
      %v4638 = vadd.f32 %v4603, %v4628
      %v4639 = vadd.f32 %v4604, %v4628
      %v4640 = vadd.f32 %v4605, %v4628
      %v4641 = vadd.f32 %v4606, %v4628
      %v4642 = vadd.f32 %v4607, %v4628
      %v4643 = vadd.f32 %v4608, %v4628
      %v4644 = vadd.f32 %v4609, %v4628
      %v4645 = vadd.f32 %v4610, %v4628
      %v4646 = vadd.f32 %v4611, %v4628
      %v4647 = vadd.f32 %v4612, %v4628
      %v4648 = vadd.f32 %v4613, %v4628
      %v4649 = vadd.f32 %v4614, %v4628
      %v4650 = vadd.f32 %v4615, %v4628
      %v4651 = vadd.f32 %v4616, %v4628
      %v4652 = vadd.f32 %v4617, %v4628
      %v4653 = vadd.f32 %v4618, %v4628
      %v4654 = vadd.f32 %v4619, %v4628
      %v4655 = vadd.f32 %v4620, %v4628
      %v4656 = vadd.f32 %v4621, %v4628
      %v4657 = vadd.f32 %v4622, %v4628
      %v4658 = vadd.f32 %v4623, %v4628
      %v4659 = vadd.f32 %v4624, %v4628
      %v4660 = vadd.f32 %v4625, %v4628
      %v4661 = vadd.f32 %v4626, %v4628
      %v4662 = vadd.f32 %v280, %v4630
      %v4663 = vadd.f32 %v281, %v4631
      %v4664 = vadd.f32 %v282, %v4632
      %v4665 = vadd.f32 %v283, %v4633
      %v4666 = vadd.f32 %v284, %v4634
      %v4667 = vadd.f32 %v285, %v4635
      %v4668 = vadd.f32 %v286, %v4636
      %v4669 = vadd.f32 %v287, %v4637
      %v4670 = vadd.f32 %v288, %v4638
      %v4671 = vadd.f32 %v289, %v4639
      %v4672 = vadd.f32 %v290, %v4640
      %v4673 = vadd.f32 %v291, %v4641
      %v4674 = vadd.f32 %v292, %v4642
      %v4675 = vadd.f32 %v293, %v4643
      %v4676 = vadd.f32 %v294, %v4644
      %v4677 = vadd.f32 %v295, %v4645
      %v4678 = vadd.f32 %v296, %v4646
      %v4679 = vadd.f32 %v297, %v4647
      %v4680 = vadd.f32 %v298, %v4648
      %v4681 = vadd.f32 %v299, %v4649
      %v4682 = vadd.f32 %v300, %v4650
      %v4683 = vadd.f32 %v301, %v4651
      %v4684 = vadd.f32 %v302, %v4652
      %v4685 = vadd.f32 %v303, %v4653
      %v4686 = vadd.f32 %v304, %v4654
      %v4687 = vadd.f32 %v305, %v4655
      %v4688 = vadd.f32 %v306, %v4656
      %v4689 = vadd.f32 %v307, %v4657
      %v4690 = vadd.f32 %v308, %v4658
      %v4691 = vadd.f32 %v309, %v4659
      %v4692 = vadd.f32 %v310, %v4660
      %v4693 = vadd.f32 %v311, %v4661
      %4694 = vst.msk [vmem:[%s278] sm:$0xff] %vm313, %v4662
      %4695 = vst.msk [vmem:[%s278 + $0x8] sm:$0xff] %vm313, %v4663
      %4696 = vst.msk [vmem:[%s278 + $0x10] sm:$0xff] %vm313, %v4664
      %4697 = vst.msk [vmem:[%s278 + $0x18] sm:$0xff] %vm313, %v4665
      %4698 = vst.msk [vmem:[%s278 + $0x20] sm:$0xff] %vm313, %v4666
      %4699 = vst.msk [vmem:[%s278 + $0x28] sm:$0xff] %vm313, %v4667
      %4700 = vst.msk [vmem:[%s278 + $0x30] sm:$0xff] %vm313, %v4668
      %4701 = vst.msk [vmem:[%s278 + $0x38] sm:$0xff] %vm313, %v4669
      %4702 = vst.msk [vmem:[%s278 + $0x40] sm:$0xff] %vm313, %v4670
      %4703 = vst.msk [vmem:[%s278 + $0x48] sm:$0xff] %vm313, %v4671
      %4704 = vst.msk [vmem:[%s278 + $0x50] sm:$0xff] %vm313, %v4672
      %4705 = vst.msk [vmem:[%s278 + $0x58] sm:$0xff] %vm313, %v4673
      %4706 = vst.msk [vmem:[%s278 + $0x60] sm:$0xff] %vm313, %v4674
      %4707 = vst.msk [vmem:[%s278 + $0x68] sm:$0xff] %vm313, %v4675
      %4708 = vst.msk [vmem:[%s278 + $0x70] sm:$0xff] %vm313, %v4676
      %4709 = vst.msk [vmem:[%s278 + $0x78] sm:$0xff] %vm313, %v4677
      %4710 = vst.msk [vmem:[%s278 + $0x80] sm:$0xff] %vm313, %v4678
      %4711 = vst.msk [vmem:[%s278 + $0x88] sm:$0xff] %vm313, %v4679
      %4712 = vst.msk [vmem:[%s278 + $0x90] sm:$0xff] %vm313, %v4680
      %4713 = vst.msk [vmem:[%s278 + $0x98] sm:$0xff] %vm313, %v4681
      %4714 = vst.msk [vmem:[%s278 + $0xa0] sm:$0xff] %vm313, %v4682
      %4715 = vst.msk [vmem:[%s278 + $0xa8] sm:$0xff] %vm313, %v4683
      %4716 = vst.msk [vmem:[%s278 + $0xb0] sm:$0xff] %vm313, %v4684
      %4717 = vst.msk [vmem:[%s278 + $0xb8] sm:$0xff] %vm313, %v4685
      %4718 = vst.msk [vmem:[%s278 + $0xc0] sm:$0xff] %vm313, %v4686
      %4719 = vst.msk [vmem:[%s278 + $0xc8] sm:$0xff] %vm313, %v4687
      %4720 = vst.msk [vmem:[%s278 + $0xd0] sm:$0xff] %vm313, %v4688
      %4721 = vst.msk [vmem:[%s278 + $0xd8] sm:$0xff] %vm313, %v4689
      %4722 = vst.msk [vmem:[%s278 + $0xe0] sm:$0xff] %vm313, %v4690
      %4723 = vst.msk [vmem:[%s278 + $0xe8] sm:$0xff] %vm313, %v4691
      %4724 = vst.msk [vmem:[%s278 + $0xf0] sm:$0xff] %vm313, %v4692
      %4725 = vst.msk [vmem:[%s278 + $0xf8] sm:$0xff] %vm313, %v4693
      %p4726 = scmp.lt.s32.totalorder %s18, 1
      %s4727 = scalar_select %p4726, %s18, 1
      %s4728 = smul.addr %s4727, 32
      %s4729 = smul.addr %s4728, 8
      %s4730 = scalar_lea.vmem %s7, %s4729
      // Predicated region
      $region49: #{resblock_forward.1} parent=47 // pred_check
        %p4731 = pneg %p188
      $region50: #{resblock_forward.1} parent=47 // pred_check_branch
        %4733 = sbr.rel (%p4731) target = $region52
      $region51: #{resblock_forward.1} parent=47 // pred_region
        _
      $region52: #{resblock_forward.1} parent=47 // pred_fallthru
        _
    $region48: #{resblock_forward.1} parent=5 // pred_fallthru
      _
    %p4734 = scmp.le.s32.totalorder 2, %s13
    // Predicated region
    $region53: #{resblock_forward.1} parent=5 // pred_check
      %p4735 = pneg %p4734
    $region54: #{resblock_forward.1} parent=5 // pred_check_branch
      %4737 = sbr.rel (%p4735) target = $region56
    $region55: #{resblock_forward.1} parent=5 // pred_region
      %s4738 = ssub.s32 %s13, 2
      // Predicated region
      $region57: #{resblock_forward.1} parent=55 // pred_check
        %p4739 = pneg %p194
      $region58: #{resblock_forward.1} parent=55 // pred_check_branch
        %4741 = sbr.rel (%p4739) target = $region60
      $region59: #{resblock_forward.1} parent=55 // pred_region
        %p4742 = scmp.lt.s32.totalorder %s19, 1
        %s4743 = scalar_select %p4742, %s19, 1
        %s4744 = smul.addr %s4743, 32
        %s4745 = smul.addr %s4744, 8
        %s4746 = scalar_lea.vmem %s7, %s4745
      $region60: #{resblock_forward.1} parent=55 // pred_fallthru
        _
    $region56: #{resblock_forward.1} parent=5 // pred_fallthru
      _
  $region6: #{resblock_forward.1} parent=0 // loop_footer
    %s17 = sadd.s32 1, %s13
  $region7: #{resblock_forward.1} parent=0 // loop_footer_branch
    %12 = sbr.rel target = $region3
  $region8: #{resblock_forward.1} parent=0 // loop_exit
    _

</llo_original>
